<compile_context>
chip_gen: v7x
topology: tpu7x:2x2x1
jax: 0.10.0
libtpu: 0.0.40
codegen_flags: <defaults>
</compile_context>

<pallas_src>
import jax
import jax.numpy as jnp
from jax.experimental import pallas as pl
from jax.experimental.pallas import tpu as pltpu

FEAT_CH = 19            # 16 + 3
DIR_CH = 4
CV = FEAT_CH + DIR_CH   # 23 channels per view
HEAD_DIM = 24
VOX_CH = HEAD_DIM - 16  # 8
IMF_CH = 16
OUT_W = 10              # rgb_vr(3) | scale(3) | opacity(1) | color(3)


# ----------------------------------------------------------------------------- helpers
def _softplus(x):
    return jnp.maximum(x, 0.0) + jnp.log(1.0 + jnp.exp(-jnp.abs(x)))


def _sigmoid(x):
    return pl.reciprocal(1.0 + jnp.exp(-x), approx=True)


def _const_spec(arr):
    nd = arr.ndim
    return pl.BlockSpec(arr.shape, lambda i, b, d, _nd=nd: (0,) * _nd)


def _pick_ray_tile(hw, per_ray_bytes, budget_bytes, max_rows=1024):
    """Largest multiple-of-16 tile (bf16 sublane packing) dividing hw within the VMEM
    budget.  Keeps >= 2 ray tiles when possible (feed both v7x TensorCores); if hw has
    no suitable divisor, pad hw up to a multiple of the tile instead of one huge block.
    Returns (tile, padded_hw)."""
    target = max(16, min(hw, max_rows, budget_bytes // max(per_ray_bytes, 1)))
    if hw >= 32:
        half = (hw // 2) - ((hw // 2) % 16)
        if half >= 16:
            target = min(target, half)
    target -= target % 16
    target = max(target, 16)
    t = target
    while t >= 16:
        if hw % t == 0:
            return t, hw
        t -= 16
    return target, pl.cdiv(hw, target) * target


# ----------------------------------------------------------------------------- kernel
def _gs_kernel(vox_ref, ifrd_ref,
               wv_ref, bv_ref,
               wgf_ref, wgv_ref, wgm_ref, bg_ref,
               waw_ref, baw_ref,
               wfc_ref, bfc_ref,
               wxv_ref, wxi_ref, bx_ref,
               wc1v_ref, wc2_ref, bc2_ref,
               wuv_ref, wui_ref, bu_ref,
               wh1_ref, wh1r_ref, bh1_ref,
               wh2_ref, bh2_ref,
               out_ref,
               t_run, rgb_acc, vox_acc, imf_acc):
    d = pl.program_id(2)
    nd = pl.num_programs(2)

    @pl.when(d == 0)
    def _():
        t_run[...] = jnp.ones_like(t_run)
        rgb_acc[...] = jnp.zeros_like(rgb_acc)
        vox_acc[...] = jnp.zeros_like(vox_acc)
        imf_acc[...] = jnp.zeros_like(imf_acc)

    def mm(a, w_ref):                       # bf16 MXU matmul, f32 accumulate
        return jnp.dot(a.astype(jnp.bfloat16), w_ref[...],
                       preferred_element_type=jnp.float32)

    def relu(a):
        return jnp.maximum(a, 0.0)

    views = ifrd_ref[...]                   # (S, TR, CV) bf16 — views on the row axis
    S, TR, _ = views.shape
    V = views.reshape(S * TR, CV)           # batched M = S*TR for all per-view matmuls

    # ---- Agg.  view_fc weight is zero-padded over the 19 feature rows: no dir slice.
    dir_feat = relu(mm(V, wv_ref) + bv_ref[...])                         # (S*TR, 19)
    feat = V[:, :FEAT_CH].astype(jnp.float32) + dir_feat                 # (S*TR, 19)

    feat3 = feat.reshape(S, TR, FEAT_CH)
    mean = jnp.mean(feat3, axis=0)                                       # (TR, 19)
    var = jnp.sum((feat3 - mean[None]) ** 2, axis=0) * (1.0 / (S - 1))   # unbiased

    # global_fc rows split [img | var | mean]: shared var/mean part hoisted over views
    shared = mm(var, wgv_ref) + mm(mean, wgm_ref) + bg_ref[...]          # (TR, 32)
    g = relu(mm(feat, wgf_ref).reshape(S, TR, 32) + shared[None])        # (S, TR, 32)
    aw = relu(mm(g.reshape(S * TR, 32), waw_ref) + baw_ref[...]).reshape(S, TR, 1)

    m = jnp.max(aw, axis=0)
    ex = jnp.exp(aw - m[None])
    inv_den = pl.reciprocal(jnp.sum(ex, axis=0), approx=True)            # (TR, 1)
    im_feat = jnp.sum(g * ex, axis=0) * inv_den                          # (TR, 32)

    img_feat = relu(mm(im_feat, wfc_ref) + bfc_ref[...])                 # (TR, 16)
    vox_d = vox_ref[...]                                                 # (TR, 8) f32

    # ---- fused x-heads on x = [vox | img_feat]: cols = [color1_x(24) | sigma(1)]
    xh = mm(vox_d, wxv_ref) + mm(img_feat, wxi_ref) + bx_ref[...]        # (TR, 25)
    cx = xh[:, :HEAD_DIM]                                                # (TR, 24)
    sigma = _softplus(xh[:, HEAD_DIM:HEAD_DIM + 1])                      # (TR, 1)

    # ---- per-view color weights (softmax over views) and radiance
    hv = relu(mm(V, wc1v_ref).reshape(S, TR, HEAD_DIM) + cx[None])       # (S, TR, 24)
    cw = relu(mm(hv.reshape(S * TR, HEAD_DIM), wc2_ref)
              + bc2_ref[...]).reshape(S, TR, 1)
    m2 = jnp.max(cw, axis=0)
    ex2 = jnp.exp(cw - m2[None])
    inv_den2 = pl.reciprocal(jnp.sum(ex2, axis=0), approx=True)
    rgb = views[:, :, FEAT_CH - 3:FEAT_CH].astype(jnp.float32)           # (S, TR, 3)
    rad = jnp.sum(rgb * ex2, axis=0) * inv_den2                          # (TR, 3)

    # ---- online volume rendering (exclusive cumprod via running transmittance)
    alpha = 1.0 - jnp.exp(-sigma)
    w = alpha * t_run[...]
    rgb_acc[...] = rgb_acc[...] + w * rad
    vox_acc[...] = vox_acc[...] + w * vox_d
    imf_acc[...] = imf_acc[...] + w * img_feat
    t_run[...] = t_run[...] * (1.0 - alpha + 1e-10)

    # ---- per-pixel gaussian heads, once per ray tile
    @pl.when(d == nd - 1)
    def _():
        # TODO(synk): the real Unet (spatial conv encoder/decoder, definition not in
        # the reference source) is approximated by a per-pixel 1x1 linear + ReLU.
        xu = relu(mm(vox_acc[...], wuv_ref) + mm(imf_acc[...], wui_ref) + bu_ref[...])
        # fused first layers: cols [scale1 | opac1 | cgs1_x], rgb feeds only cgs1 cols
        h1 = relu(mm(xu, wh1_ref) + mm(rgb_acc[...], wh1r_ref) + bh1_ref[...])  # (TR,72)
        # block-diagonal fused second layers -> [scale(3) | opac(1) | color(3)]
        h2 = mm(h1, wh2_ref) + bh2_ref[...]                                     # (TR, 7)
        lane = jax.lax.broadcasted_iota(jnp.int32, h2.shape, 1)
        act = jnp.where(lane < 3, _softplus(h2), _sigmoid(h2))
        out_ref[...] = jnp.concatenate([rgb_acc[...], act], axis=-1)            # (TR,10)


def _gs_fused(vox, ifrd, kparams):
    B, D, S, HW, C = ifrd.shape
    # lane-padded, double-buffered VMEM bytes per ray per grid step + spill headroom
    per_ray = (2 * S * 128 * 2        # ifrd block (bf16)
               + 2 * 128 * 4          # vox block (f32)
               + 2 * 128 * 4          # packed output block (f32)
               + 4 * 128 * 4          # scratch accumulators (f32)
               + 8 * S * 128 * 4)     # headroom for spilled f32 intermediates
    TR, HWp = _pick_ray_tile(HW, per_ray, budget_bytes=12 << 20)
    if HWp != HW:
        ifrd = jnp.pad(ifrd, ((0, 0), (0, 0), (0, 0), (0, HWp - HW), (0, 0)))
        vox = jnp.pad(vox, ((0, 0), (0, 0), (0, HWp - HW), (0, 0)))

    grid = (HWp // TR, B, D)          # depth last ("arbitrary") -> online accumulation
    in_specs = [
        pl.BlockSpec((None, None, TR, VOX_CH), lambda i, b, d: (b, d, i, 0)),
        pl.BlockSpec((None, None, S, TR, C), lambda i, b, d: (b, d, 0, i, 0)),
    ] + [_const_spec(wgt) for wgt in kparams]
    out_specs = pl.BlockSpec((None, TR, OUT_W), lambda i, b, d: (b, i, 0))

    packed = pl.pallas_call(
        _gs_kernel,
        out_shape=jax.ShapeDtypeStruct((B, HWp, OUT_W), jnp.float32),
        grid_spec=pltpu.PrefetchScalarGridSpec(
            num_scalar_prefetch=0,
            grid=grid,
            in_specs=in_specs,
            out_specs=out_specs,
            scratch_shapes=[
                pltpu.VMEM((TR, 1), jnp.float32),        # running transmittance
                pltpu.VMEM((TR, 3), jnp.float32),        # rgb accumulator
                pltpu.VMEM((TR, VOX_CH), jnp.float32),   # x accumulator (vox part)
                pltpu.VMEM((TR, IMF_CH), jnp.float32),   # x accumulator (img_feat part)
            ]),
        compiler_params=pltpu.CompilerParams(
            dimension_semantics=("parallel", "parallel", "arbitrary"),
            vmem_limit_bytes=48 * 1024 * 1024),
    )(vox, ifrd, *kparams)
    return packed[:, :HW] if HWp != HW else packed


# ----------------------------------------------------------------------------- params
def _kaiming(key, shape):
    return (jnp.sqrt(2.0 / shape[0]) * jax.random.normal(key, shape)).astype(jnp.float32)


def make_params(key):
    names_shapes = [
        ("view_w", (DIR_CH, FEAT_CH)),
        ("glob_w", (3 * FEAT_CH, 32)),             # rows: [img(19) | var(19) | mean(19)]
        ("aggw_w", (32, 1)),
        ("aggfc_w", (32, 16)),
        ("sigma_w", (HEAD_DIM, 1)),
        ("color1_w", (HEAD_DIM + CV, HEAD_DIM)),   # rows: [x(24) | view(23)]
        ("color2_w", (HEAD_DIM, 1)),
        ("unet_w", (HEAD_DIM, HEAD_DIM)),
        ("scale1_w", (HEAD_DIM, HEAD_DIM)),
        ("scale2_w", (HEAD_DIM, 3)),
        ("opac1_w", (HEAD_DIM, HEAD_DIM)),
        ("opac2_w", (HEAD_DIM, 1)),
        ("cgs1_w", (HEAD_DIM + 3, HEAD_DIM)),      # rows: [x(24) | rgb(3)]
        ("cgs2_w", (HEAD_DIM, 3)),
    ]
    params = {}
    keys = jax.random.split(key, len(names_shapes))
    for k, (name, shp) in zip(keys, names_shapes):
        params[name] = _kaiming(k, shp)
        params[name.replace("_w", "_b")] = jnp.zeros((1, shp[1]), jnp.float32)
    return params


def _prepare_kernel_params(p):
    """Split / pack / pad the linears for the fused kernel (matmul weights -> bf16)."""
    f32, bf16 = jnp.float32, jnp.bfloat16
    W = lambda a: a.astype(bf16)

    # view_fc weight zero-padded over the 19 feature rows (no dir-lane slice in-kernel)
    wv_pad = jnp.concatenate([jnp.zeros((FEAT_CH, FEAT_CH), f32), p["view_w"]], axis=0)

    gw = p["glob_w"]                                                 # [img|var|mean]
    # fused x-heads: cols [color1_x(24) | sigma(1)], rows split [vox(8) | img_feat(16)]
    wx = jnp.concatenate([p["color1_w"][:HEAD_DIM], p["sigma_w"]], axis=1)   # (24, 25)
    bx = jnp.concatenate([p["color1_b"], p["sigma_b"]], axis=1)              # (1, 25)

    # fused head first layers on the Unet output: cols [scale1 | opac1 | cgs1_x]
    wh1 = jnp.concatenate([p["scale1_w"], p["opac1_w"], p["cgs1_w"][:HEAD_DIM]], axis=1)
    wh1r = jnp.concatenate([jnp.zeros((3, 2 * HEAD_DIM), f32), p["cgs1_w"][HEAD_DIM:]],
                           axis=1)                                            # (3, 72)
    bh1 = jnp.concatenate([p["scale1_b"], p["opac1_b"], p["cgs1_b"]], axis=1)  # (1, 72)

    # block-diagonal fused head second layers: cols [scale(3) | opac(1) | color(3)]
    wh2 = jnp.zeros((3 * HEAD_DIM, 7), f32)
    wh2 = wh2.at[0:HEAD_DIM, 0:3].set(p["scale2_w"])
    wh2 = wh2.at[HEAD_DIM:2 * HEAD_DIM, 3:4].set(p["opac2_w"])
    wh2 = wh2.at[2 * HEAD_DIM:, 4:7].set(p["cgs2_w"])
    bh2 = jnp.concatenate([p["scale2_b"], p["opac2_b"], p["cgs2_b"]], axis=1)  # (1, 7)

    return (
        W(wv_pad), p["view_b"],
        W(gw[:FEAT_CH]), W(gw[FEAT_CH:2 * FEAT_CH]), W(gw[2 * FEAT_CH:]), p["glob_b"],
        W(p["aggw_w"]), p["aggw_b"],
        W(p["aggfc_w"]), p["aggfc_b"],
        W(wx[:VOX_CH]), W(wx[VOX_CH:]), bx,
        W(p["color1_w"][HEAD_DIM:]), W(p["color2_w"]), p["color2_b"],
        W(p["unet_w"][:VOX_CH]), W(p["unet_w"][VOX_CH:]), p["unet_b"],
        W(wh1), W(wh1r), bh1,
        W(wh2), bh2,
    )


# ----------------------------------------------------------------------------- glue
def depth2point(depth, ext, ixt):
    # TODO(synk): depth2point is defined elsewhere in the repo; this is a standard
    # pinhole unprojection (pixel -> camera via K^-1 * depth, camera -> world via the
    # inverse of a world-to-camera extrinsic).
    D_, H, W = depth.shape
    ext0, ixt0 = ext[0], ixt[0]
    ys, xs = jnp.meshgrid(jnp.arange(H, dtype=jnp.float32),
                          jnp.arange(W, dtype=jnp.float32), indexing="ij")
    pix = jnp.stack([xs, ys, jnp.ones_like(xs)], axis=-1)             # (H, W, 3)
    cam_dirs = jnp.einsum("ij,hwj->hwi", jnp.linalg.inv(ixt0), pix)   # (H, W, 3)
    cam = cam_dirs[None] * depth[..., None]                           # (D, H, W, 3)
    R, t = ext0[:3, :3], ext0[:3, 3]
    world = jnp.einsum("ij,dhwj->dhwi", jnp.linalg.inv(R), cam - t)
    return world.reshape(-1, 3)


def gs_forward(vox_feat, img_feat_rgb_dir, z_vals, tar_ext, tar_ixt, size, params,
               depth_inv=False, render_scale=1.0):
    H, W = size
    B, N, S, C = img_feat_rgb_dir.shape
    D = z_vals.shape[-1]
    HW = H * W
    assert N == HW * D and C == CV and vox_feat.shape[-1] == VOX_CH and S >= 2

    # ray-major / depth-minor ordering (matches torch's sigma.reshape(B, H*W, D));
    # views go onto the ROW axis so per-view access in-kernel is a sublane slice.
    ifrd = img_feat_rgb_dir.astype(jnp.bfloat16).reshape(B, HW, D, S, C)
    ifrd = jnp.transpose(ifrd, (0, 2, 3, 1, 4))                        # (B, D, S, HW, 23)
    vox = vox_feat.astype(jnp.float32).reshape(B, HW, D, VOX_CH)
    vox = jnp.transpose(vox, (0, 2, 1, 3))                             # (B, D, HW, 8)

    kparams = _prepare_kernel_params(params)
    packed = _gs_fused(vox, ifrd, kparams)                             # (B, HW, 10)

    rgb_vr_flat = packed[..., 0:3]
    scale_out = packed[..., 3:6]
    opacity_out = packed[..., 6:7]
    color_out = packed[..., 7:10]

    # rot_out: normalize(ones)
    rot = jnp.ones((B, HW, 4), jnp.float32)
    rot_out = rot / jnp.sqrt(jnp.sum(rot * rot, axis=-1, keepdims=True))

    # depth / world_xyz
    z = z_vals.reshape(B, H, W, D)
    if depth_inv:
        z = 1.0 / jnp.clip(z, 1e-6, None)
    depth = jnp.transpose(z, (0, 3, 1, 2))[0]                          # (D, H, W)
    ixt = tar_ixt.at[:, :2].multiply(render_scale)
    world_xyz = depth2point(depth, tar_ext, ixt)

    rgb_vr = jnp.transpose(rgb_vr_flat.reshape(B, H, W, 3), (0, 3, 1, 2))  # NCHW
    return world_xyz, rot_out, scale_out, opacity_out, color_out, rgb_vr


# ----------------------------------------------------------------------------- main
if __name__ == "__main__":
    key = jax.random.PRNGKey(0)
    B, H, W, D, S = 2, 8, 8, 4, 3
    HW = H * W
    N = HW * D

    k1, k2, k3, kp = jax.random.split(key, 4)
    vox_feat = jax.random.normal(k1, (B, N, VOX_CH), jnp.float32)
    img_feat_rgb_dir = jax.random.normal(k2, (B, N, S, CV), jnp.float32)
    z_vals = 1.0 + 2.0 * jax.random.uniform(k3, (B, HW, D), jnp.float32)

    tar_ext = jnp.tile(jnp.eye(4, dtype=jnp.float32)[None], (B, 1, 1))
    tar_ext = tar_ext.at[:, :3, 3].set(jnp.array([0.1, -0.2, 2.0], jnp.float32))
    tar_ixt = jnp.tile(jnp.array([[50.0, 0.0, W / 2.0],
                                  [0.0, 50.0, H / 2.0],
                                  [0.0, 0.0, 1.0]], jnp.float32)[None], (B, 1, 1))

    params = make_params(kp)

    outs = gs_forward(vox_feat, img_feat_rgb_dir, z_vals, tar_ext, tar_ixt,
                      (H, W), params)
    jax.block_until_ready(outs)
    print("KERNEL_OK")
</pallas_src>

<mosaic_0001>
module attributes {stable_mosaic.version = 11 : i64} {
  func.func @_gs_kernel(%arg0: i32, %arg1: i32, %arg2: i32, %arg3: memref<1x1x32x8xf32, #tpu.memory_space<vmem>>, %arg4: memref<1x1x3x32x23xbf16, #tpu.memory_space<vmem>>, %arg5: memref<23x19xbf16, #tpu.memory_space<vmem>>, %arg6: memref<1x19xf32, #tpu.memory_space<vmem>>, %arg7: memref<19x32xbf16, #tpu.memory_space<vmem>>, %arg8: memref<19x32xbf16, #tpu.memory_space<vmem>>, %arg9: memref<19x32xbf16, #tpu.memory_space<vmem>>, %arg10: memref<1x32xf32, #tpu.memory_space<vmem>>, %arg11: memref<32x1xbf16, #tpu.memory_space<vmem>>, %arg12: memref<1x1xf32, #tpu.memory_space<vmem>>, %arg13: memref<32x16xbf16, #tpu.memory_space<vmem>>, %arg14: memref<1x16xf32, #tpu.memory_space<vmem>>, %arg15: memref<8x25xbf16, #tpu.memory_space<vmem>>, %arg16: memref<16x25xbf16, #tpu.memory_space<vmem>>, %arg17: memref<1x25xf32, #tpu.memory_space<vmem>>, %arg18: memref<23x24xbf16, #tpu.memory_space<vmem>>, %arg19: memref<24x1xbf16, #tpu.memory_space<vmem>>, %arg20: memref<1x1xf32, #tpu.memory_space<vmem>>, %arg21: memref<8x24xbf16, #tpu.memory_space<vmem>>, %arg22: memref<16x24xbf16, #tpu.memory_space<vmem>>, %arg23: memref<1x24xf32, #tpu.memory_space<vmem>>, %arg24: memref<24x72xbf16, #tpu.memory_space<vmem>>, %arg25: memref<3x72xbf16, #tpu.memory_space<vmem>>, %arg26: memref<1x72xf32, #tpu.memory_space<vmem>>, %arg27: memref<72x7xbf16, #tpu.memory_space<vmem>>, %arg28: memref<1x7xf32, #tpu.memory_space<vmem>>, %arg29: memref<1x32x10xf32, #tpu.memory_space<vmem>>, %arg30: memref<32x1xf32, #tpu.memory_space<vmem>>, %arg31: memref<32x3xf32, #tpu.memory_space<vmem>>, %arg32: memref<32x8xf32, #tpu.memory_space<vmem>>, %arg33: memref<32x16xf32, #tpu.memory_space<vmem>>) attributes {dimension_semantics = [#tpu.dimension_semantics<parallel>, #tpu.dimension_semantics<parallel>, #tpu.dimension_semantics<arbitrary>], iteration_bounds = array<i64: 2, 2, 4>, scalar_prefetch = 0 : i64, scratch_operands = 4 : i64, tpu.core_type = #tpu.core_type<tc>, window_params = [{transform_indices = @transform_0, window_bounds = array<i64: 1, 1, 32, 8>}, {transform_indices = @transform_1, window_bounds = array<i64: 1, 1, 3, 32, 23>}, {pipeline_mode = #tpu.pipeline_mode<synchronous>, transform_indices = @transform_2, window_bounds = array<i64: 23, 19>}, {pipeline_mode = #tpu.pipeline_mode<synchronous>, transform_indices = @transform_3, window_bounds = array<i64: 1, 19>}, {pipeline_mode = #tpu.pipeline_mode<synchronous>, transform_indices = @transform_4, window_bounds = array<i64: 19, 32>}, {pipeline_mode = #tpu.pipeline_mode<synchronous>, transform_indices = @transform_5, window_bounds = array<i64: 19, 32>}, {pipeline_mode = #tpu.pipeline_mode<synchronous>, transform_indices = @transform_6, window_bounds = array<i64: 19, 32>}, {pipeline_mode = #tpu.pipeline_mode<synchronous>, transform_indices = @transform_7, window_bounds = array<i64: 1, 32>}, {pipeline_mode = #tpu.pipeline_mode<synchronous>, transform_indices = @transform_8, window_bounds = array<i64: 32, 1>}, {pipeline_mode = #tpu.pipeline_mode<synchronous>, transform_indices = @transform_9, window_bounds = array<i64: 1, 1>}, {pipeline_mode = #tpu.pipeline_mode<synchronous>, transform_indices = @transform_10, window_bounds = array<i64: 32, 16>}, {pipeline_mode = #tpu.pipeline_mode<synchronous>, transform_indices = @transform_11, window_bounds = array<i64: 1, 16>}, {pipeline_mode = #tpu.pipeline_mode<synchronous>, transform_indices = @transform_12, window_bounds = array<i64: 8, 25>}, {pipeline_mode = #tpu.pipeline_mode<synchronous>, transform_indices = @transform_13, window_bounds = array<i64: 16, 25>}, {pipeline_mode = #tpu.pipeline_mode<synchronous>, transform_indices = @transform_14, window_bounds = array<i64: 1, 25>}, {pipeline_mode = #tpu.pipeline_mode<synchronous>, transform_indices = @transform_15, window_bounds = array<i64: 23, 24>}, {pipeline_mode = #tpu.pipeline_mode<synchronous>, transform_indices = @transform_16, window_bounds = array<i64: 24, 1>}, {pipeline_mode = #tpu.pipeline_mode<synchronous>, transform_indices = @transform_17, window_bounds = array<i64: 1, 1>}, {pipeline_mode = #tpu.pipeline_mode<synchronous>, transform_indices = @transform_18, window_bounds = array<i64: 8, 24>}, {pipeline_mode = #tpu.pipeline_mode<synchronous>, transform_indices = @transform_19, window_bounds = array<i64: 16, 24>}, {pipeline_mode = #tpu.pipeline_mode<synchronous>, transform_indices = @transform_20, window_bounds = array<i64: 1, 24>}, {pipeline_mode = #tpu.pipeline_mode<synchronous>, transform_indices = @transform_21, window_bounds = array<i64: 24, 72>}, {pipeline_mode = #tpu.pipeline_mode<synchronous>, transform_indices = @transform_22, window_bounds = array<i64: 3, 72>}, {pipeline_mode = #tpu.pipeline_mode<synchronous>, transform_indices = @transform_23, window_bounds = array<i64: 1, 72>}, {pipeline_mode = #tpu.pipeline_mode<synchronous>, transform_indices = @transform_24, window_bounds = array<i64: 72, 7>}, {pipeline_mode = #tpu.pipeline_mode<synchronous>, transform_indices = @transform_25, window_bounds = array<i64: 1, 7>}, {transform_indices = @transform_26, window_bounds = array<i64: 1, 32, 10>}]} {
    %c0_i32 = arith.constant 0 : i32
    %0 = arith.cmpi eq, %arg2, %c0_i32 : i32
    %1 = arith.extui %0 : i1 to i32
    %c0_i32_0 = arith.constant 0 : i32
    %2 = arith.cmpi ne, %1, %c0_i32_0 : i32
    scf.if %2 {
      %cst_92 = arith.constant 1.000000e+00 : f32
      %164 = vector.broadcast %cst_92 : f32 to vector<32x1xf32>
      %c0_93 = arith.constant 0 : index
      %c0_94 = arith.constant 0 : index
      %165 = vector.load %arg30[%c0_93, %c0_94] : memref<32x1xf32, #tpu.memory_space<vmem>>, vector<32x1xf32>
      tpu.vector_store %arg30[%c0_93, %c0_94], %164 {strides = array<i32>} : memref<32x1xf32, #tpu.memory_space<vmem>>, vector<32x1xf32>,
      %cst_95 = arith.constant 0.000000e+00 : f32
      %166 = vector.broadcast %cst_95 : f32 to vector<32x3xf32>
      %c0_96 = arith.constant 0 : index
      %c0_97 = arith.constant 0 : index
      %167 = vector.load %arg31[%c0_96, %c0_97] : memref<32x3xf32, #tpu.memory_space<vmem>>, vector<32x3xf32>
      tpu.vector_store %arg31[%c0_96, %c0_97], %166 {strides = array<i32>} : memref<32x3xf32, #tpu.memory_space<vmem>>, vector<32x3xf32>,
      %cst_98 = arith.constant 0.000000e+00 : f32
      %168 = vector.broadcast %cst_98 : f32 to vector<32x8xf32>
      %c0_99 = arith.constant 0 : index
      %c0_100 = arith.constant 0 : index
      %169 = vector.load %arg32[%c0_99, %c0_100] : memref<32x8xf32, #tpu.memory_space<vmem>>, vector<32x8xf32>
      tpu.vector_store %arg32[%c0_99, %c0_100], %168 {strides = array<i32>} : memref<32x8xf32, #tpu.memory_space<vmem>>, vector<32x8xf32>,
      %cst_101 = arith.constant 0.000000e+00 : f32
      %170 = vector.broadcast %cst_101 : f32 to vector<32x16xf32>
      %c0_102 = arith.constant 0 : index
      %c0_103 = arith.constant 0 : index
      %171 = vector.load %arg33[%c0_102, %c0_103] : memref<32x16xf32, #tpu.memory_space<vmem>>, vector<32x16xf32>
      tpu.vector_store %arg33[%c0_102, %c0_103], %170 {strides = array<i32>} : memref<32x16xf32, #tpu.memory_space<vmem>>, vector<32x16xf32>,
    } else {
    }
    %c0 = arith.constant 0 : index
    %c0_1 = arith.constant 0 : index
    %c0_2 = arith.constant 0 : index
    %c0_3 = arith.constant 0 : index
    %c0_4 = arith.constant 0 : index
    %3 = vector.load %arg4[%c0, %c0_1, %c0_2, %c0_3, %c0_4] : memref<1x1x3x32x23xbf16, #tpu.memory_space<vmem>>, vector<1x1x3x32x23xbf16>
    %4 = vector.shape_cast %3 : vector<1x1x3x32x23xbf16> to vector<3x32x23xbf16>
    %5 = vector.shape_cast %4 : vector<3x32x23xbf16> to vector<96x23xbf16>
    %c0_5 = arith.constant 0 : index
    %c0_6 = arith.constant 0 : index
    %6 = vector.load %arg5[%c0_5, %c0_6] : memref<23x19xbf16, #tpu.memory_space<vmem>>, vector<23x19xbf16>
    %cst = arith.constant dense<0.000000e+00> : vector<96x19xf32>
    %7 = tpu.matmul %5, %6, %cst {dimension_numbers = #tpu.dot_dimension_numbers<[1], [0], [0], [1], [0, 0, 1, 1], [], []>} : vector<96x23xbf16>, vector<23x19xbf16>, vector<96x19xf32> -> vector<96x19xf32>
    %c0_7 = arith.constant 0 : index
    %c0_8 = arith.constant 0 : index
    %8 = vector.load %arg6[%c0_7, %c0_8] : memref<1x19xf32, #tpu.memory_space<vmem>>, vector<1x19xf32>
    %9 = vector.broadcast %8 : vector<1x19xf32> to vector<96x19xf32>
    %10 = arith.addf %7, %9 : vector<96x19xf32>
    %cst_9 = arith.constant 0.000000e+00 : f32
    %11 = vector.broadcast %cst_9 : f32 to vector<96x19xf32>
    %12 = arith.maximumf %10, %11 : vector<96x19xf32>
    %13 = vector.extract_strided_slice %5 {offsets = [0, 0], sizes = [96, 19], strides = [1, 1]} : vector<96x23xbf16> to vector<96x19xbf16>
    %14 = arith.extf %13 : vector<96x19xbf16> to vector<96x19xf32>
    %15 = arith.addf %14, %12 : vector<96x19xf32>
    %16 = vector.shape_cast %15 : vector<96x19xf32> to vector<3x32x19xf32>
    %cst_10 = arith.constant dense<0.000000e+00> : vector<32x19xf32>
    %17 = vector.multi_reduction <add>, %16, %cst_10 [0] : vector<3x32x19xf32> to vector<32x19xf32>
    %cst_11 = arith.constant 3.000000e+00 : f32
    %18 = vector.broadcast %cst_11 : f32 to vector<32x19xf32>
    %19 = arith.divf %17, %18 : vector<32x19xf32>
    %20 = vector.shape_cast %19 : vector<32x19xf32> to vector<1x32x19xf32>
    %21 = vector.broadcast %20 : vector<1x32x19xf32> to vector<3x32x19xf32>
    %22 = arith.subf %16, %21 : vector<3x32x19xf32>
    %23 = arith.mulf %22, %22 : vector<3x32x19xf32>
    %cst_12 = arith.constant dense<0.000000e+00> : vector<32x19xf32>
    %24 = vector.multi_reduction <add>, %23, %cst_12 [0] : vector<3x32x19xf32> to vector<32x19xf32>
    %cst_13 = arith.constant 5.000000e-01 : f32
    %25 = vector.broadcast %cst_13 : f32 to vector<32x19xf32>
    %26 = arith.mulf %24, %25 : vector<32x19xf32>
    %27 = arith.truncf %26 : vector<32x19xf32> to vector<32x19xbf16>
    %c0_14 = arith.constant 0 : index
    %c0_15 = arith.constant 0 : index
    %28 = vector.load %arg8[%c0_14, %c0_15] : memref<19x32xbf16, #tpu.memory_space<vmem>>, vector<19x32xbf16>
    %cst_16 = arith.constant dense<0.000000e+00> : vector<32x32xf32>
    %29 = tpu.matmul %27, %28, %cst_16 {dimension_numbers = #tpu.dot_dimension_numbers<[1], [0], [0], [1], [0, 0, 1, 1], [], []>} : vector<32x19xbf16>, vector<19x32xbf16>, vector<32x32xf32> -> vector<32x32xf32>
    %30 = arith.truncf %19 : vector<32x19xf32> to vector<32x19xbf16>
    %c0_17 = arith.constant 0 : index
    %c0_18 = arith.constant 0 : index
    %31 = vector.load %arg9[%c0_17, %c0_18] : memref<19x32xbf16, #tpu.memory_space<vmem>>, vector<19x32xbf16>
    %cst_19 = arith.constant dense<0.000000e+00> : vector<32x32xf32>
    %32 = tpu.matmul %30, %31, %cst_19 {dimension_numbers = #tpu.dot_dimension_numbers<[1], [0], [0], [1], [0, 0, 1, 1], [], []>} : vector<32x19xbf16>, vector<19x32xbf16>, vector<32x32xf32> -> vector<32x32xf32>
    %33 = arith.addf %29, %32 : vector<32x32xf32>
    %c0_20 = arith.constant 0 : index
    %c0_21 = arith.constant 0 : index
    %34 = vector.load %arg10[%c0_20, %c0_21] : memref<1x32xf32, #tpu.memory_space<vmem>>, vector<1x32xf32>
    %35 = vector.broadcast %34 : vector<1x32xf32> to vector<32x32xf32>
    %36 = arith.addf %33, %35 : vector<32x32xf32>
    %37 = arith.truncf %15 : vector<96x19xf32> to vector<96x19xbf16>
    %c0_22 = arith.constant 0 : index
    %c0_23 = arith.constant 0 : index
    %38 = vector.load %arg7[%c0_22, %c0_23] : memref<19x32xbf16, #tpu.memory_space<vmem>>, vector<19x32xbf16>
    %cst_24 = arith.constant dense<0.000000e+00> : vector<96x32xf32>
    %39 = tpu.matmul %37, %38, %cst_24 {dimension_numbers = #tpu.dot_dimension_numbers<[1], [0], [0], [1], [0, 0, 1, 1], [], []>} : vector<96x19xbf16>, vector<19x32xbf16>, vector<96x32xf32> -> vector<96x32xf32>
    %40 = vector.shape_cast %39 : vector<96x32xf32> to vector<3x32x32xf32>
    %41 = vector.shape_cast %36 : vector<32x32xf32> to vector<1x32x32xf32>
    %42 = vector.broadcast %41 : vector<1x32x32xf32> to vector<3x32x32xf32>
    %43 = arith.addf %40, %42 : vector<3x32x32xf32>
    %cst_25 = arith.constant 0.000000e+00 : f32
    %44 = vector.broadcast %cst_25 : f32 to vector<3x32x32xf32>
    %45 = arith.maximumf %43, %44 : vector<3x32x32xf32>
    %46 = vector.shape_cast %45 : vector<3x32x32xf32> to vector<96x32xf32>
    %47 = arith.truncf %46 : vector<96x32xf32> to vector<96x32xbf16>
    %c0_26 = arith.constant 0 : index
    %c0_27 = arith.constant 0 : index
    %48 = vector.load %arg11[%c0_26, %c0_27] : memref<32x1xbf16, #tpu.memory_space<vmem>>, vector<32x1xbf16>
    %cst_28 = arith.constant dense<0.000000e+00> : vector<96x1xf32>
    %49 = tpu.matmul %47, %48, %cst_28 {dimension_numbers = #tpu.dot_dimension_numbers<[1], [0], [0], [1], [0, 0, 1, 1], [], []>} : vector<96x32xbf16>, vector<32x1xbf16>, vector<96x1xf32> -> vector<96x1xf32>
    %c0_29 = arith.constant 0 : index
    %c0_30 = arith.constant 0 : index
    %50 = vector.load %arg12[%c0_29, %c0_30] : memref<1x1xf32, #tpu.memory_space<vmem>>, vector<1x1xf32>
    %51 = vector.broadcast %50 : vector<1x1xf32> to vector<96x1xf32>
    %52 = arith.addf %49, %51 : vector<96x1xf32>
    %cst_31 = arith.constant 0.000000e+00 : f32
    %53 = vector.broadcast %cst_31 : f32 to vector<96x1xf32>
    %54 = arith.maximumf %52, %53 : vector<96x1xf32>
    %55 = vector.shape_cast %54 : vector<96x1xf32> to vector<3x32x1xf32>
    %cst_32 = arith.constant dense<0xFF800000> : vector<32x1xf32>
    %56 = vector.multi_reduction <maximumf>, %55, %cst_32 [0] : vector<3x32x1xf32> to vector<32x1xf32>
    %57 = vector.shape_cast %56 : vector<32x1xf32> to vector<1x32x1xf32>
    %58 = vector.broadcast %57 : vector<1x32x1xf32> to vector<3x32x1xf32>
    %59 = arith.subf %55, %58 : vector<3x32x1xf32>
    %60 = math.exp %59 : vector<3x32x1xf32>
    %cst_33 = arith.constant dense<0.000000e+00> : vector<32x1xf32>
    %61 = vector.multi_reduction <add>, %60, %cst_33 [0] : vector<3x32x1xf32> to vector<32x1xf32>
    %62 = tpu.reciprocal %61 {approx = true} : vector<32x1xf32> -> vector<32x1xf32>
    %63 = vector.broadcast %60 : vector<3x32x1xf32> to vector<3x32x32xf32>
    %64 = arith.mulf %45, %63 : vector<3x32x32xf32>
    %cst_34 = arith.constant dense<0.000000e+00> : vector<32x32xf32>
    %65 = vector.multi_reduction <add>, %64, %cst_34 [0] : vector<3x32x32xf32> to vector<32x32xf32>
    %66 = vector.broadcast %62 : vector<32x1xf32> to vector<32x32xf32>
    %67 = arith.mulf %65, %66 : vector<32x32xf32>
    %68 = arith.truncf %67 : vector<32x32xf32> to vector<32x32xbf16>
    %c0_35 = arith.constant 0 : index
    %c0_36 = arith.constant 0 : index
    %69 = vector.load %arg13[%c0_35, %c0_36] : memref<32x16xbf16, #tpu.memory_space<vmem>>, vector<32x16xbf16>
    %cst_37 = arith.constant dense<0.000000e+00> : vector<32x16xf32>
    %70 = tpu.matmul %68, %69, %cst_37 {dimension_numbers = #tpu.dot_dimension_numbers<[1], [0], [0], [1], [0, 0, 1, 1], [], []>} : vector<32x32xbf16>, vector<32x16xbf16>, vector<32x16xf32> -> vector<32x16xf32>
    %c0_38 = arith.constant 0 : index
    %c0_39 = arith.constant 0 : index
    %71 = vector.load %arg14[%c0_38, %c0_39] : memref<1x16xf32, #tpu.memory_space<vmem>>, vector<1x16xf32>
    %72 = vector.broadcast %71 : vector<1x16xf32> to vector<32x16xf32>
    %73 = arith.addf %70, %72 : vector<32x16xf32>
    %cst_40 = arith.constant 0.000000e+00 : f32
    %74 = vector.broadcast %cst_40 : f32 to vector<32x16xf32>
    %75 = arith.maximumf %73, %74 : vector<32x16xf32>
    %c0_41 = arith.constant 0 : index
    %c0_42 = arith.constant 0 : index
    %c0_43 = arith.constant 0 : index
    %c0_44 = arith.constant 0 : index
    %76 = vector.load %arg3[%c0_41, %c0_42, %c0_43, %c0_44] : memref<1x1x32x8xf32, #tpu.memory_space<vmem>>, vector<1x1x32x8xf32>
    %77 = vector.shape_cast %76 : vector<1x1x32x8xf32> to vector<32x8xf32>
    %78 = arith.truncf %77 : vector<32x8xf32> to vector<32x8xbf16>
    %c0_45 = arith.constant 0 : index
    %c0_46 = arith.constant 0 : index
    %79 = vector.load %arg15[%c0_45, %c0_46] : memref<8x25xbf16, #tpu.memory_space<vmem>>, vector<8x25xbf16>
    %cst_47 = arith.constant dense<0.000000e+00> : vector<32x25xf32>
    %80 = tpu.matmul %78, %79, %cst_47 {dimension_numbers = #tpu.dot_dimension_numbers<[1], [0], [0], [1], [0, 0, 1, 1], [], []>} : vector<32x8xbf16>, vector<8x25xbf16>, vector<32x25xf32> -> vector<32x25xf32>
    %81 = arith.truncf %75 : vector<32x16xf32> to vector<32x16xbf16>
    %c0_48 = arith.constant 0 : index
    %c0_49 = arith.constant 0 : index
    %82 = vector.load %arg16[%c0_48, %c0_49] : memref<16x25xbf16, #tpu.memory_space<vmem>>, vector<16x25xbf16>
    %cst_50 = arith.constant dense<0.000000e+00> : vector<32x25xf32>
    %83 = tpu.matmul %81, %82, %cst_50 {dimension_numbers = #tpu.dot_dimension_numbers<[1], [0], [0], [1], [0, 0, 1, 1], [], []>} : vector<32x16xbf16>, vector<16x25xbf16>, vector<32x25xf32> -> vector<32x25xf32>
    %84 = arith.addf %80, %83 : vector<32x25xf32>
    %c0_51 = arith.constant 0 : index
    %c0_52 = arith.constant 0 : index
    %85 = vector.load %arg17[%c0_51, %c0_52] : memref<1x25xf32, #tpu.memory_space<vmem>>, vector<1x25xf32>
    %86 = vector.broadcast %85 : vector<1x25xf32> to vector<32x25xf32>
    %87 = arith.addf %84, %86 : vector<32x25xf32>
    %88 = vector.extract_strided_slice %87 {offsets = [0, 0], sizes = [32, 24], strides = [1, 1]} : vector<32x25xf32> to vector<32x24xf32>
    %89 = vector.extract_strided_slice %87 {offsets = [0, 24], sizes = [32, 1], strides = [1, 1]} : vector<32x25xf32> to vector<32x1xf32>
    %cst_53 = arith.constant 0.000000e+00 : f32
    %90 = vector.broadcast %cst_53 : f32 to vector<32x1xf32>
    %91 = arith.maximumf %89, %90 : vector<32x1xf32>
    %92 = math.absf %89 : vector<32x1xf32>
    %cst_54 = arith.constant 0.000000e+00 : f32
    %93 = vector.broadcast %cst_54 : f32 to vector<32x1xf32>
    %94 = arith.subf %93, %92 : vector<32x1xf32>
    %95 = math.exp %94 : vector<32x1xf32>
    %cst_55 = arith.constant 1.000000e+00 : f32
    %96 = vector.broadcast %cst_55 : f32 to vector<32x1xf32>
    %97 = arith.addf %96, %95 : vector<32x1xf32>
    %98 = math.log %97 : vector<32x1xf32>
    %99 = arith.addf %91, %98 : vector<32x1xf32>
    %c0_56 = arith.constant 0 : index
    %c0_57 = arith.constant 0 : index
    %100 = vector.load %arg18[%c0_56, %c0_57] : memref<23x24xbf16, #tpu.memory_space<vmem>>, vector<23x24xbf16>
    %cst_58 = arith.constant dense<0.000000e+00> : vector<96x24xf32>
    %101 = tpu.matmul %5, %100, %cst_58 {dimension_numbers = #tpu.dot_dimension_numbers<[1], [0], [0], [1], [0, 0, 1, 1], [], []>} : vector<96x23xbf16>, vector<23x24xbf16>, vector<96x24xf32> -> vector<96x24xf32>
    %102 = vector.shape_cast %101 : vector<96x24xf32> to vector<3x32x24xf32>
    %103 = vector.shape_cast %88 : vector<32x24xf32> to vector<1x32x24xf32>
    %104 = vector.broadcast %103 : vector<1x32x24xf32> to vector<3x32x24xf32>
    %105 = arith.addf %102, %104 : vector<3x32x24xf32>
    %cst_59 = arith.constant 0.000000e+00 : f32
    %106 = vector.broadcast %cst_59 : f32 to vector<3x32x24xf32>
    %107 = arith.maximumf %105, %106 : vector<3x32x24xf32>
    %108 = vector.shape_cast %107 : vector<3x32x24xf32> to vector<96x24xf32>
    %109 = arith.truncf %108 : vector<96x24xf32> to vector<96x24xbf16>
    %c0_60 = arith.constant 0 : index
    %c0_61 = arith.constant 0 : index
    %110 = vector.load %arg19[%c0_60, %c0_61] : memref<24x1xbf16, #tpu.memory_space<vmem>>, vector<24x1xbf16>
    %cst_62 = arith.constant dense<0.000000e+00> : vector<96x1xf32>
    %111 = tpu.matmul %109, %110, %cst_62 {dimension_numbers = #tpu.dot_dimension_numbers<[1], [0], [0], [1], [0, 0, 1, 1], [], []>} : vector<96x24xbf16>, vector<24x1xbf16>, vector<96x1xf32> -> vector<96x1xf32>
    %c0_63 = arith.constant 0 : index
    %c0_64 = arith.constant 0 : index
    %112 = vector.load %arg20[%c0_63, %c0_64] : memref<1x1xf32, #tpu.memory_space<vmem>>, vector<1x1xf32>
    %113 = vector.broadcast %112 : vector<1x1xf32> to vector<96x1xf32>
    %114 = arith.addf %111, %113 : vector<96x1xf32>
    %cst_65 = arith.constant 0.000000e+00 : f32
    %115 = vector.broadcast %cst_65 : f32 to vector<96x1xf32>
    %116 = arith.maximumf %114, %115 : vector<96x1xf32>
    %117 = vector.shape_cast %116 : vector<96x1xf32> to vector<3x32x1xf32>
    %cst_66 = arith.constant dense<0xFF800000> : vector<32x1xf32>
    %118 = vector.multi_reduction <maximumf>, %117, %cst_66 [0] : vector<3x32x1xf32> to vector<32x1xf32>
    %119 = vector.shape_cast %118 : vector<32x1xf32> to vector<1x32x1xf32>
    %120 = vector.broadcast %119 : vector<1x32x1xf32> to vector<3x32x1xf32>
    %121 = arith.subf %117, %120 : vector<3x32x1xf32>
    %122 = math.exp %121 : vector<3x32x1xf32>
    %cst_67 = arith.constant dense<0.000000e+00> : vector<32x1xf32>
    %123 = vector.multi_reduction <add>, %122, %cst_67 [0] : vector<3x32x1xf32> to vector<32x1xf32>
    %124 = tpu.reciprocal %123 {approx = true} : vector<32x1xf32> -> vector<32x1xf32>
    %125 = vector.extract_strided_slice %4 {offsets = [0, 0, 16], sizes = [3, 32, 3], strides = [1, 1, 1]} : vector<3x32x23xbf16> to vector<3x32x3xbf16>
    %126 = arith.extf %125 : vector<3x32x3xbf16> to vector<3x32x3xf32>
    %127 = vector.broadcast %122 : vector<3x32x1xf32> to vector<3x32x3xf32>
    %128 = arith.mulf %126, %127 : vector<3x32x3xf32>
    %cst_68 = arith.constant dense<0.000000e+00> : vector<32x3xf32>
    %129 = vector.multi_reduction <add>, %128, %cst_68 [0] : vector<3x32x3xf32> to vector<32x3xf32>
    %130 = vector.broadcast %124 : vector<32x1xf32> to vector<32x3xf32>
    %131 = arith.mulf %129, %130 : vector<32x3xf32>
    %cst_69 = arith.constant 0.000000e+00 : f32
    %132 = vector.broadcast %cst_69 : f32 to vector<32x1xf32>
    %133 = arith.subf %132, %99 : vector<32x1xf32>
    %134 = math.exp %133 : vector<32x1xf32>
    %cst_70 = arith.constant 1.000000e+00 : f32
    %135 = vector.broadcast %cst_70 : f32 to vector<32x1xf32>
    %136 = arith.subf %135, %134 : vector<32x1xf32>
    %c0_71 = arith.constant 0 : index
    %c0_72 = arith.constant 0 : index
    %137 = vector.load %arg30[%c0_71, %c0_72] : memref<32x1xf32, #tpu.memory_space<vmem>>, vector<32x1xf32>
    %138 = arith.mulf %136, %137 : vector<32x1xf32>
    %c0_73 = arith.constant 0 : index
    %c0_74 = arith.constant 0 : index
    %139 = vector.load %arg31[%c0_73, %c0_74] : memref<32x3xf32, #tpu.memory_space<vmem>>, vector<32x3xf32>
    %140 = vector.broadcast %138 : vector<32x1xf32> to vector<32x3xf32>
    %141 = arith.mulf %140, %131 : vector<32x3xf32>
    %142 = arith.addf %139, %141 : vector<32x3xf32>
    %c0_75 = arith.constant 0 : index
    %c0_76 = arith.constant 0 : index
    %143 = vector.load %arg31[%c0_75, %c0_76] : memref<32x3xf32, #tpu.memory_space<vmem>>, vector<32x3xf32>
    tpu.vector_store %arg31[%c0_75, %c0_76], %142 {strides = array<i32>} : memref<32x3xf32, #tpu.memory_space<vmem>>, vector<32x3xf32>,
    %c0_77 = arith.constant 0 : index
    %c0_78 = arith.constant 0 : index
    %144 = vector.load %arg32[%c0_77, %c0_78] : memref<32x8xf32, #tpu.memory_space<vmem>>, vector<32x8xf32>
    %145 = vector.broadcast %138 : vector<32x1xf32> to vector<32x8xf32>
    %146 = arith.mulf %145, %77 : vector<32x8xf32>
    %147 = arith.addf %144, %146 : vector<32x8xf32>
    %c0_79 = arith.constant 0 : index
    %c0_80 = arith.constant 0 : index
    %148 = vector.load %arg32[%c0_79, %c0_80] : memref<32x8xf32, #tpu.memory_space<vmem>>, vector<32x8xf32>
    tpu.vector_store %arg32[%c0_79, %c0_80], %147 {strides = array<i32>} : memref<32x8xf32, #tpu.memory_space<vmem>>, vector<32x8xf32>,
    %c0_81 = arith.constant 0 : index
    %c0_82 = arith.constant 0 : index
    %149 = vector.load %arg33[%c0_81, %c0_82] : memref<32x16xf32, #tpu.memory_space<vmem>>, vector<32x16xf32>
    %150 = vector.broadcast %138 : vector<32x1xf32> to vector<32x16xf32>
    %151 = arith.mulf %150, %75 : vector<32x16xf32>
    %152 = arith.addf %149, %151 : vector<32x16xf32>
    %c0_83 = arith.constant 0 : index
    %c0_84 = arith.constant 0 : index
    %153 = vector.load %arg33[%c0_83, %c0_84] : memref<32x16xf32, #tpu.memory_space<vmem>>, vector<32x16xf32>
    tpu.vector_store %arg33[%c0_83, %c0_84], %152 {strides = array<i32>} : memref<32x16xf32, #tpu.memory_space<vmem>>, vector<32x16xf32>,
    %c0_85 = arith.constant 0 : index
    %c0_86 = arith.constant 0 : index
    %154 = vector.load %arg30[%c0_85, %c0_86] : memref<32x1xf32, #tpu.memory_space<vmem>>, vector<32x1xf32>
    %cst_87 = arith.constant 1.000000e+00 : f32
    %155 = vector.broadcast %cst_87 : f32 to vector<32x1xf32>
    %156 = arith.subf %155, %136 : vector<32x1xf32>
    %cst_88 = arith.constant 1.000000e-10 : f32
    %157 = vector.broadcast %cst_88 : f32 to vector<32x1xf32>
    %158 = arith.addf %156, %157 : vector<32x1xf32>
    %159 = arith.mulf %154, %158 : vector<32x1xf32>
    %c0_89 = arith.constant 0 : index
    %c0_90 = arith.constant 0 : index
    %160 = vector.load %arg30[%c0_89, %c0_90] : memref<32x1xf32, #tpu.memory_space<vmem>>, vector<32x1xf32>
    tpu.vector_store %arg30[%c0_89, %c0_90], %159 {strides = array<i32>} : memref<32x1xf32, #tpu.memory_space<vmem>>, vector<32x1xf32>,
    %c3_i32 = arith.constant 3 : i32
    %161 = arith.cmpi eq, %arg2, %c3_i32 : i32
    %162 = arith.extui %161 : i1 to i32
    %c0_i32_91 = arith.constant 0 : i32
    %163 = arith.cmpi ne, %162, %c0_i32_91 : i32
    scf.if %163 {
      %c0_92 = arith.constant 0 : index
      %c0_93 = arith.constant 0 : index
      %164 = vector.load %arg32[%c0_92, %c0_93] : memref<32x8xf32, #tpu.memory_space<vmem>>, vector<32x8xf32>
      %165 = arith.truncf %164 : vector<32x8xf32> to vector<32x8xbf16>
      %c0_94 = arith.constant 0 : index
      %c0_95 = arith.constant 0 : index
      %166 = vector.load %arg21[%c0_94, %c0_95] : memref<8x24xbf16, #tpu.memory_space<vmem>>, vector<8x24xbf16>
      %cst_96 = arith.constant dense<0.000000e+00> : vector<32x24xf32>
      %167 = tpu.matmul %165, %166, %cst_96 {dimension_numbers = #tpu.dot_dimension_numbers<[1], [0], [0], [1], [0, 0, 1, 1], [], []>} : vector<32x8xbf16>, vector<8x24xbf16>, vector<32x24xf32> -> vector<32x24xf32>
      %c0_97 = arith.constant 0 : index
      %c0_98 = arith.constant 0 : index
      %168 = vector.load %arg33[%c0_97, %c0_98] : memref<32x16xf32, #tpu.memory_space<vmem>>, vector<32x16xf32>
      %169 = arith.truncf %168 : vector<32x16xf32> to vector<32x16xbf16>
      %c0_99 = arith.constant 0 : index
      %c0_100 = arith.constant 0 : index
      %170 = vector.load %arg22[%c0_99, %c0_100] : memref<16x24xbf16, #tpu.memory_space<vmem>>, vector<16x24xbf16>
      %cst_101 = arith.constant dense<0.000000e+00> : vector<32x24xf32>
      %171 = tpu.matmul %169, %170, %cst_101 {dimension_numbers = #tpu.dot_dimension_numbers<[1], [0], [0], [1], [0, 0, 1, 1], [], []>} : vector<32x16xbf16>, vector<16x24xbf16>, vector<32x24xf32> -> vector<32x24xf32>
      %172 = arith.addf %167, %171 : vector<32x24xf32>
      %c0_102 = arith.constant 0 : index
      %c0_103 = arith.constant 0 : index
      %173 = vector.load %arg23[%c0_102, %c0_103] : memref<1x24xf32, #tpu.memory_space<vmem>>, vector<1x24xf32>
      %174 = vector.broadcast %173 : vector<1x24xf32> to vector<32x24xf32>
      %175 = arith.addf %172, %174 : vector<32x24xf32>
      %cst_104 = arith.constant 0.000000e+00 : f32
      %176 = vector.broadcast %cst_104 : f32 to vector<32x24xf32>
      %177 = arith.maximumf %175, %176 : vector<32x24xf32>
      %178 = arith.truncf %177 : vector<32x24xf32> to vector<32x24xbf16>
      %c0_105 = arith.constant 0 : index
      %c0_106 = arith.constant 0 : index
      %179 = vector.load %arg24[%c0_105, %c0_106] : memref<24x72xbf16, #tpu.memory_space<vmem>>, vector<24x72xbf16>
      %cst_107 = arith.constant dense<0.000000e+00> : vector<32x72xf32>
      %180 = tpu.matmul %178, %179, %cst_107 {dimension_numbers = #tpu.dot_dimension_numbers<[1], [0], [0], [1], [0, 0, 1, 1], [], []>} : vector<32x24xbf16>, vector<24x72xbf16>, vector<32x72xf32> -> vector<32x72xf32>
      %c0_108 = arith.constant 0 : index
      %c0_109 = arith.constant 0 : index
      %181 = vector.load %arg31[%c0_108, %c0_109] : memref<32x3xf32, #tpu.memory_space<vmem>>, vector<32x3xf32>
      %182 = arith.truncf %181 : vector<32x3xf32> to vector<32x3xbf16>
      %c0_110 = arith.constant 0 : index
      %c0_111 = arith.constant 0 : index
      %183 = vector.load %arg25[%c0_110, %c0_111] : memref<3x72xbf16, #tpu.memory_space<vmem>>, vector<3x72xbf16>
      %cst_112 = arith.constant dense<0.000000e+00> : vector<32x72xf32>
      %184 = tpu.matmul %182, %183, %cst_112 {dimension_numbers = #tpu.dot_dimension_numbers<[1], [0], [0], [1], [0, 0, 1, 1], [], []>} : vector<32x3xbf16>, vector<3x72xbf16>, vector<32x72xf32> -> vector<32x72xf32>
      %185 = arith.addf %180, %184 : vector<32x72xf32>
      %c0_113 = arith.constant 0 : index
      %c0_114 = arith.constant 0 : index
      %186 = vector.load %arg26[%c0_113, %c0_114] : memref<1x72xf32, #tpu.memory_space<vmem>>, vector<1x72xf32>
      %187 = vector.broadcast %186 : vector<1x72xf32> to vector<32x72xf32>
      %188 = arith.addf %185, %187 : vector<32x72xf32>
      %cst_115 = arith.constant 0.000000e+00 : f32
      %189 = vector.broadcast %cst_115 : f32 to vector<32x72xf32>
      %190 = arith.maximumf %188, %189 : vector<32x72xf32>
      %191 = arith.truncf %190 : vector<32x72xf32> to vector<32x72xbf16>
      %c0_116 = arith.constant 0 : index
      %c0_117 = arith.constant 0 : index
      %192 = vector.load %arg27[%c0_116, %c0_117] : memref<72x7xbf16, #tpu.memory_space<vmem>>, vector<72x7xbf16>
      %cst_118 = arith.constant dense<0.000000e+00> : vector<32x7xf32>
      %193 = tpu.matmul %191, %192, %cst_118 {dimension_numbers = #tpu.dot_dimension_numbers<[1], [0], [0], [1], [0, 0, 1, 1], [], []>} : vector<32x72xbf16>, vector<72x7xbf16>, vector<32x7xf32> -> vector<32x7xf32>
      %c0_119 = arith.constant 0 : index
      %c0_120 = arith.constant 0 : index
      %194 = vector.load %arg28[%c0_119, %c0_120] : memref<1x7xf32, #tpu.memory_space<vmem>>, vector<1x7xf32>
      %195 = vector.broadcast %194 : vector<1x7xf32> to vector<32x7xf32>
      %196 = arith.addf %193, %195 : vector<32x7xf32>
      %197 = tpu.iota {dimensions = array<i32: 1>} : vector<32x7xi32>
      %c3_i32_121 = arith.constant 3 : i32
      %198 = vector.broadcast %c3_i32_121 : i32 to vector<32x7xi32>
      %199 = arith.cmpi slt, %197, %198 : vector<32x7xi32>
      %cst_122 = arith.constant 0.000000e+00 : f32
      %200 = vector.broadcast %cst_122 : f32 to vector<32x7xf32>
      %201 = arith.maximumf %196, %200 : vector<32x7xf32>
      %202 = math.absf %196 : vector<32x7xf32>
      %cst_123 = arith.constant 0.000000e+00 : f32
      %203 = vector.broadcast %cst_123 : f32 to vector<32x7xf32>
      %204 = arith.subf %203, %202 : vector<32x7xf32>
      %205 = math.exp %204 : vector<32x7xf32>
      %cst_124 = arith.constant 1.000000e+00 : f32
      %206 = vector.broadcast %cst_124 : f32 to vector<32x7xf32>
      %207 = arith.addf %206, %205 : vector<32x7xf32>
      %208 = math.log %207 : vector<32x7xf32>
      %209 = arith.addf %201, %208 : vector<32x7xf32>
      %cst_125 = arith.constant 0.000000e+00 : f32
      %210 = vector.broadcast %cst_125 : f32 to vector<32x7xf32>
      %211 = arith.subf %210, %196 : vector<32x7xf32>
      %212 = math.exp %211 : vector<32x7xf32>
      %cst_126 = arith.constant 1.000000e+00 : f32
      %213 = vector.broadcast %cst_126 : f32 to vector<32x7xf32>
      %214 = arith.addf %213, %212 : vector<32x7xf32>
      %215 = tpu.reciprocal %214 {approx = true} : vector<32x7xf32> -> vector<32x7xf32>
      %216 = arith.select %199, %209, %215 : vector<32x7xi1>, vector<32x7xf32>
      %c0_127 = arith.constant 0 : index
      %c0_128 = arith.constant 0 : index
      %217 = vector.load %arg31[%c0_127, %c0_128] : memref<32x3xf32, #tpu.memory_space<vmem>>, vector<32x3xf32>
      %218 = tpu.concatenate %217, %216 in 1 : vector<32x3xf32>, vector<32x7xf32> -> vector<32x10xf32>
      %c0_129 = arith.constant 0 : index
      %c0_130 = arith.constant 0 : index
      %c0_131 = arith.constant 0 : index
      %219 = vector.load %arg29[%c0_129, %c0_130, %c0_131] : memref<1x32x10xf32, #tpu.memory_space<vmem>>, vector<1x32x10xf32>
      %220 = vector.shape_cast %219 : vector<1x32x10xf32> to vector<32x10xf32>
      %221 = vector.shape_cast %218 : vector<32x10xf32> to vector<1x32x10xf32>
      tpu.vector_store %arg29[%c0_129, %c0_130, %c0_131], %221 {strides = array<i32>} : memref<1x32x10xf32, #tpu.memory_space<vmem>>, vector<1x32x10xf32>,
    } else {
    }
    return
  }
  func.func @transform_0(%arg0: i32, %arg1: i32, %arg2: i32) -> (i32, i32, i32, i32) {
    %c0_i32 = arith.constant 0 : i32
    %c0_i32_0 = arith.constant 0 : i32
    return %arg1, %arg2, %arg0, %c0_i32 : i32, i32, i32, i32
  }
  func.func @transform_1(%arg0: i32, %arg1: i32, %arg2: i32) -> (i32, i32, i32, i32, i32) {
    %c0_i32 = arith.constant 0 : i32
    %c0_i32_0 = arith.constant 0 : i32
    %c0_i32_1 = arith.constant 0 : i32
    return %arg1, %arg2, %c0_i32, %arg0, %c0_i32_0 : i32, i32, i32, i32, i32
  }
  func.func @transform_2(%arg0: i32, %arg1: i32, %arg2: i32) -> (i32, i32) {
    %c0_i32 = arith.constant 0 : i32
    %c0_i32_0 = arith.constant 0 : i32
    %c0_i32_1 = arith.constant 0 : i32
    return %c0_i32, %c0_i32_0 : i32, i32
  }
  func.func @transform_3(%arg0: i32, %arg1: i32, %arg2: i32) -> (i32, i32) {
    %c0_i32 = arith.constant 0 : i32
    %c0_i32_0 = arith.constant 0 : i32
    %c0_i32_1 = arith.constant 0 : i32
    return %c0_i32, %c0_i32_0 : i32, i32
  }
  func.func @transform_4(%arg0: i32, %arg1: i32, %arg2: i32) -> (i32, i32) {
    %c0_i32 = arith.constant 0 : i32
    %c0_i32_0 = arith.constant 0 : i32
    %c0_i32_1 = arith.constant 0 : i32
    return %c0_i32, %c0_i32_0 : i32, i32
  }
  func.func @transform_5(%arg0: i32, %arg1: i32, %arg2: i32) -> (i32, i32) {
    %c0_i32 = arith.constant 0 : i32
    %c0_i32_0 = arith.constant 0 : i32
    %c0_i32_1 = arith.constant 0 : i32
    return %c0_i32, %c0_i32_0 : i32, i32
  }
  func.func @transform_6(%arg0: i32, %arg1: i32, %arg2: i32) -> (i32, i32) {
    %c0_i32 = arith.constant 0 : i32
    %c0_i32_0 = arith.constant 0 : i32
    %c0_i32_1 = arith.constant 0 : i32
    return %c0_i32, %c0_i32_0 : i32, i32
  }
  func.func @transform_7(%arg0: i32, %arg1: i32, %arg2: i32) -> (i32, i32) {
    %c0_i32 = arith.constant 0 : i32
    %c0_i32_0 = arith.constant 0 : i32
    %c0_i32_1 = arith.constant 0 : i32
    return %c0_i32, %c0_i32_0 : i32, i32
  }
  func.func @transform_8(%arg0: i32, %arg1: i32, %arg2: i32) -> (i32, i32) {
    %c0_i32 = arith.constant 0 : i32
    %c0_i32_0 = arith.constant 0 : i32
    %c0_i32_1 = arith.constant 0 : i32
    return %c0_i32, %c0_i32_0 : i32, i32
  }
  func.func @transform_9(%arg0: i32, %arg1: i32, %arg2: i32) -> (i32, i32) {
    %c0_i32 = arith.constant 0 : i32
    %c0_i32_0 = arith.constant 0 : i32
    %c0_i32_1 = arith.constant 0 : i32
    return %c0_i32, %c0_i32_0 : i32, i32
  }
  func.func @transform_10(%arg0: i32, %arg1: i32, %arg2: i32) -> (i32, i32) {
    %c0_i32 = arith.constant 0 : i32
    %c0_i32_0 = arith.constant 0 : i32
    %c0_i32_1 = arith.constant 0 : i32
    return %c0_i32, %c0_i32_0 : i32, i32
  }
  func.func @transform_11(%arg0: i32, %arg1: i32, %arg2: i32) -> (i32, i32) {
    %c0_i32 = arith.constant 0 : i32
    %c0_i32_0 = arith.constant 0 : i32
    %c0_i32_1 = arith.constant 0 : i32
    return %c0_i32, %c0_i32_0 : i32, i32
  }
  func.func @transform_12(%arg0: i32, %arg1: i32, %arg2: i32) -> (i32, i32) {
    %c0_i32 = arith.constant 0 : i32
    %c0_i32_0 = arith.constant 0 : i32
    %c0_i32_1 = arith.constant 0 : i32
    return %c0_i32, %c0_i32_0 : i32, i32
  }
  func.func @transform_13(%arg0: i32, %arg1: i32, %arg2: i32) -> (i32, i32) {
    %c0_i32 = arith.constant 0 : i32
    %c0_i32_0 = arith.constant 0 : i32
    %c0_i32_1 = arith.constant 0 : i32
    return %c0_i32, %c0_i32_0 : i32, i32
  }
  func.func @transform_14(%arg0: i32, %arg1: i32, %arg2: i32) -> (i32, i32) {
    %c0_i32 = arith.constant 0 : i32
    %c0_i32_0 = arith.constant 0 : i32
    %c0_i32_1 = arith.constant 0 : i32
    return %c0_i32, %c0_i32_0 : i32, i32
  }
  func.func @transform_15(%arg0: i32, %arg1: i32, %arg2: i32) -> (i32, i32) {
    %c0_i32 = arith.constant 0 : i32
    %c0_i32_0 = arith.constant 0 : i32
    %c0_i32_1 = arith.constant 0 : i32
    return %c0_i32, %c0_i32_0 : i32, i32
  }
  func.func @transform_16(%arg0: i32, %arg1: i32, %arg2: i32) -> (i32, i32) {
    %c0_i32 = arith.constant 0 : i32
    %c0_i32_0 = arith.constant 0 : i32
    %c0_i32_1 = arith.constant 0 : i32
    return %c0_i32, %c0_i32_0 : i32, i32
  }
  func.func @transform_17(%arg0: i32, %arg1: i32, %arg2: i32) -> (i32, i32) {
    %c0_i32 = arith.constant 0 : i32
    %c0_i32_0 = arith.constant 0 : i32
    %c0_i32_1 = arith.constant 0 : i32
    return %c0_i32, %c0_i32_0 : i32, i32
  }
  func.func @transform_18(%arg0: i32, %arg1: i32, %arg2: i32) -> (i32, i32) {
    %c0_i32 = arith.constant 0 : i32
    %c0_i32_0 = arith.constant 0 : i32
    %c0_i32_1 = arith.constant 0 : i32
    return %c0_i32, %c0_i32_0 : i32, i32
  }
  func.func @transform_19(%arg0: i32, %arg1: i32, %arg2: i32) -> (i32, i32) {
    %c0_i32 = arith.constant 0 : i32
    %c0_i32_0 = arith.constant 0 : i32
    %c0_i32_1 = arith.constant 0 : i32
    return %c0_i32, %c0_i32_0 : i32, i32
  }
  func.func @transform_20(%arg0: i32, %arg1: i32, %arg2: i32) -> (i32, i32) {
    %c0_i32 = arith.constant 0 : i32
    %c0_i32_0 = arith.constant 0 : i32
    %c0_i32_1 = arith.constant 0 : i32
    return %c0_i32, %c0_i32_0 : i32, i32
  }
  func.func @transform_21(%arg0: i32, %arg1: i32, %arg2: i32) -> (i32, i32) {
    %c0_i32 = arith.constant 0 : i32
    %c0_i32_0 = arith.constant 0 : i32
    %c0_i32_1 = arith.constant 0 : i32
    return %c0_i32, %c0_i32_0 : i32, i32
  }
  func.func @transform_22(%arg0: i32, %arg1: i32, %arg2: i32) -> (i32, i32) {
    %c0_i32 = arith.constant 0 : i32
    %c0_i32_0 = arith.constant 0 : i32
    %c0_i32_1 = arith.constant 0 : i32
    return %c0_i32, %c0_i32_0 : i32, i32
  }
  func.func @transform_23(%arg0: i32, %arg1: i32, %arg2: i32) -> (i32, i32) {
    %c0_i32 = arith.constant 0 : i32
    %c0_i32_0 = arith.constant 0 : i32
    %c0_i32_1 = arith.constant 0 : i32
    return %c0_i32, %c0_i32_0 : i32, i32
  }
  func.func @transform_24(%arg0: i32, %arg1: i32, %arg2: i32) -> (i32, i32) {
    %c0_i32 = arith.constant 0 : i32
    %c0_i32_0 = arith.constant 0 : i32
    %c0_i32_1 = arith.constant 0 : i32
    return %c0_i32, %c0_i32_0 : i32, i32
  }
  func.func @transform_25(%arg0: i32, %arg1: i32, %arg2: i32) -> (i32, i32) {
    %c0_i32 = arith.constant 0 : i32
    %c0_i32_0 = arith.constant 0 : i32
    %c0_i32_1 = arith.constant 0 : i32
    return %c0_i32, %c0_i32_0 : i32, i32
  }
  func.func @transform_26(%arg0: i32, %arg1: i32, %arg2: i32) -> (i32, i32, i32) {
    %c0_i32 = arith.constant 0 : i32
    %c0_i32_0 = arith.constant 0 : i32
    return %arg1, %arg0, %c0_i32 : i32, i32, i32
  }
}

</mosaic_0001>

<llo_original>
// kernel: tpu_custom_call.1
$region0: #{tpu_custom_call.1}
  #allocation0 [shape = 'u32[]', space=smem, size = 0x4, offset = 0x4, fixed_abs, tag = 'smem constant byte address 0x4 - core index']
  #allocation1 [shape = 'u32[144,128]{1,0:T(1,128)}', space=vmem, size = 0x12000, scoped, tag = 'internal scratch']
  #allocation2 [shape = 'f32[32,1]{1,0:T(8,128)}', space=vmem, size = 0x4000, scoped, tag = 'scratch operand']
  #allocation3 [shape = 'f32[32,3]{1,0:T(8,128)}', space=vmem, size = 0x4000, scoped, tag = 'scratch operand']
  #allocation4 [shape = 'f32[32,8]{1,0:T(8,128)}', space=vmem, size = 0x4000, scoped, tag = 'scratch operand']
  #allocation5 [shape = 'f32[32,16]{1,0:T(8,128)}', space=vmem, size = 0x4000, scoped, tag = 'scratch operand']
  #allocation6 [shape = 'f32[1,1]{1,0:T(1,128)S(1)}', space=vmem, size = 0x200, scoped, tag = 'scoped memory for tpu_custom_call.1']
  #allocation7 [shape = 'f32[1,1]{1,0:T(1,128)S(1)}', space=vmem, size = 0x200, scoped, tag = 'scoped memory for tpu_custom_call.1']
  %s0 = inlined_call_operand.vmem [shape: f32[2,4,64,8], index: 0, kind: input, shape index: {}]
  %s1 = inlined_call_operand.vmem [shape: bf16[2,4,3,64,23], index: 1, kind: input, shape index: {}]
  %s2 = inlined_call_operand.vmem [shape: bf16[23,19], index: 2, kind: input, shape index: {}]
  %s3 = inlined_call_operand.vmem [shape: f32[1,19], index: 3, kind: input, shape index: {}]
  %s4 = inlined_call_operand.vmem [shape: bf16[19,32], index: 4, kind: input, shape index: {}]
  %s5 = inlined_call_operand.vmem [shape: bf16[19,32], index: 5, kind: input, shape index: {}]
  %s6 = inlined_call_operand.vmem [shape: bf16[19,32], index: 6, kind: input, shape index: {}]
  %s7 = inlined_call_operand.vmem [shape: f32[1,32], index: 7, kind: input, shape index: {}]
  %s8 = inlined_call_operand.vmem [shape: bf16[32,1], index: 8, kind: input, shape index: {}]
  %s9 = inlined_call_operand.<no memory space> [shape: f32[1,1], index: 9, kind: input, shape index: {}]
  %s10 = inlined_call_operand.vmem [shape: bf16[32,16], index: 10, kind: input, shape index: {}]
  %s11 = inlined_call_operand.vmem [shape: f32[1,16], index: 11, kind: input, shape index: {}]
  %s12 = inlined_call_operand.vmem [shape: bf16[8,25], index: 12, kind: input, shape index: {}]
  %s13 = inlined_call_operand.vmem [shape: bf16[16,25], index: 13, kind: input, shape index: {}]
  %s14 = inlined_call_operand.vmem [shape: f32[1,25], index: 14, kind: input, shape index: {}]
  %s15 = inlined_call_operand.vmem [shape: bf16[23,24], index: 15, kind: input, shape index: {}]
  %s16 = inlined_call_operand.vmem [shape: bf16[24,1], index: 16, kind: input, shape index: {}]
  %s17 = inlined_call_operand.<no memory space> [shape: f32[1,1], index: 17, kind: input, shape index: {}]
  %s18 = inlined_call_operand.vmem [shape: bf16[8,24], index: 18, kind: input, shape index: {}]
  %s19 = inlined_call_operand.vmem [shape: bf16[16,24], index: 19, kind: input, shape index: {}]
  %s20 = inlined_call_operand.vmem [shape: f32[1,24], index: 20, kind: input, shape index: {}]
  %s21 = inlined_call_operand.vmem [shape: bf16[24,72], index: 21, kind: input, shape index: {}]
  %s22 = inlined_call_operand.vmem [shape: bf16[3,72], index: 22, kind: input, shape index: {}]
  %s23 = inlined_call_operand.vmem [shape: f32[1,72], index: 23, kind: input, shape index: {}]
  %s24 = inlined_call_operand.vmem [shape: bf16[72,7], index: 24, kind: input, shape index: {}]
  %s25 = inlined_call_operand.vmem [shape: f32[1,7], index: 25, kind: input, shape index: {}]
  %s26 = inlined_call_operand.vmem [shape: f32[2,64,10], index: 26, kind: output, shape index: {}]
  %s27 = sld [smem:[#allocation0]]
  $region186: #{tpu_custom_call.1} parent=0
    _
  %s29 = ssub.s32 1, %s27
  %s30 = scalar_select 0, %s29, %s27
  %v31 = vstv %s9
  %32 = vst [vmem:[#allocation6] sm:$0x1] %v31
  %v33 = vstv %s17
  %34 = vst [vmem:[#allocation7] sm:$0x1] %v33
  $region1: #{tpu_custom_call.1} parent=0
    #allocation8 [shape = 'u8[49152]{0}', space=vmem, size = 0xc000, scoped, tag = 'input window, operand 1']
    loop: start=0, step=1, limit=18
    $region2: #{tpu_custom_call.1} parent=1 // loop_pre_header
      _
    $region3: #{tpu_custom_call.1} parent=1 // loop_header
      %s36 = sphi 0, %s40
      %p37 = scmp.ge.s32.totalorder %s36, 18
      %s43 = sphi 0, %s62
      %s44 = sphi 0, %s58
      %s45 = sphi 0, %s54
      %s46 = sphi 0, %s43
      %s47 = sphi 0, %s44
      %s48 = sphi 0, %s45
      %s49 = sphi 0, %s46
      %s50 = sphi 0, %s47
      %s51 = sphi 0, %s48
      %s69 = sphi 0, %s71
      %s72 = sphi 0, %s69
      %s73 = sphi 0, %s72
      %s89 = sphi 0, %s73
      %s99 = sphi 0, %s101
      %s102 = sphi 0, %s99
      %s103 = sphi 0, %s102
      %s119 = sphi 0, %s103
      %s123 = sphi 0, %s123
      %s125 = sphi 0, %s123
      %s126 = sphi 0, %s125
      %s140 = sphi 0, %s126
      %s144 = sphi 0, %s144
      %s146 = sphi 0, %s144
      %s147 = sphi 0, %s146
      %s161 = sphi 0, %s147
      %s165 = sphi 0, %s165
      %s167 = sphi 0, %s165
      %s168 = sphi 0, %s167
      %s182 = sphi 0, %s168
      %s186 = sphi 0, %s186
      %s188 = sphi 0, %s186
      %s189 = sphi 0, %s188
      %s203 = sphi 0, %s189
      %s207 = sphi 0, %s207
      %s209 = sphi 0, %s207
      %s210 = sphi 0, %s209
      %s224 = sphi 0, %s210
      %s228 = sphi 0, %s228
      %s230 = sphi 0, %s228
      %s231 = sphi 0, %s230
      %s245 = sphi 0, %s231
      %s249 = sphi 0, %s249
      %s251 = sphi 0, %s249
      %s252 = sphi 0, %s251
      %s266 = sphi 0, %s252
      %s270 = sphi 0, %s270
      %s272 = sphi 0, %s270
      %s273 = sphi 0, %s272
      %s287 = sphi 0, %s273
      %s291 = sphi 0, %s291
      %s293 = sphi 0, %s291
      %s294 = sphi 0, %s293
      %s308 = sphi 0, %s294
      %s312 = sphi 0, %s312
      %s314 = sphi 0, %s312
      %s315 = sphi 0, %s314
      %s329 = sphi 0, %s315
      %s333 = sphi 0, %s333
      %s335 = sphi 0, %s333
      %s336 = sphi 0, %s335
      %s350 = sphi 0, %s336
      %s354 = sphi 0, %s354
      %s356 = sphi 0, %s354
      %s357 = sphi 0, %s356
      %s371 = sphi 0, %s357
      %s375 = sphi 0, %s375
      %s377 = sphi 0, %s375
      %s378 = sphi 0, %s377
      %s392 = sphi 0, %s378
      %s396 = sphi 0, %s396
      %s398 = sphi 0, %s396
      %s399 = sphi 0, %s398
      %s413 = sphi 0, %s399
      %s417 = sphi 0, %s417
      %s419 = sphi 0, %s417
      %s420 = sphi 0, %s419
      %s434 = sphi 0, %s420
      %s438 = sphi 0, %s438
      %s440 = sphi 0, %s438
      %s441 = sphi 0, %s440
      %s455 = sphi 0, %s441
      %s459 = sphi 0, %s459
      %s461 = sphi 0, %s459
      %s462 = sphi 0, %s461
      %s476 = sphi 0, %s462
      %s480 = sphi 0, %s480
      %s482 = sphi 0, %s480
      %s483 = sphi 0, %s482
      %s497 = sphi 0, %s483
      %s501 = sphi 0, %s501
      %s503 = sphi 0, %s501
      %s504 = sphi 0, %s503
      %s518 = sphi 0, %s504
      %s522 = sphi 0, %s522
      %s524 = sphi 0, %s522
      %s525 = sphi 0, %s524
      %s539 = sphi 0, %s525
      %s543 = sphi 0, %s543
      %s545 = sphi 0, %s543
      %s546 = sphi 0, %s545
      %s560 = sphi 0, %s546
      %s564 = sphi 0, %s564
      %s566 = sphi 0, %s564
      %s567 = sphi 0, %s566
      %s581 = sphi 0, %s567
      %s585 = sphi 0, %s585
      %s587 = sphi 0, %s585
      %s588 = sphi 0, %s587
      %s602 = sphi 0, %s588
      %s606 = sphi 0, %s606
      %s608 = sphi 0, %s606
      %s609 = sphi 0, %s608
      %s623 = sphi 0, %s609
      %s631 = sphi 0, %s633
      %s634 = sphi 0, %s631
      %s635 = sphi 0, %s634
      %s651 = sphi 0, %s635
    $region4: #{tpu_custom_call.1} parent=1 // loop_header_branch
      %39 = sbr.rel (%p37) target = $region8
    $region5: #{tpu_custom_call.1} parent=1 // loop_body
      %s41 = ssub.s32 %s36, 1
      %s42 = ssub.s32 %s36, 2
      %s52 = sadd.s32 1, %s45
      %p53 = scmp.ge.s32.totalorder %s52, 4
      %s54 = scalar_select %p53, 0, %s52
      %s55 = sadd.s32 1, %s44
      %s56 = scalar_select %p53, %s55, %s44
      %p57 = scmp.ge.s32.totalorder %s56, 2
      %s58 = scalar_select %p57, 0, %s56
      %s59 = sadd.s32 1, %s43
      %s60 = scalar_select %p57, %s59, %s43
      %p61 = scmp.ge.s32.totalorder %s60, 2
      %s62 = scalar_select %p61, 0, %s60
      %s63 = ssub.s32 %s44, %s58
      %s64 = ssub.s32 %s45, %s54
      %s65 = sor.u32 %s63, %s64
      %s66 = ssub.s32 %s43, %s62
      %s67 = sor.u32 %s65, %s66
      %p68 = scmp.eq.s32.totalorder %s67, 0
      %s70 = sadd.s32 %s69, 1
      %s71 = scalar_select %p68, %s69, %s70
      %p74 = pneg %p68
      %p75 = scmp.eq.s32.totalorder %s36, 15
      %p76 = por %p74, %p75
      %p77 = scmp.ne.s32.totalorder %s69, %s72
      %p78 = scmp.eq.s32.totalorder %s36, 0
      %p79 = por %p77, %p78
      %p80 = scmp.ne.s32.totalorder %s69, %s72
      %p81 = scmp.eq.s32.totalorder %s41, 15
      %p82 = por %p80, %p81
      %p83 = scmp.ne.s32.totalorder %s72, %s73
      %p84 = scmp.eq.s32.totalorder %s41, 0
      %p85 = por %p83, %p84
      %p86 = scmp.ne.s32.totalorder %s72, %s73
      %p87 = scmp.eq.s32.totalorder %s42, 15
      %p88 = por %p86, %p87
      %p90 = scmp.ne.s32.totalorder %s73, %s89
      %p91 = scmp.eq.s32.totalorder %s42, 0
      %p92 = por %p90, %p91
      %s93 = ssub.s32 %s44, %s58
      %s94 = ssub.s32 %s45, %s54
      %s95 = sor.u32 %s93, %s94
      %s96 = ssub.s32 %s43, %s62
      %s97 = sor.u32 %s95, %s96
      %p98 = scmp.eq.s32.totalorder %s97, 0
      %s100 = sadd.s32 %s99, 1
      %s101 = scalar_select %p98, %s99, %s100
      %p104 = pneg %p98
      %p105 = scmp.eq.s32.totalorder %s36, 15
      %p106 = por %p104, %p105
      %p107 = scmp.ne.s32.totalorder %s99, %s102
      %p108 = scmp.eq.s32.totalorder %s36, 0
      %p109 = por %p107, %p108
      %p110 = scmp.ne.s32.totalorder %s99, %s102
      %p111 = scmp.eq.s32.totalorder %s41, 15
      %p112 = por %p110, %p111
      %p113 = scmp.ne.s32.totalorder %s102, %s103
      %p114 = scmp.eq.s32.totalorder %s41, 0
      %p115 = por %p113, %p114
      %p116 = scmp.ne.s32.totalorder %s102, %s103
      %p117 = scmp.eq.s32.totalorder %s42, 15
      %p118 = por %p116, %p117
      %p120 = scmp.ne.s32.totalorder %s103, %s119
      %p121 = scmp.eq.s32.totalorder %s42, 0
      %p122 = por %p120, %p121
      %s124 = sadd.s32 %s123, 1
      %p127 = scmp.eq.s32.totalorder %s36, 15
      %p128 = scmp.ne.s32.totalorder %s123, %s125
      %p129 = scmp.eq.s32.totalorder %s36, 0
      %p130 = por %p128, %p129
      %p131 = scmp.ne.s32.totalorder %s123, %s125
      %p132 = scmp.eq.s32.totalorder %s41, 15
      %p133 = por %p131, %p132
      %p134 = scmp.ne.s32.totalorder %s125, %s126
      %p135 = scmp.eq.s32.totalorder %s41, 0
      %p136 = por %p134, %p135
      %p137 = scmp.ne.s32.totalorder %s125, %s126
      %p138 = scmp.eq.s32.totalorder %s42, 15
      %p139 = por %p137, %p138
      %p141 = scmp.ne.s32.totalorder %s126, %s140
      %p142 = scmp.eq.s32.totalorder %s42, 0
      %p143 = por %p141, %p142
      %s145 = sadd.s32 %s144, 1
      %p148 = scmp.eq.s32.totalorder %s36, 15
      %p149 = scmp.ne.s32.totalorder %s144, %s146
      %p150 = scmp.eq.s32.totalorder %s36, 0
      %p151 = por %p149, %p150
      %p152 = scmp.ne.s32.totalorder %s144, %s146
      %p153 = scmp.eq.s32.totalorder %s41, 15
      %p154 = por %p152, %p153
      %p155 = scmp.ne.s32.totalorder %s146, %s147
      %p156 = scmp.eq.s32.totalorder %s41, 0
      %p157 = por %p155, %p156
      %p158 = scmp.ne.s32.totalorder %s146, %s147
      %p159 = scmp.eq.s32.totalorder %s42, 15
      %p160 = por %p158, %p159
      %p162 = scmp.ne.s32.totalorder %s147, %s161
      %p163 = scmp.eq.s32.totalorder %s42, 0
      %p164 = por %p162, %p163
      %s166 = sadd.s32 %s165, 1
      %p169 = scmp.eq.s32.totalorder %s36, 15
      %p170 = scmp.ne.s32.totalorder %s165, %s167
      %p171 = scmp.eq.s32.totalorder %s36, 0
      %p172 = por %p170, %p171
      %p173 = scmp.ne.s32.totalorder %s165, %s167
      %p174 = scmp.eq.s32.totalorder %s41, 15
      %p175 = por %p173, %p174
      %p176 = scmp.ne.s32.totalorder %s167, %s168
      %p177 = scmp.eq.s32.totalorder %s41, 0
      %p178 = por %p176, %p177
      %p179 = scmp.ne.s32.totalorder %s167, %s168
      %p180 = scmp.eq.s32.totalorder %s42, 15
      %p181 = por %p179, %p180
      %p183 = scmp.ne.s32.totalorder %s168, %s182
      %p184 = scmp.eq.s32.totalorder %s42, 0
      %p185 = por %p183, %p184
      %s187 = sadd.s32 %s186, 1
      %p190 = scmp.eq.s32.totalorder %s36, 15
      %p191 = scmp.ne.s32.totalorder %s186, %s188
      %p192 = scmp.eq.s32.totalorder %s36, 0
      %p193 = por %p191, %p192
      %p194 = scmp.ne.s32.totalorder %s186, %s188
      %p195 = scmp.eq.s32.totalorder %s41, 15
      %p196 = por %p194, %p195
      %p197 = scmp.ne.s32.totalorder %s188, %s189
      %p198 = scmp.eq.s32.totalorder %s41, 0
      %p199 = por %p197, %p198
      %p200 = scmp.ne.s32.totalorder %s188, %s189
      %p201 = scmp.eq.s32.totalorder %s42, 15
      %p202 = por %p200, %p201
      %p204 = scmp.ne.s32.totalorder %s189, %s203
      %p205 = scmp.eq.s32.totalorder %s42, 0
      %p206 = por %p204, %p205
      %s208 = sadd.s32 %s207, 1
      %p211 = scmp.eq.s32.totalorder %s36, 15
      %p212 = scmp.ne.s32.totalorder %s207, %s209
      %p213 = scmp.eq.s32.totalorder %s36, 0
      %p214 = por %p212, %p213
      %p215 = scmp.ne.s32.totalorder %s207, %s209
      %p216 = scmp.eq.s32.totalorder %s41, 15
      %p217 = por %p215, %p216
      %p218 = scmp.ne.s32.totalorder %s209, %s210
      %p219 = scmp.eq.s32.totalorder %s41, 0
      %p220 = por %p218, %p219
      %p221 = scmp.ne.s32.totalorder %s209, %s210
      %p222 = scmp.eq.s32.totalorder %s42, 15
      %p223 = por %p221, %p222
      %p225 = scmp.ne.s32.totalorder %s210, %s224
      %p226 = scmp.eq.s32.totalorder %s42, 0
      %p227 = por %p225, %p226
      %s229 = sadd.s32 %s228, 1
      %p232 = scmp.eq.s32.totalorder %s36, 15
      %p233 = scmp.ne.s32.totalorder %s228, %s230
      %p234 = scmp.eq.s32.totalorder %s36, 0
      %p235 = por %p233, %p234
      %p236 = scmp.ne.s32.totalorder %s228, %s230
      %p237 = scmp.eq.s32.totalorder %s41, 15
      %p238 = por %p236, %p237
      %p239 = scmp.ne.s32.totalorder %s230, %s231
      %p240 = scmp.eq.s32.totalorder %s41, 0
      %p241 = por %p239, %p240
      %p242 = scmp.ne.s32.totalorder %s230, %s231
      %p243 = scmp.eq.s32.totalorder %s42, 15
      %p244 = por %p242, %p243
      %p246 = scmp.ne.s32.totalorder %s231, %s245
      %p247 = scmp.eq.s32.totalorder %s42, 0
      %p248 = por %p246, %p247
      %s250 = sadd.s32 %s249, 1
      %p253 = scmp.eq.s32.totalorder %s36, 15
      %p254 = scmp.ne.s32.totalorder %s249, %s251
      %p255 = scmp.eq.s32.totalorder %s36, 0
      %p256 = por %p254, %p255
      %p257 = scmp.ne.s32.totalorder %s249, %s251
      %p258 = scmp.eq.s32.totalorder %s41, 15
      %p259 = por %p257, %p258
      %p260 = scmp.ne.s32.totalorder %s251, %s252
      %p261 = scmp.eq.s32.totalorder %s41, 0
      %p262 = por %p260, %p261
      %p263 = scmp.ne.s32.totalorder %s251, %s252
      %p264 = scmp.eq.s32.totalorder %s42, 15
      %p265 = por %p263, %p264
      %p267 = scmp.ne.s32.totalorder %s252, %s266
      %p268 = scmp.eq.s32.totalorder %s42, 0
      %p269 = por %p267, %p268
      %s271 = sadd.s32 %s270, 1
      %p274 = scmp.eq.s32.totalorder %s36, 15
      %p275 = scmp.ne.s32.totalorder %s270, %s272
      %p276 = scmp.eq.s32.totalorder %s36, 0
      %p277 = por %p275, %p276
      %p278 = scmp.ne.s32.totalorder %s270, %s272
      %p279 = scmp.eq.s32.totalorder %s41, 15
      %p280 = por %p278, %p279
      %p281 = scmp.ne.s32.totalorder %s272, %s273
      %p282 = scmp.eq.s32.totalorder %s41, 0
      %p283 = por %p281, %p282
      %p284 = scmp.ne.s32.totalorder %s272, %s273
      %p285 = scmp.eq.s32.totalorder %s42, 15
      %p286 = por %p284, %p285
      %p288 = scmp.ne.s32.totalorder %s273, %s287
      %p289 = scmp.eq.s32.totalorder %s42, 0
      %p290 = por %p288, %p289
      %s292 = sadd.s32 %s291, 1
      %p295 = scmp.eq.s32.totalorder %s36, 15
      %p296 = scmp.ne.s32.totalorder %s291, %s293
      %p297 = scmp.eq.s32.totalorder %s36, 0
      %p298 = por %p296, %p297
      %p299 = scmp.ne.s32.totalorder %s291, %s293
      %p300 = scmp.eq.s32.totalorder %s41, 15
      %p301 = por %p299, %p300
      %p302 = scmp.ne.s32.totalorder %s293, %s294
      %p303 = scmp.eq.s32.totalorder %s41, 0
      %p304 = por %p302, %p303
      %p305 = scmp.ne.s32.totalorder %s293, %s294
      %p306 = scmp.eq.s32.totalorder %s42, 15
      %p307 = por %p305, %p306
      %p309 = scmp.ne.s32.totalorder %s294, %s308
      %p310 = scmp.eq.s32.totalorder %s42, 0
      %p311 = por %p309, %p310
      %s313 = sadd.s32 %s312, 1
      %p316 = scmp.eq.s32.totalorder %s36, 15
      %p317 = scmp.ne.s32.totalorder %s312, %s314
      %p318 = scmp.eq.s32.totalorder %s36, 0
      %p319 = por %p317, %p318
      %p320 = scmp.ne.s32.totalorder %s312, %s314
      %p321 = scmp.eq.s32.totalorder %s41, 15
      %p322 = por %p320, %p321
      %p323 = scmp.ne.s32.totalorder %s314, %s315
      %p324 = scmp.eq.s32.totalorder %s41, 0
      %p325 = por %p323, %p324
      %p326 = scmp.ne.s32.totalorder %s314, %s315
      %p327 = scmp.eq.s32.totalorder %s42, 15
      %p328 = por %p326, %p327
      %p330 = scmp.ne.s32.totalorder %s315, %s329
      %p331 = scmp.eq.s32.totalorder %s42, 0
      %p332 = por %p330, %p331
      %s334 = sadd.s32 %s333, 1
      %p337 = scmp.eq.s32.totalorder %s36, 15
      %p338 = scmp.ne.s32.totalorder %s333, %s335
      %p339 = scmp.eq.s32.totalorder %s36, 0
      %p340 = por %p338, %p339
      %p341 = scmp.ne.s32.totalorder %s333, %s335
      %p342 = scmp.eq.s32.totalorder %s41, 15
      %p343 = por %p341, %p342
      %p344 = scmp.ne.s32.totalorder %s335, %s336
      %p345 = scmp.eq.s32.totalorder %s41, 0
      %p346 = por %p344, %p345
      %p347 = scmp.ne.s32.totalorder %s335, %s336
      %p348 = scmp.eq.s32.totalorder %s42, 15
      %p349 = por %p347, %p348
      %p351 = scmp.ne.s32.totalorder %s336, %s350
      %p352 = scmp.eq.s32.totalorder %s42, 0
      %p353 = por %p351, %p352
      %s355 = sadd.s32 %s354, 1
      %p358 = scmp.eq.s32.totalorder %s36, 15
      %p359 = scmp.ne.s32.totalorder %s354, %s356
      %p360 = scmp.eq.s32.totalorder %s36, 0
      %p361 = por %p359, %p360
      %p362 = scmp.ne.s32.totalorder %s354, %s356
      %p363 = scmp.eq.s32.totalorder %s41, 15
      %p364 = por %p362, %p363
      %p365 = scmp.ne.s32.totalorder %s356, %s357
      %p366 = scmp.eq.s32.totalorder %s41, 0
      %p367 = por %p365, %p366
      %p368 = scmp.ne.s32.totalorder %s356, %s357
      %p369 = scmp.eq.s32.totalorder %s42, 15
      %p370 = por %p368, %p369
      %p372 = scmp.ne.s32.totalorder %s357, %s371
      %p373 = scmp.eq.s32.totalorder %s42, 0
      %p374 = por %p372, %p373
      %s376 = sadd.s32 %s375, 1
      %p379 = scmp.eq.s32.totalorder %s36, 15
      %p380 = scmp.ne.s32.totalorder %s375, %s377
      %p381 = scmp.eq.s32.totalorder %s36, 0
      %p382 = por %p380, %p381
      %p383 = scmp.ne.s32.totalorder %s375, %s377
      %p384 = scmp.eq.s32.totalorder %s41, 15
      %p385 = por %p383, %p384
      %p386 = scmp.ne.s32.totalorder %s377, %s378
      %p387 = scmp.eq.s32.totalorder %s41, 0
      %p388 = por %p386, %p387
      %p389 = scmp.ne.s32.totalorder %s377, %s378
      %p390 = scmp.eq.s32.totalorder %s42, 15
      %p391 = por %p389, %p390
      %p393 = scmp.ne.s32.totalorder %s378, %s392
      %p394 = scmp.eq.s32.totalorder %s42, 0
      %p395 = por %p393, %p394
      %s397 = sadd.s32 %s396, 1
      %p400 = scmp.eq.s32.totalorder %s36, 15
      %p401 = scmp.ne.s32.totalorder %s396, %s398
      %p402 = scmp.eq.s32.totalorder %s36, 0
      %p403 = por %p401, %p402
      %p404 = scmp.ne.s32.totalorder %s396, %s398
      %p405 = scmp.eq.s32.totalorder %s41, 15
      %p406 = por %p404, %p405
      %p407 = scmp.ne.s32.totalorder %s398, %s399
      %p408 = scmp.eq.s32.totalorder %s41, 0
      %p409 = por %p407, %p408
      %p410 = scmp.ne.s32.totalorder %s398, %s399
      %p411 = scmp.eq.s32.totalorder %s42, 15
      %p412 = por %p410, %p411
      %p414 = scmp.ne.s32.totalorder %s399, %s413
      %p415 = scmp.eq.s32.totalorder %s42, 0
      %p416 = por %p414, %p415
      %s418 = sadd.s32 %s417, 1
      %p421 = scmp.eq.s32.totalorder %s36, 15
      %p422 = scmp.ne.s32.totalorder %s417, %s419
      %p423 = scmp.eq.s32.totalorder %s36, 0
      %p424 = por %p422, %p423
      %p425 = scmp.ne.s32.totalorder %s417, %s419
      %p426 = scmp.eq.s32.totalorder %s41, 15
      %p427 = por %p425, %p426
      %p428 = scmp.ne.s32.totalorder %s419, %s420
      %p429 = scmp.eq.s32.totalorder %s41, 0
      %p430 = por %p428, %p429
      %p431 = scmp.ne.s32.totalorder %s419, %s420
      %p432 = scmp.eq.s32.totalorder %s42, 15
      %p433 = por %p431, %p432
      %p435 = scmp.ne.s32.totalorder %s420, %s434
      %p436 = scmp.eq.s32.totalorder %s42, 0
      %p437 = por %p435, %p436
      %s439 = sadd.s32 %s438, 1
      %p442 = scmp.eq.s32.totalorder %s36, 15
      %p443 = scmp.ne.s32.totalorder %s438, %s440
      %p444 = scmp.eq.s32.totalorder %s36, 0
      %p445 = por %p443, %p444
      %p446 = scmp.ne.s32.totalorder %s438, %s440
      %p447 = scmp.eq.s32.totalorder %s41, 15
      %p448 = por %p446, %p447
      %p449 = scmp.ne.s32.totalorder %s440, %s441
      %p450 = scmp.eq.s32.totalorder %s41, 0
      %p451 = por %p449, %p450
      %p452 = scmp.ne.s32.totalorder %s440, %s441
      %p453 = scmp.eq.s32.totalorder %s42, 15
      %p454 = por %p452, %p453
      %p456 = scmp.ne.s32.totalorder %s441, %s455
      %p457 = scmp.eq.s32.totalorder %s42, 0
      %p458 = por %p456, %p457
      %s460 = sadd.s32 %s459, 1
      %p463 = scmp.eq.s32.totalorder %s36, 15
      %p464 = scmp.ne.s32.totalorder %s459, %s461
      %p465 = scmp.eq.s32.totalorder %s36, 0
      %p466 = por %p464, %p465
      %p467 = scmp.ne.s32.totalorder %s459, %s461
      %p468 = scmp.eq.s32.totalorder %s41, 15
      %p469 = por %p467, %p468
      %p470 = scmp.ne.s32.totalorder %s461, %s462
      %p471 = scmp.eq.s32.totalorder %s41, 0
      %p472 = por %p470, %p471
      %p473 = scmp.ne.s32.totalorder %s461, %s462
      %p474 = scmp.eq.s32.totalorder %s42, 15
      %p475 = por %p473, %p474
      %p477 = scmp.ne.s32.totalorder %s462, %s476
      %p478 = scmp.eq.s32.totalorder %s42, 0
      %p479 = por %p477, %p478
      %s481 = sadd.s32 %s480, 1
      %p484 = scmp.eq.s32.totalorder %s36, 15
      %p485 = scmp.ne.s32.totalorder %s480, %s482
      %p486 = scmp.eq.s32.totalorder %s36, 0
      %p487 = por %p485, %p486
      %p488 = scmp.ne.s32.totalorder %s480, %s482
      %p489 = scmp.eq.s32.totalorder %s41, 15
      %p490 = por %p488, %p489
      %p491 = scmp.ne.s32.totalorder %s482, %s483
      %p492 = scmp.eq.s32.totalorder %s41, 0
      %p493 = por %p491, %p492
      %p494 = scmp.ne.s32.totalorder %s482, %s483
      %p495 = scmp.eq.s32.totalorder %s42, 15
      %p496 = por %p494, %p495
      %p498 = scmp.ne.s32.totalorder %s483, %s497
      %p499 = scmp.eq.s32.totalorder %s42, 0
      %p500 = por %p498, %p499
      %s502 = sadd.s32 %s501, 1
      %p505 = scmp.eq.s32.totalorder %s36, 15
      %p506 = scmp.ne.s32.totalorder %s501, %s503
      %p507 = scmp.eq.s32.totalorder %s36, 0
      %p508 = por %p506, %p507
      %p509 = scmp.ne.s32.totalorder %s501, %s503
      %p510 = scmp.eq.s32.totalorder %s41, 15
      %p511 = por %p509, %p510
      %p512 = scmp.ne.s32.totalorder %s503, %s504
      %p513 = scmp.eq.s32.totalorder %s41, 0
      %p514 = por %p512, %p513
      %p515 = scmp.ne.s32.totalorder %s503, %s504
      %p516 = scmp.eq.s32.totalorder %s42, 15
      %p517 = por %p515, %p516
      %p519 = scmp.ne.s32.totalorder %s504, %s518
      %p520 = scmp.eq.s32.totalorder %s42, 0
      %p521 = por %p519, %p520
      %s523 = sadd.s32 %s522, 1
      %p526 = scmp.eq.s32.totalorder %s36, 15
      %p527 = scmp.ne.s32.totalorder %s522, %s524
      %p528 = scmp.eq.s32.totalorder %s36, 0
      %p529 = por %p527, %p528
      %p530 = scmp.ne.s32.totalorder %s522, %s524
      %p531 = scmp.eq.s32.totalorder %s41, 15
      %p532 = por %p530, %p531
      %p533 = scmp.ne.s32.totalorder %s524, %s525
      %p534 = scmp.eq.s32.totalorder %s41, 0
      %p535 = por %p533, %p534
      %p536 = scmp.ne.s32.totalorder %s524, %s525
      %p537 = scmp.eq.s32.totalorder %s42, 15
      %p538 = por %p536, %p537
      %p540 = scmp.ne.s32.totalorder %s525, %s539
      %p541 = scmp.eq.s32.totalorder %s42, 0
      %p542 = por %p540, %p541
      %s544 = sadd.s32 %s543, 1
      %p547 = scmp.eq.s32.totalorder %s36, 15
      %p548 = scmp.ne.s32.totalorder %s543, %s545
      %p549 = scmp.eq.s32.totalorder %s36, 0
      %p550 = por %p548, %p549
      %p551 = scmp.ne.s32.totalorder %s543, %s545
      %p552 = scmp.eq.s32.totalorder %s41, 15
      %p553 = por %p551, %p552
      %p554 = scmp.ne.s32.totalorder %s545, %s546
      %p555 = scmp.eq.s32.totalorder %s41, 0
      %p556 = por %p554, %p555
      %p557 = scmp.ne.s32.totalorder %s545, %s546
      %p558 = scmp.eq.s32.totalorder %s42, 15
      %p559 = por %p557, %p558
      %p561 = scmp.ne.s32.totalorder %s546, %s560
      %p562 = scmp.eq.s32.totalorder %s42, 0
      %p563 = por %p561, %p562
      %s565 = sadd.s32 %s564, 1
      %p568 = scmp.eq.s32.totalorder %s36, 15
      %p569 = scmp.ne.s32.totalorder %s564, %s566
      %p570 = scmp.eq.s32.totalorder %s36, 0
      %p571 = por %p569, %p570
      %p572 = scmp.ne.s32.totalorder %s564, %s566
      %p573 = scmp.eq.s32.totalorder %s41, 15
      %p574 = por %p572, %p573
      %p575 = scmp.ne.s32.totalorder %s566, %s567
      %p576 = scmp.eq.s32.totalorder %s41, 0
      %p577 = por %p575, %p576
      %p578 = scmp.ne.s32.totalorder %s566, %s567
      %p579 = scmp.eq.s32.totalorder %s42, 15
      %p580 = por %p578, %p579
      %p582 = scmp.ne.s32.totalorder %s567, %s581
      %p583 = scmp.eq.s32.totalorder %s42, 0
      %p584 = por %p582, %p583
      %s586 = sadd.s32 %s585, 1
      %p589 = scmp.eq.s32.totalorder %s36, 15
      %p590 = scmp.ne.s32.totalorder %s585, %s587
      %p591 = scmp.eq.s32.totalorder %s36, 0
      %p592 = por %p590, %p591
      %p593 = scmp.ne.s32.totalorder %s585, %s587
      %p594 = scmp.eq.s32.totalorder %s41, 15
      %p595 = por %p593, %p594
      %p596 = scmp.ne.s32.totalorder %s587, %s588
      %p597 = scmp.eq.s32.totalorder %s41, 0
      %p598 = por %p596, %p597
      %p599 = scmp.ne.s32.totalorder %s587, %s588
      %p600 = scmp.eq.s32.totalorder %s42, 15
      %p601 = por %p599, %p600
      %p603 = scmp.ne.s32.totalorder %s588, %s602
      %p604 = scmp.eq.s32.totalorder %s42, 0
      %p605 = por %p603, %p604
      %s607 = sadd.s32 %s606, 1
      %p610 = scmp.eq.s32.totalorder %s36, 15
      %p611 = scmp.ne.s32.totalorder %s606, %s608
      %p612 = scmp.eq.s32.totalorder %s36, 0
      %p613 = por %p611, %p612
      %p614 = scmp.ne.s32.totalorder %s606, %s608
      %p615 = scmp.eq.s32.totalorder %s41, 15
      %p616 = por %p614, %p615
      %p617 = scmp.ne.s32.totalorder %s608, %s609
      %p618 = scmp.eq.s32.totalorder %s41, 0
      %p619 = por %p617, %p618
      %p620 = scmp.ne.s32.totalorder %s608, %s609
      %p621 = scmp.eq.s32.totalorder %s42, 15
      %p622 = por %p620, %p621
      %p624 = scmp.ne.s32.totalorder %s609, %s623
      %p625 = scmp.eq.s32.totalorder %s42, 0
      %p626 = por %p624, %p625
      %s627 = ssub.s32 %s44, %s58
      %s628 = ssub.s32 %s43, %s62
      %s629 = sor.u32 %s627, %s628
      %p630 = scmp.eq.s32.totalorder %s629, 0
      %s632 = sadd.s32 %s631, 1
      %s633 = scalar_select %p630, %s631, %s632
      %p636 = pneg %p630
      %p637 = scmp.eq.s32.totalorder %s36, 15
      %p638 = por %p636, %p637
      %p639 = scmp.ne.s32.totalorder %s631, %s634
      %p640 = scmp.eq.s32.totalorder %s36, 0
      %p641 = por %p639, %p640
      %p642 = scmp.ne.s32.totalorder %s631, %s634
      %p643 = scmp.eq.s32.totalorder %s41, 15
      %p644 = por %p642, %p643
      %p645 = scmp.ne.s32.totalorder %s634, %s635
      %p646 = scmp.eq.s32.totalorder %s41, 0
      %p647 = por %p645, %p646
      %p648 = scmp.ne.s32.totalorder %s634, %s635
      %p649 = scmp.eq.s32.totalorder %s42, 15
      %p650 = por %p648, %p649
      %p652 = scmp.ne.s32.totalorder %s635, %s651
      %p653 = scmp.eq.s32.totalorder %s42, 0
      %p654 = por %p652, %p653
      %p655 = scmp.le.s32.totalorder 1, %s36
      %p656 = scmp.lt.s32.totalorder %s36, 17
      %p657 = pnand %p655, %p656
      %p658 = pneg %p657
      // Predicated region
      $region9: #{tpu_custom_call.1} parent=5 // pred_check
        _
      $region10: #{tpu_custom_call.1} parent=5 // pred_check_branch
        %660 = sbr.rel (%p657) target = $region12
      $region11: #{tpu_custom_call.1} parent=5 // pred_region
        %s661 = ssub.s32 %s36, 1
        // Predicated region
        $region13: #{tpu_custom_call.1} parent=11 // pred_check
          %p662 = pneg %p136
        $region14: #{tpu_custom_call.1} parent=11 // pred_check_branch
          %664 = sbr.rel (%p662) target = $region16
        $region15: #{tpu_custom_call.1} parent=11 // pred_region
          _
        $region16: #{tpu_custom_call.1} parent=11 // pred_fallthru
          _
        // Predicated region
        $region17: #{tpu_custom_call.1} parent=11 // pred_check
          %p665 = pneg %p157
        $region18: #{tpu_custom_call.1} parent=11 // pred_check_branch
          %667 = sbr.rel (%p665) target = $region20
        $region19: #{tpu_custom_call.1} parent=11 // pred_region
          _
        $region20: #{tpu_custom_call.1} parent=11 // pred_fallthru
          _
        // Predicated region
        $region21: #{tpu_custom_call.1} parent=11 // pred_check
          %p668 = pneg %p178
        $region22: #{tpu_custom_call.1} parent=11 // pred_check_branch
          %670 = sbr.rel (%p668) target = $region24
        $region23: #{tpu_custom_call.1} parent=11 // pred_region
          _
        $region24: #{tpu_custom_call.1} parent=11 // pred_fallthru
          _
        // Predicated region
        $region25: #{tpu_custom_call.1} parent=11 // pred_check
          %p671 = pneg %p199
        $region26: #{tpu_custom_call.1} parent=11 // pred_check_branch
          %673 = sbr.rel (%p671) target = $region28
        $region27: #{tpu_custom_call.1} parent=11 // pred_region
          _
        $region28: #{tpu_custom_call.1} parent=11 // pred_fallthru
          _
        // Predicated region
        $region29: #{tpu_custom_call.1} parent=11 // pred_check
          %p674 = pneg %p220
        $region30: #{tpu_custom_call.1} parent=11 // pred_check_branch
          %676 = sbr.rel (%p674) target = $region32
        $region31: #{tpu_custom_call.1} parent=11 // pred_region
          _
        $region32: #{tpu_custom_call.1} parent=11 // pred_fallthru
          _
        // Predicated region
        $region33: #{tpu_custom_call.1} parent=11 // pred_check
          %p677 = pneg %p241
        $region34: #{tpu_custom_call.1} parent=11 // pred_check_branch
          %679 = sbr.rel (%p677) target = $region36
        $region35: #{tpu_custom_call.1} parent=11 // pred_region
          _
        $region36: #{tpu_custom_call.1} parent=11 // pred_fallthru
          _
        // Predicated region
        $region37: #{tpu_custom_call.1} parent=11 // pred_check
          %p680 = pneg %p262
        $region38: #{tpu_custom_call.1} parent=11 // pred_check_branch
          %682 = sbr.rel (%p680) target = $region40
        $region39: #{tpu_custom_call.1} parent=11 // pred_region
          _
        $region40: #{tpu_custom_call.1} parent=11 // pred_fallthru
          _
        // Predicated region
        $region41: #{tpu_custom_call.1} parent=11 // pred_check
          %p683 = pneg %p283
        $region42: #{tpu_custom_call.1} parent=11 // pred_check_branch
          %685 = sbr.rel (%p683) target = $region44
        $region43: #{tpu_custom_call.1} parent=11 // pred_region
          _
        $region44: #{tpu_custom_call.1} parent=11 // pred_fallthru
          _
        // Predicated region
        $region45: #{tpu_custom_call.1} parent=11 // pred_check
          %p686 = pneg %p304
        $region46: #{tpu_custom_call.1} parent=11 // pred_check_branch
          %688 = sbr.rel (%p686) target = $region48
        $region47: #{tpu_custom_call.1} parent=11 // pred_region
          _
        $region48: #{tpu_custom_call.1} parent=11 // pred_fallthru
          _
        // Predicated region
        $region49: #{tpu_custom_call.1} parent=11 // pred_check
          %p689 = pneg %p325
        $region50: #{tpu_custom_call.1} parent=11 // pred_check_branch
          %691 = sbr.rel (%p689) target = $region52
        $region51: #{tpu_custom_call.1} parent=11 // pred_region
          _
        $region52: #{tpu_custom_call.1} parent=11 // pred_fallthru
          _
        // Predicated region
        $region53: #{tpu_custom_call.1} parent=11 // pred_check
          %p692 = pneg %p346
        $region54: #{tpu_custom_call.1} parent=11 // pred_check_branch
          %694 = sbr.rel (%p692) target = $region56
        $region55: #{tpu_custom_call.1} parent=11 // pred_region
          _
        $region56: #{tpu_custom_call.1} parent=11 // pred_fallthru
          _
        // Predicated region
        $region57: #{tpu_custom_call.1} parent=11 // pred_check
          %p695 = pneg %p367
        $region58: #{tpu_custom_call.1} parent=11 // pred_check_branch
          %697 = sbr.rel (%p695) target = $region60
        $region59: #{tpu_custom_call.1} parent=11 // pred_region
          _
        $region60: #{tpu_custom_call.1} parent=11 // pred_fallthru
          _
        // Predicated region
        $region61: #{tpu_custom_call.1} parent=11 // pred_check
          %p698 = pneg %p388
        $region62: #{tpu_custom_call.1} parent=11 // pred_check_branch
          %700 = sbr.rel (%p698) target = $region64
        $region63: #{tpu_custom_call.1} parent=11 // pred_region
          _
        $region64: #{tpu_custom_call.1} parent=11 // pred_fallthru
          _
        // Predicated region
        $region65: #{tpu_custom_call.1} parent=11 // pred_check
          %p701 = pneg %p409
        $region66: #{tpu_custom_call.1} parent=11 // pred_check_branch
          %703 = sbr.rel (%p701) target = $region68
        $region67: #{tpu_custom_call.1} parent=11 // pred_region
          _
        $region68: #{tpu_custom_call.1} parent=11 // pred_fallthru
          _
        // Predicated region
        $region69: #{tpu_custom_call.1} parent=11 // pred_check
          %p704 = pneg %p430
        $region70: #{tpu_custom_call.1} parent=11 // pred_check_branch
          %706 = sbr.rel (%p704) target = $region72
        $region71: #{tpu_custom_call.1} parent=11 // pred_region
          _
        $region72: #{tpu_custom_call.1} parent=11 // pred_fallthru
          _
        // Predicated region
        $region73: #{tpu_custom_call.1} parent=11 // pred_check
          %p707 = pneg %p451
        $region74: #{tpu_custom_call.1} parent=11 // pred_check_branch
          %709 = sbr.rel (%p707) target = $region76
        $region75: #{tpu_custom_call.1} parent=11 // pred_region
          _
        $region76: #{tpu_custom_call.1} parent=11 // pred_fallthru
          _
        // Predicated region
        $region77: #{tpu_custom_call.1} parent=11 // pred_check
          %p710 = pneg %p472
        $region78: #{tpu_custom_call.1} parent=11 // pred_check_branch
          %712 = sbr.rel (%p710) target = $region80
        $region79: #{tpu_custom_call.1} parent=11 // pred_region
          _
        $region80: #{tpu_custom_call.1} parent=11 // pred_fallthru
          _
        // Predicated region
        $region81: #{tpu_custom_call.1} parent=11 // pred_check
          %p713 = pneg %p493
        $region82: #{tpu_custom_call.1} parent=11 // pred_check_branch
          %715 = sbr.rel (%p713) target = $region84
        $region83: #{tpu_custom_call.1} parent=11 // pred_region
          _
        $region84: #{tpu_custom_call.1} parent=11 // pred_fallthru
          _
        // Predicated region
        $region85: #{tpu_custom_call.1} parent=11 // pred_check
          %p716 = pneg %p514
        $region86: #{tpu_custom_call.1} parent=11 // pred_check_branch
          %718 = sbr.rel (%p716) target = $region88
        $region87: #{tpu_custom_call.1} parent=11 // pred_region
          _
        $region88: #{tpu_custom_call.1} parent=11 // pred_fallthru
          _
        // Predicated region
        $region89: #{tpu_custom_call.1} parent=11 // pred_check
          %p719 = pneg %p535
        $region90: #{tpu_custom_call.1} parent=11 // pred_check_branch
          %721 = sbr.rel (%p719) target = $region92
        $region91: #{tpu_custom_call.1} parent=11 // pred_region
          _
        $region92: #{tpu_custom_call.1} parent=11 // pred_fallthru
          _
        // Predicated region
        $region93: #{tpu_custom_call.1} parent=11 // pred_check
          %p722 = pneg %p556
        $region94: #{tpu_custom_call.1} parent=11 // pred_check_branch
          %724 = sbr.rel (%p722) target = $region96
        $region95: #{tpu_custom_call.1} parent=11 // pred_region
          _
        $region96: #{tpu_custom_call.1} parent=11 // pred_fallthru
          _
        // Predicated region
        $region97: #{tpu_custom_call.1} parent=11 // pred_check
          %p725 = pneg %p577
        $region98: #{tpu_custom_call.1} parent=11 // pred_check_branch
          %727 = sbr.rel (%p725) target = $region100
        $region99: #{tpu_custom_call.1} parent=11 // pred_region
          _
        $region100: #{tpu_custom_call.1} parent=11 // pred_fallthru
          _
        // Predicated region
        $region101: #{tpu_custom_call.1} parent=11 // pred_check
          %p728 = pneg %p598
        $region102: #{tpu_custom_call.1} parent=11 // pred_check_branch
          %730 = sbr.rel (%p728) target = $region104
        $region103: #{tpu_custom_call.1} parent=11 // pred_region
          _
        $region104: #{tpu_custom_call.1} parent=11 // pred_fallthru
          _
        // Predicated region
        $region105: #{tpu_custom_call.1} parent=11 // pred_check
          %p731 = pneg %p619
        $region106: #{tpu_custom_call.1} parent=11 // pred_check_branch
          %733 = sbr.rel (%p731) target = $region108
        $region107: #{tpu_custom_call.1} parent=11 // pred_region
          _
        $region108: #{tpu_custom_call.1} parent=11 // pred_fallthru
          _
      $region12: #{tpu_custom_call.1} parent=5 // pred_fallthru
        _
      %p734 = scmp.lt.s32.totalorder %s36, 16
      // Predicated region
      $region109: #{tpu_custom_call.1} parent=5 // pred_check
        %p735 = pneg %p734
      $region110: #{tpu_custom_call.1} parent=5 // pred_check_branch
        %737 = sbr.rel (%p735) target = $region112
      $region111: #{tpu_custom_call.1} parent=5 // pred_region
        // Predicated region
        $region113: #{tpu_custom_call.1} parent=111 // pred_check
          %p738 = pneg %p79
        $region114: #{tpu_custom_call.1} parent=111 // pred_check_branch
          %740 = sbr.rel (%p738) target = $region116
        $region115: #{tpu_custom_call.1} parent=111 // pred_region
          %s741 = smul.u32 4, %s43
          %p742 = scmp.lt.s32.totalorder %s44, 1
          %s743 = scalar_select %p742, %s44, 1
          %p744 = scmp.lt.s32.totalorder %s45, 3
          %s745 = scalar_select %p744, %s45, 3
          %p746 = scmp.lt.s32.totalorder %s741, 7
          %s747 = scalar_select %p746, %s741, 7
          %s748 = smul.addr %s745, 8
          %s749 = sadd.s32 %s747, %s748
          %s750 = smul.addr %s743, 32
          %s751 = sadd.s32 %s749, %s750
          %s752 = smul.addr %s751, 8
          %s753 = scalar_lea.vmem %s0, %s752
          %s754 = smul.u32 4, %s43
        $region116: #{tpu_custom_call.1} parent=111 // pred_fallthru
          _
        // Predicated region
        $region117: #{tpu_custom_call.1} parent=111 // pred_check
          %p755 = pneg %p109
        $region118: #{tpu_custom_call.1} parent=111 // pred_check_branch
          %757 = sbr.rel (%p755) target = $region120
        $region119: #{tpu_custom_call.1} parent=111 // pred_region
          %s758 = sand.u32 %s99, 1
          %s759 = sand.u32 %s99, 1
          %s760 = smul.addr %s759, 48
          %s761 = scalar_lea.vmem [#allocation8], %s760
          %s762 = smul.u32 4, %s43
          %s763 = smul.addr %s45, 24
          %s764 = sadd.s32 %s762, %s763
          %s765 = smul.addr %s44, 96
          %s766 = sadd.s32 %s764, %s765
          %s767 = smul.addr %s766, 4
          %s768 = scalar_lea.vmem %s1, %s767
          // Predicated region
          $region121: #{tpu_custom_call.1} parent=119 // pred_check
            _
          $region122: #{tpu_custom_call.1} parent=119 // pred_check_branch
            %770 = sbr.rel (0) target = $region124
          $region123: #{tpu_custom_call.1} parent=119 // pred_region
            // Predicated region
            $region125: #{tpu_custom_call.1} parent=123 // pred_check
              _
            $region126: #{tpu_custom_call.1} parent=123 // pred_check_branch
              %772 = sbr.rel target = $region128
            $region127: #{tpu_custom_call.1} parent=123 // pred_region
              // Predicated region
              $region140: #{tpu_custom_call.1} parent=127 // pred_check
                _
              $region141: #{tpu_custom_call.1} parent=127 // pred_check_branch
                %809 = sbr.rel (0) target = $region143
              $region142: #{tpu_custom_call.1} parent=127 // pred_region
                loop: start=0, step=1, limit=1
                $region144: #{tpu_custom_call.1} parent=142 // loop_pre_header
                  _
                $region145: #{tpu_custom_call.1} parent=142 // loop_header
                  %s811 = sphi 0, %s815
                  %p812 = scmp.ge.s32.totalorder %s811, 1
                  %s816 = sphi %s768, %s768
                  %s817 = sphi %s761, %s761
                $region146: #{tpu_custom_call.1} parent=142 // loop_header_branch
                  %814 = sbr.rel (%p812) target = $region150
                $region147: #{tpu_custom_call.1} parent=142 // loop_body
                  _
                $region148: #{tpu_custom_call.1} parent=142 // loop_footer
                  %s815 = sadd.s32 1, %s811
                $region149: #{tpu_custom_call.1} parent=142 // loop_footer_branch
                  %810 = sbr.rel target = $region145
                $region150: #{tpu_custom_call.1} parent=142 // loop_exit
                  _
                loop: start=0, step=1, limit=1
                $region151: #{tpu_custom_call.1} parent=142 // loop_pre_header
                  _
                $region152: #{tpu_custom_call.1} parent=142 // loop_header
                  %s820 = sphi 0, %s824
                  %p821 = scmp.ge.s32.totalorder %s820, 1
                  %s825 = sphi %s768, %s768
                  %s826 = sphi %s761, %s761
                $region153: #{tpu_custom_call.1} parent=142 // loop_header_branch
                  %823 = sbr.rel (%p821) target = $region157
                $region154: #{tpu_custom_call.1} parent=142 // loop_body
                  %v827 = vld [vmem:[%s825] sm:$0xf]
                  %828 = vst [vmem:[%s826] sm:$0xf] %v827
                  %v829 = vld [vmem:[%s825 + $0x4] sm:$0xf]
                  %830 = vst [vmem:[%s826 + $0x4] sm:$0xf] %v829
                  %v831 = vld [vmem:[%s825 + $0x8] sm:$0xf]
                  %832 = vst [vmem:[%s826 + $0x8] sm:$0xf] %v831
                  %v833 = vld [vmem:[%s825 + $0xc] sm:$0xf]
                  %834 = vst [vmem:[%s826 + $0xc] sm:$0xf] %v833
                  %v835 = vld [vmem:[%s825 + $0x20] sm:$0xf]
                  %836 = vst [vmem:[%s826 + $0x10] sm:$0xf] %v835
                  %v837 = vld [vmem:[%s825 + $0x24] sm:$0xf]
                  %838 = vst [vmem:[%s826 + $0x14] sm:$0xf] %v837
                  %v839 = vld [vmem:[%s825 + $0x28] sm:$0xf]
                  %840 = vst [vmem:[%s826 + $0x18] sm:$0xf] %v839
                  %v841 = vld [vmem:[%s825 + $0x2c] sm:$0xf]
                  %842 = vst [vmem:[%s826 + $0x1c] sm:$0xf] %v841
                  %v843 = vld [vmem:[%s825 + $0x40] sm:$0xf]
                  %844 = vst [vmem:[%s826 + $0x20] sm:$0xf] %v843
                  %v845 = vld [vmem:[%s825 + $0x44] sm:$0xf]
                  %846 = vst [vmem:[%s826 + $0x24] sm:$0xf] %v845
                  %v847 = vld [vmem:[%s825 + $0x48] sm:$0xf]
                  %848 = vst [vmem:[%s826 + $0x28] sm:$0xf] %v847
                  %v849 = vld [vmem:[%s825 + $0x4c] sm:$0xf]
                  %850 = vst [vmem:[%s826 + $0x2c] sm:$0xf] %v849
                $region155: #{tpu_custom_call.1} parent=142 // loop_footer
                  %s824 = sadd.s32 1, %s820
                $region156: #{tpu_custom_call.1} parent=142 // loop_footer_branch
                  %819 = sbr.rel target = $region152
                $region157: #{tpu_custom_call.1} parent=142 // loop_exit
                  _
              $region143: #{tpu_custom_call.1} parent=127 // pred_fallthru
                _
            $region128: #{tpu_custom_call.1} parent=123 // pred_fallthru
              _
            // Predicated region
            $region129: #{tpu_custom_call.1} parent=123 // pred_check
              _
            $region130: #{tpu_custom_call.1} parent=123 // pred_check_branch
              %774 = sbr.rel (0) target = $region132
            $region131: #{tpu_custom_call.1} parent=123 // pred_region
              loop: start=0, step=1, limit=1
              $region133: #{tpu_custom_call.1} parent=131 // loop_pre_header
                _
              $region134: #{tpu_custom_call.1} parent=131 // loop_header
                %s777 = sphi 0, %s781
                %p778 = scmp.ge.s32.totalorder %s777, 1
                %s782 = sphi %s768, %s768
                %s783 = sphi %s761, %s761
              $region135: #{tpu_custom_call.1} parent=131 // loop_header_branch
                %780 = sbr.rel (%p778) target = $region139
              $region136: #{tpu_custom_call.1} parent=131 // loop_body
                %v784 = vld [vmem:[%s782] sm:$0xf]
                %785 = vst [vmem:[%s783] sm:$0xf] %v784
                %v786 = vld [vmem:[%s782 + $0x4] sm:$0xf]
                %787 = vst [vmem:[%s783 + $0x4] sm:$0xf] %v786
                %v788 = vld [vmem:[%s782 + $0x8] sm:$0xf]
                %789 = vst [vmem:[%s783 + $0x8] sm:$0xf] %v788
                %v790 = vld [vmem:[%s782 + $0xc] sm:$0xf]
                %791 = vst [vmem:[%s783 + $0xc] sm:$0xf] %v790
                %v792 = vld [vmem:[%s782 + $0x20] sm:$0xf]
                %793 = vst [vmem:[%s783 + $0x10] sm:$0xf] %v792
                %v794 = vld [vmem:[%s782 + $0x24] sm:$0xf]
                %795 = vst [vmem:[%s783 + $0x14] sm:$0xf] %v794
                %v796 = vld [vmem:[%s782 + $0x28] sm:$0xf]
                %797 = vst [vmem:[%s783 + $0x18] sm:$0xf] %v796
                %v798 = vld [vmem:[%s782 + $0x2c] sm:$0xf]
                %799 = vst [vmem:[%s783 + $0x1c] sm:$0xf] %v798
                %v800 = vld [vmem:[%s782 + $0x40] sm:$0xf]
                %801 = vst [vmem:[%s783 + $0x20] sm:$0xf] %v800
                %v802 = vld [vmem:[%s782 + $0x44] sm:$0xf]
                %803 = vst [vmem:[%s783 + $0x24] sm:$0xf] %v802
                %v804 = vld [vmem:[%s782 + $0x48] sm:$0xf]
                %805 = vst [vmem:[%s783 + $0x28] sm:$0xf] %v804
                %v806 = vld [vmem:[%s782 + $0x4c] sm:$0xf]
                %807 = vst [vmem:[%s783 + $0x2c] sm:$0xf] %v806
              $region137: #{tpu_custom_call.1} parent=131 // loop_footer
                %s781 = sadd.s32 1, %s777
              $region138: #{tpu_custom_call.1} parent=131 // loop_footer_branch
                %776 = sbr.rel target = $region134
              $region139: #{tpu_custom_call.1} parent=131 // loop_exit
                _
            $region132: #{tpu_custom_call.1} parent=123 // pred_fallthru
              _
          $region124: #{tpu_custom_call.1} parent=119 // pred_fallthru
            _
          %851 = vnop
        $region120: #{tpu_custom_call.1} parent=111 // pred_fallthru
          _
      $region112: #{tpu_custom_call.1} parent=5 // pred_fallthru
        _
      %p852 = scmp.le.s32.totalorder 1, %s36
      %p853 = scmp.lt.s32.totalorder %s36, 17
      %p854 = pnand %p852, %p853
      %p855 = pneg %p854
      // Predicated region
      $region158: #{tpu_custom_call.1} parent=5 // pred_check
        _
      $region159: #{tpu_custom_call.1} parent=5 // pred_check_branch
        %857 = sbr.rel (%p854) target = $region161
      $region160: #{tpu_custom_call.1} parent=5 // pred_region
        %s858 = ssub.s32 %s36, 1
        %s859 = sand.u32 %s102, 1
        %s860 = sand.u32 %s102, 1
        %s861 = smul.addr %s860, 48
        %s862 = scalar_lea.vmem [#allocation8], %s861
        // Predicated region
        $region162: #{tpu_custom_call.1} parent=160 // pred_check
          %p863 = pneg %p115
        $region163: #{tpu_custom_call.1} parent=160 // pred_check_branch
          %865 = sbr.rel (%p863) target = $region165
        $region164: #{tpu_custom_call.1} parent=160 // pred_region
          _
        $region165: #{tpu_custom_call.1} parent=160 // pred_fallthru
          _
        %s866 = smul.u32 4, %s46
        %p867 = scmp.lt.s32.totalorder %s47, 1
        %s868 = scalar_select %p867, %s47, 1
        %p869 = scmp.lt.s32.totalorder %s48, 3
        %s870 = scalar_select %p869, %s48, 3
        %p871 = scmp.lt.s32.totalorder %s866, 7
        %s872 = scalar_select %p871, %s866, 7
        %s873 = smul.addr %s870, 8
        %s874 = sadd.s32 %s872, %s873
        %s875 = smul.addr %s868, 32
        %s876 = sadd.s32 %s874, %s875
        %s877 = smul.addr %s876, 8
        %s878 = scalar_lea.vmem %s0, %s877
        %p879 = pneg %p85
        %p880 = pneg %p82
        %s881 = sand.u32 %s102, 1
        %s882 = sand.u32 %s102, 1
        %s883 = smul.addr %s882, 48
        %s884 = scalar_lea.vmem [#allocation8], %s883
        %p885 = pneg %p115
        %p886 = pneg %p112
        %p887 = pneg %p136
        %p888 = pneg %p133
        %p889 = pneg %p157
        %p890 = pneg %p154
        %p891 = pneg %p178
        %p892 = pneg %p175
        %p893 = pneg %p199
        %p894 = pneg %p196
        %p895 = pneg %p220
        %p896 = pneg %p217
        %p897 = pneg %p241
        %p898 = pneg %p238
        %p899 = pneg %p262
        %p900 = pneg %p259
        %p901 = pneg %p283
        %p902 = pneg %p280
        %p903 = pneg %p304
        %p904 = pneg %p301
        %p905 = pneg %p325
        %p906 = pneg %p322
        %p907 = pneg %p346
        %p908 = pneg %p343
        %p909 = pneg %p367
        %p910 = pneg %p364
        %p911 = pneg %p388
        %p912 = pneg %p385
        %p913 = pneg %p409
        %p914 = pneg %p406
        %p915 = pneg %p430
        %p916 = pneg %p427
        %p917 = pneg %p451
        %p918 = pneg %p448
        %p919 = pneg %p472
        %p920 = pneg %p469
        %p921 = pneg %p493
        %p922 = pneg %p490
        %p923 = pneg %p514
        %p924 = pneg %p511
        %p925 = pneg %p535
        %p926 = pneg %p532
        %p927 = pneg %p556
        %p928 = pneg %p553
        %p929 = pneg %p577
        %p930 = pneg %p574
        %p931 = pneg %p598
        %p932 = pneg %p595
        %p933 = pneg %p619
        %p934 = pneg %p616
        %p935 = pneg %p647
        %p936 = pneg %p644
        %s937 = smul.u32 4, %s46
        %p938 = scmp.lt.s32.totalorder %s47, 1
        %s939 = scalar_select %p938, %s47, 1
        %p940 = scmp.lt.s32.totalorder %s937, 7
        %s941 = scalar_select %p940, %s937, 7
        %s942 = smul.addr %s939, 8
        %s943 = sadd.s32 %s941, %s942
        %s944 = smul.addr %s943, 8
        %s945 = scalar_lea.vmem %s26, %s944
        %s946 = smul.u32 4, %s46
        %p947 = scmp.lt.s32.totalorder %s47, 1
        %s948 = scalar_select %p947, %s47, 1
        %p949 = scmp.lt.s32.totalorder %s48, 3
        %s950 = scalar_select %p949, %s48, 3
        %p951 = scmp.lt.s32.totalorder %s946, 7
        %s952 = scalar_select %p951, %s946, 7
        %s953 = smul.addr %s950, 8
        %s954 = sadd.s32 %s952, %s953
        %s955 = smul.addr %s948, 32
        %s956 = sadd.s32 %s954, %s955
        %s957 = smul.addr %s956, 8
        %s958 = scalar_lea.vmem %s0, %s957
        %s959 = smul.u32 4, %s46
        %s960 = smul.u32 4, %s46
        %s961 = smul.u32 4, %s46
        %p962 = scmp.lt.s32.totalorder %s47, 1
        %s963 = scalar_select %p962, %s47, 1
        %p964 = scmp.lt.s32.totalorder %s961, 7
        %s965 = scalar_select %p964, %s961, 7
        %s966 = smul.addr %s963, 8
        %s967 = sadd.s32 %s965, %s966
        %s968 = smul.addr %s967, 8
        %s969 = scalar_lea.vmem %s26, %s968
        %s970 = smul.u32 4, %s46
        %p972 = scmp.eq.s32.totalorder %s48, 0
        // Predicated region
        $region166: #{tpu_custom_call.1} parent=160 // pred_check
          %p973 = pneg %p972
        $region167: #{tpu_custom_call.1} parent=160 // pred_check_branch
          %975 = sbr.rel (%p973) target = $region169
        $region168: #{tpu_custom_call.1} parent=160 // pred_region
          %vm976 = vcmask 7168
          %977 = vst.msk [vmem:[#allocation2] sm:$0xff] %vm976, 1.0
          %978 = vst.msk [vmem:[#allocation2 + $0x8] sm:$0xff] %vm976, 1.0
          %979 = vst.msk [vmem:[#allocation2 + $0x10] sm:$0xff] %vm976, 1.0
          %980 = vst.msk [vmem:[#allocation2 + $0x18] sm:$0xff] %vm976, 1.0
          %vm981 = vcmask 23552
          %982 = vst.msk [vmem:[#allocation3] sm:$0xff] %vm981, 0.0
          %983 = vst.msk [vmem:[#allocation3 + $0x8] sm:$0xff] %vm981, 0.0
          %984 = vst.msk [vmem:[#allocation3 + $0x10] sm:$0xff] %vm981, 0.0
          %985 = vst.msk [vmem:[#allocation3 + $0x18] sm:$0xff] %vm981, 0.0
          %vm986 = vcmask 64512
          %987 = vst.msk [vmem:[#allocation4] sm:$0xff] %vm986, 0.0
          %988 = vst.msk [vmem:[#allocation4 + $0x8] sm:$0xff] %vm986, 0.0
          %989 = vst.msk [vmem:[#allocation4 + $0x10] sm:$0xff] %vm986, 0.0
          %990 = vst.msk [vmem:[#allocation4 + $0x18] sm:$0xff] %vm986, 0.0
          %vm991 = vcmask 130048
          %992 = vst.msk [vmem:[#allocation5] sm:$0xff] %vm991, 0.0
          %993 = vst.msk [vmem:[#allocation5 + $0x8] sm:$0xff] %vm991, 0.0
          %994 = vst.msk [vmem:[#allocation5 + $0x10] sm:$0xff] %vm991, 0.0
          %995 = vst.msk [vmem:[#allocation5 + $0x18] sm:$0xff] %vm991, 0.0
        $region169: #{tpu_custom_call.1} parent=160 // pred_fallthru
          _
        %v996 = vld [vmem:[%s862] sm:$0xf]
        %v997 = vld [vmem:[%s862 + $0x4] sm:$0xf]
        %v998 = vld [vmem:[%s862 + $0x8] sm:$0xf]
        %v999 = vld [vmem:[%s862 + $0xc] sm:$0xf]
        %v1000 = vld [vmem:[%s862 + $0x10] sm:$0xf]
        %v1001 = vld [vmem:[%s862 + $0x14] sm:$0xf]
        %v1002 = vld [vmem:[%s862 + $0x18] sm:$0xf]
        %v1003 = vld [vmem:[%s862 + $0x1c] sm:$0xf]
        %v1004 = vld [vmem:[%s862 + $0x20] sm:$0xf]
        %v1005 = vld [vmem:[%s862 + $0x24] sm:$0xf]
        %v1006 = vld [vmem:[%s862 + $0x28] sm:$0xf]
        %v1007 = vld [vmem:[%s862 + $0x2c] sm:$0xf]
        %v1008 = vld [vmem:[%s2] sm:$0xf]
        %v1009 = vld [vmem:[%s2 + $0x4] sm:$0xf]
        %v1010 = vld [vmem:[%s2 + $0x8] sm:$0xf]
        %v1011 = vld [vmem:[%s3] sm:$0x1]
        %v1013 = vlaneseq
        %v1014 = vshrl.u32 %v1013, 7
        %v1015 = vsub.s32 0, %v1014
        %v1016 = vrot.slane %v1011, %v1015
        %v1030 = vunpack.c.l.b16 %v996
        %v1031 = vunpack.c.l.b16 %v997
        %v1032 = vunpack.c.l.b16 %v998
        %v1033 = vunpack.c.l.b16 %v999
        %v1034 = vunpack.c.l.b16 %v1000
        %v1035 = vunpack.c.l.b16 %v1001
        %v1036 = vunpack.c.l.b16 %v1002
        %v1037 = vunpack.c.l.b16 %v1003
        %v1038 = vunpack.c.l.b16 %v1004
        %v1039 = vunpack.c.l.b16 %v1005
        %v1040 = vunpack.c.l.b16 %v1006
        %v1041 = vunpack.c.l.b16 %v1007
        %v1042 = vpack.c.b16 %v1031, %v1030
        %v1043 = vpack.c.b16 %v1033, %v1032
        %v1044 = vpack.c.b16 %v1035, %v1034
        %v1045 = vpack.c.b16 %v1037, %v1036
        %v1046 = vpack.c.b16 %v1039, %v1038
        %v1047 = vpack.c.b16 %v1041, %v1040
        %v1051 = vunpack.c.l.b16 %v1008
        %v1052 = vunpack.c.l.b16 %v1009
        %v1053 = vunpack.c.l.b16 %v1010
        %v1054 = vpack.c.b16 %v1052, %v1051
        %v1055 = vpack.c.b16 %v1053, %v1053
        %vm1057 = vcmask 187392
        %v1059 = vsel %vm1057, %v1042, 0
        %v1062 = vsel %vm1057, %v1043, 0
        %v1065 = vsel %vm1057, %v1044, 0
        %v1068 = vsel %vm1057, %v1045, 0
        %v1071 = vsel %vm1057, %v1046, 0
        %v1074 = vsel %vm1057, %v1047, 0
        %vm1076 = vcmask 1042432
        %vm1077 = vcmask 1043456
        %v1078 = vsel %vm1076, 4294967295, 65535
        %v1079 = vsel %vm1077, %v1078, 0
        %v1081 = vand.u32 %v1055, %v1079
        %1083 = vmatprep.subr.bf16.mxu0 0
        %1084 = vmatpush1.bf16.msra.mxu0 %v1054
        %1085 = vmatprep.subr.bf16.mxu0 0
        %1086 = vmatpush1.bf16.msra.mxu0 %v1081
        %1087 = vmatprep.subr.bf16.mxu0 0
        %1088 = vmatpush1.bf16.msra.mxu0 0
        %1089 = vmatprep.subr.bf16.mxu0 0
        %1090 = vmatpush1.bf16.msra.mxu0 0
        %1091 = vmatprep.subr.bf16.mxu0 0
        %1092 = vmatpush1.bf16.msra.mxu0 0
        %1093 = vmatprep.subr.bf16.mxu0 0
        %1094 = vmatpush1.bf16.msra.mxu0 0
        %1095 = vmatprep.subr.bf16.mxu0 0
        %1096 = vmatpush1.bf16.msra.mxu0 0
        %1097 = vmatprep.subr.bf16.mxu0 0
        %1098 = vmatpush1.bf16.msra.mxu0 0
        %1099 = vmatprep.subr.bf16.mxu0 0
        %1100 = vmatpush1.bf16.msra.mxu0 0
        %1101 = vmatprep.subr.bf16.mxu0 0
        %1102 = vmatpush1.bf16.msra.mxu0 0
        %1103 = vmatprep.subr.bf16.mxu0 0
        %1104 = vmatpush1.bf16.msra.mxu0 0
        %1105 = vmatprep.subr.bf16.mxu0 0
        %1106 = vmatpush1.bf16.msra.mxu0 0
        %1107 = vmatprep.subr.bf16.mxu0 0
        %1108 = vmatpush1.bf16.msra.mxu0 0
        %1109 = vmatprep.subr.bf16.mxu0 0
        %1110 = vmatpush1.bf16.msra.mxu0 0
        %1111 = vmatprep.subr.bf16.mxu0 0
        %1112 = vmatpush1.bf16.msra.mxu0 0
        %1113 = vmatprep.subr.bf16.mxu0 0
        %1114 = vmatpush1.bf16.msra.mxu0 0
        %1115 = vmatprep.mubr.bf16.mxu0 0
        %1116 = vmatmul.mubr.bf16.gmra.mrb[0].mxu0 %v1059
        %v1117 = vpop.f32.mrb[0].mxu0
        %v1118 = vadd.f32 %v1016, %v1117
        %v1119 = vpop.f32.mrb[0].mxu0
        %v1120 = vpop.f32.mrb[0].mxu0
        %v1121 = vadd.f32 %v1016, %v1120
        %v1122 = vpop.f32.mrb[0].mxu0
        %1123 = vmatprep.mubr.bf16.mxu0 0
        %1124 = vmatmul.mubr.bf16.gmra.mrb[0].mxu0 %v1062
        %v1125 = vpop.f32.mrb[0].mxu0
        %v1126 = vadd.f32 %v1016, %v1125
        %v1127 = vpop.f32.mrb[0].mxu0
        %v1128 = vpop.f32.mrb[0].mxu0
        %v1129 = vadd.f32 %v1016, %v1128
        %v1130 = vpop.f32.mrb[0].mxu0
        %1131 = vmatprep.mubr.bf16.mxu0 0
        %1132 = vmatmul.mubr.bf16.gmra.mrb[0].mxu0 %v1065
        %v1133 = vpop.f32.mrb[0].mxu0
        %v1134 = vadd.f32 %v1016, %v1133
        %v1135 = vpop.f32.mrb[0].mxu0
        %v1136 = vpop.f32.mrb[0].mxu0
        %v1137 = vadd.f32 %v1016, %v1136
        %v1138 = vpop.f32.mrb[0].mxu0
        %1139 = vmatprep.mubr.bf16.mxu0 0
        %1140 = vmatmul.mubr.bf16.gmra.mrb[0].mxu0 %v1068
        %v1141 = vpop.f32.mrb[0].mxu0
        %v1142 = vadd.f32 %v1016, %v1141
        %v1143 = vpop.f32.mrb[0].mxu0
        %v1144 = vpop.f32.mrb[0].mxu0
        %v1145 = vadd.f32 %v1016, %v1144
        %v1146 = vpop.f32.mrb[0].mxu0
        %1147 = vmatprep.mubr.bf16.mxu0 0
        %1148 = vmatmul.mubr.bf16.gmra.mrb[0].mxu0 %v1071
        %v1149 = vpop.f32.mrb[0].mxu0
        %v1150 = vadd.f32 %v1016, %v1149
        %v1151 = vpop.f32.mrb[0].mxu0
        %v1152 = vpop.f32.mrb[0].mxu0
        %v1153 = vadd.f32 %v1016, %v1152
        %v1154 = vpop.f32.mrb[0].mxu0
        %1155 = vmatprep.mubr.bf16.mxu0 0
        %1156 = vmatmul.mubr.bf16.gmra.mrb[0].mxu0 %v1074
        %v1157 = vpop.f32.mrb[0].mxu0
        %v1158 = vadd.f32 %v1016, %v1157
        %v1159 = vpop.f32.mrb[0].mxu0
        %v1160 = vpop.f32.mrb[0].mxu0
        %v1161 = vadd.f32 %v1016, %v1160
        %v1162 = vpop.f32.mrb[0].mxu0
        %1163 = vdwg.mxu0
        %v1164 = vmax.f32 %v1118, 0.0
        %v1165 = vmax.f32 %v1121, 0.0
        %v1166 = vmax.f32 %v1126, 0.0
        %v1167 = vmax.f32 %v1129, 0.0
        %v1168 = vmax.f32 %v1134, 0.0
        %v1169 = vmax.f32 %v1137, 0.0
        %v1170 = vmax.f32 %v1142, 0.0
        %v1171 = vmax.f32 %v1145, 0.0
        %v1172 = vmax.f32 %v1150, 0.0
        %v1173 = vmax.f32 %v1153, 0.0
        %v1174 = vmax.f32 %v1158, 0.0
        %v1175 = vmax.f32 %v1161, 0.0
        %v1176 = vunpack.c.l.bf16 %v996
        %v1177 = vunpack.c.l.bf16 %v997
        %v1178 = vunpack.c.l.bf16 %v998
        %v1179 = vunpack.c.l.bf16 %v999
        %v1180 = vunpack.c.l.bf16 %v1000
        %v1181 = vunpack.c.l.bf16 %v1001
        %v1182 = vunpack.c.l.bf16 %v1002
        %v1183 = vunpack.c.l.bf16 %v1003
        %v1184 = vunpack.c.l.bf16 %v1004
        %v1185 = vunpack.c.l.bf16 %v1005
        %v1186 = vunpack.c.l.bf16 %v1006
        %v1187 = vunpack.c.l.bf16 %v1007
        %v1188 = vadd.f32 %v1176, %v1164
        %v1189 = vadd.f32 %v1177, %v1165
        %v1190 = vadd.f32 %v1178, %v1166
        %v1191 = vadd.f32 %v1179, %v1167
        %v1192 = vadd.f32 %v1180, %v1168
        %v1193 = vadd.f32 %v1181, %v1169
        %v1194 = vadd.f32 %v1182, %v1170
        %v1195 = vadd.f32 %v1183, %v1171
        %v1196 = vadd.f32 %v1184, %v1172
        %v1197 = vadd.f32 %v1185, %v1173
        %v1198 = vadd.f32 %v1186, %v1174
        %v1199 = vadd.f32 %v1187, %v1175
        %vm1200 = vcmask 154624
        %v1201 = vsel %vm1200, %v1188, 0.0
        %v1202 = vsel %vm1200, %v1192, 0.0
        %v1203 = vadd.f32 %v1201, %v1202
        %v1204 = vsel %vm1200, %v1196, 0.0
        %v1205 = vadd.f32 %v1203, %v1204
        %v1206 = vsel %vm1200, %v1189, 0.0
        %v1207 = vsel %vm1200, %v1193, 0.0
        %v1208 = vadd.f32 %v1206, %v1207
        %v1209 = vsel %vm1200, %v1197, 0.0
        %v1210 = vadd.f32 %v1208, %v1209
        %v1211 = vsel %vm1200, %v1190, 0.0
        %v1212 = vsel %vm1200, %v1194, 0.0
        %v1213 = vadd.f32 %v1211, %v1212
        %v1214 = vsel %vm1200, %v1198, 0.0
        %v1215 = vadd.f32 %v1213, %v1214
        %v1216 = vsel %vm1200, %v1191, 0.0
        %v1217 = vsel %vm1200, %v1195, 0.0
        %v1218 = vadd.f32 %v1216, %v1217
        %v1219 = vsel %vm1200, %v1199, 0.0
        %v1220 = vadd.f32 %v1218, %v1219
        %v1221 = vrcp.pop 3.0
        %v1222 = vmul.f32 %v1205, %v1221
        %v1223 = vmul.f32 %v1210, %v1221
        %v1224 = vmul.f32 %v1215, %v1221
        %v1225 = vmul.f32 %v1220, %v1221
        %v1226 = vsub.f32 %v1188, %v1222
        %v1227 = vsub.f32 %v1189, %v1223
        %v1228 = vsub.f32 %v1190, %v1224
        %v1229 = vsub.f32 %v1191, %v1225
        %v1230 = vsub.f32 %v1192, %v1222
        %v1231 = vsub.f32 %v1193, %v1223
        %v1232 = vsub.f32 %v1194, %v1224
        %v1233 = vsub.f32 %v1195, %v1225
        %v1234 = vsub.f32 %v1196, %v1222
        %v1235 = vsub.f32 %v1197, %v1223
        %v1236 = vsub.f32 %v1198, %v1224
        %v1237 = vsub.f32 %v1199, %v1225
        %v1238 = vmul.f32 %v1226, %v1226
        %v1239 = vmul.f32 %v1227, %v1227
        %v1240 = vmul.f32 %v1228, %v1228
        %v1241 = vmul.f32 %v1229, %v1229
        %v1242 = vmul.f32 %v1230, %v1230
        %v1243 = vmul.f32 %v1231, %v1231
        %v1244 = vmul.f32 %v1232, %v1232
        %v1245 = vmul.f32 %v1233, %v1233
        %v1246 = vmul.f32 %v1234, %v1234
        %v1247 = vmul.f32 %v1235, %v1235
        %v1248 = vmul.f32 %v1236, %v1236
        %v1249 = vmul.f32 %v1237, %v1237
        %v1250 = vsel %vm1200, %v1238, 0.0
        %v1251 = vsel %vm1200, %v1242, 0.0
        %v1252 = vadd.f32 %v1250, %v1251
        %v1253 = vsel %vm1200, %v1246, 0.0
        %v1254 = vadd.f32 %v1252, %v1253
        %v1255 = vsel %vm1200, %v1239, 0.0
        %v1256 = vsel %vm1200, %v1243, 0.0
        %v1257 = vadd.f32 %v1255, %v1256
        %v1258 = vsel %vm1200, %v1247, 0.0
        %v1259 = vadd.f32 %v1257, %v1258
        %v1260 = vsel %vm1200, %v1240, 0.0
        %v1261 = vsel %vm1200, %v1244, 0.0
        %v1262 = vadd.f32 %v1260, %v1261
        %v1263 = vsel %vm1200, %v1248, 0.0
        %v1264 = vadd.f32 %v1262, %v1263
        %v1265 = vsel %vm1200, %v1241, 0.0
        %v1266 = vsel %vm1200, %v1245, 0.0
        %v1267 = vadd.f32 %v1265, %v1266
        %v1268 = vsel %vm1200, %v1249, 0.0
        %v1269 = vadd.f32 %v1267, %v1268
        %v1270 = vmul.f32 %v1254, 0.5
        %v1271 = vmul.f32 %v1259, 0.5
        %v1272 = vmul.f32 %v1264, 0.5
        %v1273 = vmul.f32 %v1269, 0.5
        %v1274 = vpack.c.bf16 %v1271, %v1270
        %v1275 = vpack.c.bf16 %v1273, %v1272
        %v1276 = vld [vmem:[%s5] sm:$0xf]
        %v1277 = vld [vmem:[%s5 + $0x4] sm:$0xf]
        %v1278 = vld [vmem:[%s5 + $0x8] sm:$0x3]
        %v1279 = vpack.c.bf16 %v1223, %v1222
        %v1280 = vpack.c.bf16 %v1225, %v1224
        %v1281 = vld [vmem:[%s6] sm:$0xf]
        %v1282 = vld [vmem:[%s6 + $0x4] sm:$0xf]
        %v1283 = vld [vmem:[%s6 + $0x8] sm:$0x3]
        %v1287 = vunpack.c.l.b16 %v1281
        %v1288 = vunpack.c.l.b16 %v1282
        %v1289 = vunpack.c.l.b16 %v1283
        %v1290 = vpack.c.b16 %v1288, %v1287
        %v1291 = vpack.c.b16 %v1289, %v1289
        %v1294 = vsel %vm1200, %v1279, 0
        %v1297 = vsel %vm1200, %v1280, 0
        %vm1299 = vcmask 1040384
        %vm1300 = vcmask 1041408
        %v1301 = vsel %vm1299, 4294967295, 65535
        %v1302 = vsel %vm1300, %v1301, 0
        %v1304 = vand.u32 %v1291, %v1302
        %1306 = vmatprep.subr.bf16.mxu0 0
        %1307 = vmatpush1.bf16.msra.mxu0 %v1290
        %1308 = vmatprep.subr.bf16.mxu0 0
        %1309 = vmatpush1.bf16.msra.mxu0 %v1304
        %1310 = vmatprep.subr.bf16.mxu0 0
        %1311 = vmatpush1.bf16.msra.mxu0 0
        %1312 = vmatprep.subr.bf16.mxu0 0
        %1313 = vmatpush1.bf16.msra.mxu0 0
        %1314 = vmatprep.subr.bf16.mxu0 0
        %1315 = vmatpush1.bf16.msra.mxu0 0
        %1316 = vmatprep.subr.bf16.mxu0 0
        %1317 = vmatpush1.bf16.msra.mxu0 0
        %1318 = vmatprep.subr.bf16.mxu0 0
        %1319 = vmatpush1.bf16.msra.mxu0 0
        %1320 = vmatprep.subr.bf16.mxu0 0
        %1321 = vmatpush1.bf16.msra.mxu0 0
        %1322 = vmatprep.subr.bf16.mxu0 0
        %1323 = vmatpush1.bf16.msra.mxu0 0
        %1324 = vmatprep.subr.bf16.mxu0 0
        %1325 = vmatpush1.bf16.msra.mxu0 0
        %1326 = vmatprep.subr.bf16.mxu0 0
        %1327 = vmatpush1.bf16.msra.mxu0 0
        %1328 = vmatprep.subr.bf16.mxu0 0
        %1329 = vmatpush1.bf16.msra.mxu0 0
        %1330 = vmatprep.subr.bf16.mxu0 0
        %1331 = vmatpush1.bf16.msra.mxu0 0
        %1332 = vmatprep.subr.bf16.mxu0 0
        %1333 = vmatpush1.bf16.msra.mxu0 0
        %1334 = vmatprep.subr.bf16.mxu0 0
        %1335 = vmatpush1.bf16.msra.mxu0 0
        %1336 = vmatprep.subr.bf16.mxu0 0
        %1337 = vmatpush1.bf16.msra.mxu0 0
        %1338 = vmatprep.mubr.bf16.mxu0 0
        %1339 = vmatmul.mubr.bf16.gmra.mrb[0].mxu0 %v1294
        %v1340 = vpop.f32.mrb[0].mxu0
        %v1341 = vadd.f32 0.0, %v1340
        %v1342 = vpop.f32.mrb[0].mxu0
        %v1343 = vpop.f32.mrb[0].mxu0
        %v1344 = vadd.f32 0.0, %v1343
        %v1345 = vpop.f32.mrb[0].mxu0
        %1346 = vmatprep.mubr.bf16.mxu0 0
        %1347 = vmatmul.mubr.bf16.gmra.mrb[0].mxu0 %v1297
        %v1348 = vpop.f32.mrb[0].mxu0
        %v1349 = vadd.f32 0.0, %v1348
        %v1350 = vpop.f32.mrb[0].mxu0
        %v1351 = vpop.f32.mrb[0].mxu0
        %v1352 = vadd.f32 0.0, %v1351
        %v1353 = vpop.f32.mrb[0].mxu0
        %1354 = vdwg.mxu0
        %v1358 = vunpack.c.l.b16 %v1276
        %v1359 = vunpack.c.l.b16 %v1277
        %v1360 = vunpack.c.l.b16 %v1278
        %v1361 = vpack.c.b16 %v1359, %v1358
        %v1362 = vpack.c.b16 %v1360, %v1360
        %v1365 = vsel %vm1200, %v1274, 0
        %v1368 = vsel %vm1200, %v1275, 0
        %v1371 = vand.u32 %v1362, %v1302
        %1373 = vmatprep.subr.bf16.mxu0 0
        %1374 = vmatpush1.bf16.msra.mxu0 %v1361
        %1375 = vmatprep.subr.bf16.mxu0 0
        %1376 = vmatpush1.bf16.msra.mxu0 %v1371
        %1377 = vmatprep.subr.bf16.mxu0 0
        %1378 = vmatpush1.bf16.msra.mxu0 0
        %1379 = vmatprep.subr.bf16.mxu0 0
        %1380 = vmatpush1.bf16.msra.mxu0 0
        %1381 = vmatprep.subr.bf16.mxu0 0
        %1382 = vmatpush1.bf16.msra.mxu0 0
        %1383 = vmatprep.subr.bf16.mxu0 0
        %1384 = vmatpush1.bf16.msra.mxu0 0
        %1385 = vmatprep.subr.bf16.mxu0 0
        %1386 = vmatpush1.bf16.msra.mxu0 0
        %1387 = vmatprep.subr.bf16.mxu0 0
        %1388 = vmatpush1.bf16.msra.mxu0 0
        %1389 = vmatprep.subr.bf16.mxu0 0
        %1390 = vmatpush1.bf16.msra.mxu0 0
        %1391 = vmatprep.subr.bf16.mxu0 0
        %1392 = vmatpush1.bf16.msra.mxu0 0
        %1393 = vmatprep.subr.bf16.mxu0 0
        %1394 = vmatpush1.bf16.msra.mxu0 0
        %1395 = vmatprep.subr.bf16.mxu0 0
        %1396 = vmatpush1.bf16.msra.mxu0 0
        %1397 = vmatprep.subr.bf16.mxu0 0
        %1398 = vmatpush1.bf16.msra.mxu0 0
        %1399 = vmatprep.subr.bf16.mxu0 0
        %1400 = vmatpush1.bf16.msra.mxu0 0
        %1401 = vmatprep.subr.bf16.mxu0 0
        %1402 = vmatpush1.bf16.msra.mxu0 0
        %1403 = vmatprep.subr.bf16.mxu0 0
        %1404 = vmatpush1.bf16.msra.mxu0 0
        %1405 = vmatprep.mubr.bf16.mxu0 0
        %1406 = vmatmul.mubr.bf16.gmra.mrb[0].mxu0 %v1365
        %v1407 = vpop.f32.mrb[0].mxu0
        %v1408 = vadd.f32 %v1341, %v1407
        %v1409 = vpop.f32.mrb[0].mxu0
        %v1410 = vpop.f32.mrb[0].mxu0
        %v1411 = vadd.f32 %v1344, %v1410
        %v1412 = vpop.f32.mrb[0].mxu0
        %1413 = vmatprep.mubr.bf16.mxu0 0
        %1414 = vmatmul.mubr.bf16.gmra.mrb[0].mxu0 %v1368
        %v1415 = vpop.f32.mrb[0].mxu0
        %v1416 = vadd.f32 %v1349, %v1415
        %v1417 = vpop.f32.mrb[0].mxu0
        %v1418 = vpop.f32.mrb[0].mxu0
        %v1419 = vadd.f32 %v1352, %v1418
        %v1420 = vpop.f32.mrb[0].mxu0
        %1421 = vdwg.mxu0
        %v1422 = vld [vmem:[%s7] sm:$0x1]
        %v1424 = vlaneseq
        %v1425 = vshrl.u32 %v1424, 7
        %v1426 = vsub.s32 0, %v1425
        %v1427 = vrot.slane %v1422, %v1426
        %v1429 = vadd.f32 %v1408, %v1427
        %v1430 = vadd.f32 %v1411, %v1427
        %v1431 = vadd.f32 %v1416, %v1427
        %v1432 = vadd.f32 %v1419, %v1427
        %v1433 = vpack.c.bf16 %v1189, %v1188
        %v1434 = vpack.c.bf16 %v1191, %v1190
        %v1435 = vpack.c.bf16 %v1193, %v1192
        %v1436 = vpack.c.bf16 %v1195, %v1194
        %v1437 = vpack.c.bf16 %v1197, %v1196
        %v1438 = vpack.c.bf16 %v1199, %v1198
        %v1439 = vld [vmem:[%s4] sm:$0xf]
        %v1440 = vld [vmem:[%s4 + $0x4] sm:$0xf]
        %v1441 = vld [vmem:[%s4 + $0x8] sm:$0x3]
        %v1445 = vunpack.c.l.b16 %v1439
        %v1446 = vunpack.c.l.b16 %v1440
        %v1447 = vunpack.c.l.b16 %v1441
        %v1448 = vpack.c.b16 %v1446, %v1445
        %v1449 = vpack.c.b16 %v1447, %v1447
        %v1452 = vsel %vm1200, %v1433, 0
        %v1455 = vsel %vm1200, %v1434, 0
        %v1458 = vsel %vm1200, %v1435, 0
        %v1461 = vsel %vm1200, %v1436, 0
        %v1464 = vsel %vm1200, %v1437, 0
        %v1467 = vsel %vm1200, %v1438, 0
        %v1470 = vand.u32 %v1449, %v1302
        %1472 = vmatprep.subr.bf16.mxu0 0
        %1473 = vmatpush1.bf16.msra.mxu0 %v1448
        %1474 = vmatprep.subr.bf16.mxu0 0
        %1475 = vmatpush1.bf16.msra.mxu0 %v1470
        %1476 = vmatprep.subr.bf16.mxu0 0
        %1477 = vmatpush1.bf16.msra.mxu0 0
        %1478 = vmatprep.subr.bf16.mxu0 0
        %1479 = vmatpush1.bf16.msra.mxu0 0
        %1480 = vmatprep.subr.bf16.mxu0 0
        %1481 = vmatpush1.bf16.msra.mxu0 0
        %1482 = vmatprep.subr.bf16.mxu0 0
        %1483 = vmatpush1.bf16.msra.mxu0 0
        %1484 = vmatprep.subr.bf16.mxu0 0
        %1485 = vmatpush1.bf16.msra.mxu0 0
        %1486 = vmatprep.subr.bf16.mxu0 0
        %1487 = vmatpush1.bf16.msra.mxu0 0
        %1488 = vmatprep.subr.bf16.mxu0 0
        %1489 = vmatpush1.bf16.msra.mxu0 0
        %1490 = vmatprep.subr.bf16.mxu0 0
        %1491 = vmatpush1.bf16.msra.mxu0 0
        %1492 = vmatprep.subr.bf16.mxu0 0
        %1493 = vmatpush1.bf16.msra.mxu0 0
        %1494 = vmatprep.subr.bf16.mxu0 0
        %1495 = vmatpush1.bf16.msra.mxu0 0
        %1496 = vmatprep.subr.bf16.mxu0 0
        %1497 = vmatpush1.bf16.msra.mxu0 0
        %1498 = vmatprep.subr.bf16.mxu0 0
        %1499 = vmatpush1.bf16.msra.mxu0 0
        %1500 = vmatprep.subr.bf16.mxu0 0
        %1501 = vmatpush1.bf16.msra.mxu0 0
        %1502 = vmatprep.subr.bf16.mxu0 0
        %1503 = vmatpush1.bf16.msra.mxu0 0
        %1504 = vmatprep.mubr.bf16.mxu0 0
        %1505 = vmatmul.mubr.bf16.gmra.mrb[0].mxu0 %v1452
        %v1506 = vpop.f32.mrb[0].mxu0
        %v1507 = vadd.f32 0.0, %v1506
        %v1508 = vpop.f32.mrb[0].mxu0
        %v1509 = vpop.f32.mrb[0].mxu0
        %v1510 = vadd.f32 0.0, %v1509
        %v1511 = vpop.f32.mrb[0].mxu0
        %1512 = vmatprep.mubr.bf16.mxu0 0
        %1513 = vmatmul.mubr.bf16.gmra.mrb[0].mxu0 %v1455
        %v1514 = vpop.f32.mrb[0].mxu0
        %v1515 = vadd.f32 0.0, %v1514
        %v1516 = vpop.f32.mrb[0].mxu0
        %v1517 = vpop.f32.mrb[0].mxu0
        %v1518 = vadd.f32 0.0, %v1517
        %v1519 = vpop.f32.mrb[0].mxu0
        %1520 = vmatprep.mubr.bf16.mxu0 0
        %1521 = vmatmul.mubr.bf16.gmra.mrb[0].mxu0 %v1458
        %v1522 = vpop.f32.mrb[0].mxu0
        %v1523 = vadd.f32 0.0, %v1522
        %v1524 = vpop.f32.mrb[0].mxu0
        %v1525 = vpop.f32.mrb[0].mxu0
        %v1526 = vadd.f32 0.0, %v1525
        %v1527 = vpop.f32.mrb[0].mxu0
        %1528 = vmatprep.mubr.bf16.mxu0 0
        %1529 = vmatmul.mubr.bf16.gmra.mrb[0].mxu0 %v1461
        %v1530 = vpop.f32.mrb[0].mxu0
        %v1531 = vadd.f32 0.0, %v1530
        %v1532 = vpop.f32.mrb[0].mxu0
        %v1533 = vpop.f32.mrb[0].mxu0
        %v1534 = vadd.f32 0.0, %v1533
        %v1535 = vpop.f32.mrb[0].mxu0
        %1536 = vmatprep.mubr.bf16.mxu0 0
        %1537 = vmatmul.mubr.bf16.gmra.mrb[0].mxu0 %v1464
        %v1538 = vpop.f32.mrb[0].mxu0
        %v1539 = vadd.f32 0.0, %v1538
        %v1540 = vpop.f32.mrb[0].mxu0
        %v1541 = vpop.f32.mrb[0].mxu0
        %v1542 = vadd.f32 0.0, %v1541
        %v1543 = vpop.f32.mrb[0].mxu0
        %1544 = vmatprep.mubr.bf16.mxu0 0
        %1545 = vmatmul.mubr.bf16.gmra.mrb[0].mxu0 %v1467
        %v1546 = vpop.f32.mrb[0].mxu0
        %v1547 = vadd.f32 0.0, %v1546
        %v1548 = vpop.f32.mrb[0].mxu0
        %v1549 = vpop.f32.mrb[0].mxu0
        %v1550 = vadd.f32 0.0, %v1549
        %v1551 = vpop.f32.mrb[0].mxu0
        %1552 = vdwg.mxu0
        %v1553 = vadd.f32 %v1507, %v1429
        %v1554 = vadd.f32 %v1510, %v1430
        %v1555 = vadd.f32 %v1515, %v1431
        %v1556 = vadd.f32 %v1518, %v1432
        %v1557 = vadd.f32 %v1523, %v1429
        %v1558 = vadd.f32 %v1526, %v1430
        %v1559 = vadd.f32 %v1531, %v1431
        %v1560 = vadd.f32 %v1534, %v1432
        %v1561 = vadd.f32 %v1539, %v1429
        %v1562 = vadd.f32 %v1542, %v1430
        %v1563 = vadd.f32 %v1547, %v1431
        %v1564 = vadd.f32 %v1550, %v1432
        %v1565 = vmax.f32 %v1553, 0.0
        %v1566 = vmax.f32 %v1554, 0.0
        %v1567 = vmax.f32 %v1555, 0.0
        %v1568 = vmax.f32 %v1556, 0.0
        %v1569 = vmax.f32 %v1557, 0.0
        %v1570 = vmax.f32 %v1558, 0.0
        %v1571 = vmax.f32 %v1559, 0.0
        %v1572 = vmax.f32 %v1560, 0.0
        %v1573 = vmax.f32 %v1561, 0.0
        %v1574 = vmax.f32 %v1562, 0.0
        %v1575 = vmax.f32 %v1563, 0.0
        %v1576 = vmax.f32 %v1564, 0.0
        %v1577 = vpack.c.bf16 %v1566, %v1565
        %v1578 = vpack.c.bf16 %v1568, %v1567
        %v1579 = vpack.c.bf16 %v1570, %v1569
        %v1580 = vpack.c.bf16 %v1572, %v1571
        %v1581 = vpack.c.bf16 %v1574, %v1573
        %v1582 = vpack.c.bf16 %v1576, %v1575
        %v1583 = vld [vmem:[%s8] sm:$0xf]
        %v1584 = vld [vmem:[%s8 + $0x4] sm:$0xf]
        %v1585 = vld [vmem:[%s8 + $0x8] sm:$0xf]
        %v1586 = vld [vmem:[%s8 + $0xc] sm:$0xf]
        %v1587 = vld [vmem:[#allocation6] sm:$0x1]
        %v1589 = vlaneseq
        %v1590 = vshrl.u32 %v1589, 7
        %v1591 = vsub.s32 0, %v1590
        %v1592 = vrot.slane %v1587, %v1591
        %v1598 = vunpack.c.l.b16 %v1583
        %v1599 = vunpack.c.l.b16 %v1584
        %v1600 = vunpack.c.l.b16 %v1585
        %v1601 = vunpack.c.l.b16 %v1586
        %v1602 = vpack.c.b16 %v1599, %v1598
        %v1603 = vpack.c.b16 %v1601, %v1600
        %vm1606 = vcmask 261120
        %v1608 = vsel %vm1606, %v1577, 0
        %v1611 = vsel %vm1606, %v1578, 0
        %v1614 = vsel %vm1606, %v1579, 0
        %v1617 = vsel %vm1606, %v1580, 0
        %v1620 = vsel %vm1606, %v1581, 0
        %v1623 = vsel %vm1606, %v1582, 0
        %1625 = vmatprep.subr.bf16.mxu0 0
        %1626 = vmatpush1.bf16.msra.mxu0 %v1602
        %1627 = vmatprep.subr.bf16.mxu0 0
        %1628 = vmatpush1.bf16.msra.mxu0 %v1603
        %1629 = vmatprep.subr.bf16.mxu0 0
        %1630 = vmatpush1.bf16.msra.mxu0 0
        %1631 = vmatprep.subr.bf16.mxu0 0
        %1632 = vmatpush1.bf16.msra.mxu0 0
        %1633 = vmatprep.subr.bf16.mxu0 0
        %1634 = vmatpush1.bf16.msra.mxu0 0
        %1635 = vmatprep.subr.bf16.mxu0 0
        %1636 = vmatpush1.bf16.msra.mxu0 0
        %1637 = vmatprep.subr.bf16.mxu0 0
        %1638 = vmatpush1.bf16.msra.mxu0 0
        %1639 = vmatprep.subr.bf16.mxu0 0
        %1640 = vmatpush1.bf16.msra.mxu0 0
        %1641 = vmatprep.subr.bf16.mxu0 0
        %1642 = vmatpush1.bf16.msra.mxu0 0
        %1643 = vmatprep.subr.bf16.mxu0 0
        %1644 = vmatpush1.bf16.msra.mxu0 0
        %1645 = vmatprep.subr.bf16.mxu0 0
        %1646 = vmatpush1.bf16.msra.mxu0 0
        %1647 = vmatprep.subr.bf16.mxu0 0
        %1648 = vmatpush1.bf16.msra.mxu0 0
        %1649 = vmatprep.subr.bf16.mxu0 0
        %1650 = vmatpush1.bf16.msra.mxu0 0
        %1651 = vmatprep.subr.bf16.mxu0 0
        %1652 = vmatpush1.bf16.msra.mxu0 0
        %1653 = vmatprep.subr.bf16.mxu0 0
        %1654 = vmatpush1.bf16.msra.mxu0 0
        %1655 = vmatprep.subr.bf16.mxu0 0
        %1656 = vmatpush1.bf16.msra.mxu0 0
        %1657 = vmatprep.mubr.bf16.mxu0 0
        %1658 = vmatmul.mubr.bf16.gmra.mrb[0].mxu0 %v1608
        %v1659 = vpop.f32.mrb[0].mxu0
        %v1660 = vadd.f32 %v1592, %v1659
        %v1661 = vpop.f32.mrb[0].mxu0
        %v1662 = vpop.f32.mrb[0].mxu0
        %v1663 = vadd.f32 %v1592, %v1662
        %v1664 = vpop.f32.mrb[0].mxu0
        %1665 = vmatprep.mubr.bf16.mxu0 0
        %1666 = vmatmul.mubr.bf16.gmra.mrb[0].mxu0 %v1611
        %v1667 = vpop.f32.mrb[0].mxu0
        %v1668 = vadd.f32 %v1592, %v1667
        %v1669 = vpop.f32.mrb[0].mxu0
        %v1670 = vpop.f32.mrb[0].mxu0
        %v1671 = vadd.f32 %v1592, %v1670
        %v1672 = vpop.f32.mrb[0].mxu0
        %1673 = vmatprep.mubr.bf16.mxu0 0
        %1674 = vmatmul.mubr.bf16.gmra.mrb[0].mxu0 %v1614
        %v1675 = vpop.f32.mrb[0].mxu0
        %v1676 = vadd.f32 %v1592, %v1675
        %v1677 = vpop.f32.mrb[0].mxu0
        %v1678 = vpop.f32.mrb[0].mxu0
        %v1679 = vadd.f32 %v1592, %v1678
        %v1680 = vpop.f32.mrb[0].mxu0
        %1681 = vmatprep.mubr.bf16.mxu0 0
        %1682 = vmatmul.mubr.bf16.gmra.mrb[0].mxu0 %v1617
        %v1683 = vpop.f32.mrb[0].mxu0
        %v1684 = vadd.f32 %v1592, %v1683
        %v1685 = vpop.f32.mrb[0].mxu0
        %v1686 = vpop.f32.mrb[0].mxu0
        %v1687 = vadd.f32 %v1592, %v1686
        %v1688 = vpop.f32.mrb[0].mxu0
        %1689 = vmatprep.mubr.bf16.mxu0 0
        %1690 = vmatmul.mubr.bf16.gmra.mrb[0].mxu0 %v1620
        %v1691 = vpop.f32.mrb[0].mxu0
        %v1692 = vadd.f32 %v1592, %v1691
        %v1693 = vpop.f32.mrb[0].mxu0
        %v1694 = vpop.f32.mrb[0].mxu0
        %v1695 = vadd.f32 %v1592, %v1694
        %v1696 = vpop.f32.mrb[0].mxu0
        %1697 = vmatprep.mubr.bf16.mxu0 0
        %1698 = vmatmul.mubr.bf16.gmra.mrb[0].mxu0 %v1623
        %v1699 = vpop.f32.mrb[0].mxu0
        %v1700 = vadd.f32 %v1592, %v1699
        %v1701 = vpop.f32.mrb[0].mxu0
        %v1702 = vpop.f32.mrb[0].mxu0
        %v1703 = vadd.f32 %v1592, %v1702
        %v1704 = vpop.f32.mrb[0].mxu0
        %1705 = vdwg.mxu0
        %v1706 = vmax.f32 %v1660, 0.0
        %v1707 = vmax.f32 %v1663, 0.0
        %v1708 = vmax.f32 %v1668, 0.0
        %v1709 = vmax.f32 %v1671, 0.0
        %v1710 = vmax.f32 %v1676, 0.0
        %v1711 = vmax.f32 %v1679, 0.0
        %v1712 = vmax.f32 %v1684, 0.0
        %v1713 = vmax.f32 %v1687, 0.0
        %v1714 = vmax.f32 %v1692, 0.0
        %v1715 = vmax.f32 %v1695, 0.0
        %v1716 = vmax.f32 %v1700, 0.0
        %v1717 = vmax.f32 %v1703, 0.0
        %vm1718 = vcmask 7168
        %v1719 = vsel %vm1718, %v1706, -inf
        %v1720 = vsel %vm1718, %v1710, -inf
        %v1721 = vmax.f32 %v1719, %v1720
        %v1722 = vsel %vm1718, %v1714, -inf
        %v1723 = vmax.f32 %v1721, %v1722
        %v1724 = vsel %vm1718, %v1707, -inf
        %v1725 = vsel %vm1718, %v1711, -inf
        %v1726 = vmax.f32 %v1724, %v1725
        %v1727 = vsel %vm1718, %v1715, -inf
        %v1728 = vmax.f32 %v1726, %v1727
        %v1729 = vsel %vm1718, %v1708, -inf
        %v1730 = vsel %vm1718, %v1712, -inf
        %v1731 = vmax.f32 %v1729, %v1730
        %v1732 = vsel %vm1718, %v1716, -inf
        %v1733 = vmax.f32 %v1731, %v1732
        %v1734 = vsel %vm1718, %v1709, -inf
        %v1735 = vsel %vm1718, %v1713, -inf
        %v1736 = vmax.f32 %v1734, %v1735
        %v1737 = vsel %vm1718, %v1717, -inf
        %v1738 = vmax.f32 %v1736, %v1737
        %v1739 = vsub.f32 %v1706, %v1723
        %v1740 = vsub.f32 %v1707, %v1728
        %v1741 = vsub.f32 %v1708, %v1733
        %v1742 = vsub.f32 %v1709, %v1738
        %v1743 = vsub.f32 %v1710, %v1723
        %v1744 = vsub.f32 %v1711, %v1728
        %v1745 = vsub.f32 %v1712, %v1733
        %v1746 = vsub.f32 %v1713, %v1738
        %v1747 = vsub.f32 %v1714, %v1723
        %v1748 = vsub.f32 %v1715, %v1728
        %v1749 = vsub.f32 %v1716, %v1733
        %v1750 = vsub.f32 %v1717, %v1738
        %v1751 = vmul.f32 %v1739, 1.442695
        %v1752 = vpow.pop %v1751
        %v1753 = vmul.f32 %v1740, 1.442695
        %v1754 = vpow.pop %v1753
        %v1755 = vmul.f32 %v1741, 1.442695
        %v1756 = vpow.pop %v1755
        %v1757 = vmul.f32 %v1742, 1.442695
        %v1758 = vpow.pop %v1757
        %v1759 = vmul.f32 %v1743, 1.442695
        %v1760 = vpow.pop %v1759
        %v1761 = vmul.f32 %v1744, 1.442695
        %v1762 = vpow.pop %v1761
        %v1763 = vmul.f32 %v1745, 1.442695
        %v1764 = vpow.pop %v1763
        %v1765 = vmul.f32 %v1746, 1.442695
        %v1766 = vpow.pop %v1765
        %v1767 = vmul.f32 %v1747, 1.442695
        %v1768 = vpow.pop %v1767
        %v1769 = vmul.f32 %v1748, 1.442695
        %v1770 = vpow.pop %v1769
        %v1771 = vmul.f32 %v1749, 1.442695
        %v1772 = vpow.pop %v1771
        %v1773 = vmul.f32 %v1750, 1.442695
        %v1774 = vpow.pop %v1773
        %v1775 = vsel %vm1718, %v1752, 0.0
        %v1776 = vsel %vm1718, %v1760, 0.0
        %v1777 = vadd.f32 %v1775, %v1776
        %v1778 = vsel %vm1718, %v1768, 0.0
        %v1779 = vadd.f32 %v1777, %v1778
        %v1780 = vsel %vm1718, %v1754, 0.0
        %v1781 = vsel %vm1718, %v1762, 0.0
        %v1782 = vadd.f32 %v1780, %v1781
        %v1783 = vsel %vm1718, %v1770, 0.0
        %v1784 = vadd.f32 %v1782, %v1783
        %v1785 = vsel %vm1718, %v1756, 0.0
        %v1786 = vsel %vm1718, %v1764, 0.0
        %v1787 = vadd.f32 %v1785, %v1786
        %v1788 = vsel %vm1718, %v1772, 0.0
        %v1789 = vadd.f32 %v1787, %v1788
        %v1790 = vsel %vm1718, %v1758, 0.0
        %v1791 = vsel %vm1718, %v1766, 0.0
        %v1792 = vadd.f32 %v1790, %v1791
        %v1793 = vsel %vm1718, %v1774, 0.0
        %v1794 = vadd.f32 %v1792, %v1793
        %v1795 = vrcp.pop %v1779
        %v1796 = vrcp.pop %v1784
        %v1797 = vrcp.pop %v1789
        %v1798 = vrcp.pop %v1794
        %1800 = vset.pattern.permute.xlu0 0
        %1801 = vperm.xlu0 %1800, %v1752
        %v1802 = vpop.permute.xlu0 %1801
        %1805 = vset.pattern.permute.xlu0 0
        %1806 = vperm.xlu0 %1805, %v1754
        %v1807 = vpop.permute.xlu0 %1806
        %1810 = vset.pattern.permute.xlu0 0
        %1811 = vperm.xlu0 %1810, %v1756
        %v1812 = vpop.permute.xlu0 %1811
        %1815 = vset.pattern.permute.xlu0 0
        %1816 = vperm.xlu0 %1815, %v1758
        %v1817 = vpop.permute.xlu0 %1816
        %1820 = vset.pattern.permute.xlu0 0
        %1821 = vperm.xlu0 %1820, %v1760
        %v1822 = vpop.permute.xlu0 %1821
        %1825 = vset.pattern.permute.xlu0 0
        %1826 = vperm.xlu0 %1825, %v1762
        %v1827 = vpop.permute.xlu0 %1826
        %1830 = vset.pattern.permute.xlu0 0
        %1831 = vperm.xlu0 %1830, %v1764
        %v1832 = vpop.permute.xlu0 %1831
        %1835 = vset.pattern.permute.xlu0 0
        %1836 = vperm.xlu0 %1835, %v1766
        %v1837 = vpop.permute.xlu0 %1836
        %1840 = vset.pattern.permute.xlu0 0
        %1841 = vperm.xlu0 %1840, %v1768
        %v1842 = vpop.permute.xlu0 %1841
        %1845 = vset.pattern.permute.xlu0 0
        %1846 = vperm.xlu0 %1845, %v1770
        %v1847 = vpop.permute.xlu0 %1846
        %1850 = vset.pattern.permute.xlu0 0
        %1851 = vperm.xlu0 %1850, %v1772
        %v1852 = vpop.permute.xlu0 %1851
        %1855 = vset.pattern.permute.xlu0 0
        %1856 = vperm.xlu0 %1855, %v1774
        %v1857 = vpop.permute.xlu0 %1856
        %v1859 = vmul.f32 %v1565, %v1802
        %v1860 = vmul.f32 %v1566, %v1807
        %v1861 = vmul.f32 %v1567, %v1812
        %v1862 = vmul.f32 %v1568, %v1817
        %v1863 = vmul.f32 %v1569, %v1822
        %v1864 = vmul.f32 %v1570, %v1827
        %v1865 = vmul.f32 %v1571, %v1832
        %v1866 = vmul.f32 %v1572, %v1837
        %v1867 = vmul.f32 %v1573, %v1842
        %v1868 = vmul.f32 %v1574, %v1847
        %v1869 = vmul.f32 %v1575, %v1852
        %v1870 = vmul.f32 %v1576, %v1857
        %v1871 = vsel %vm1606, %v1859, 0.0
        %v1872 = vsel %vm1606, %v1863, 0.0
        %v1873 = vadd.f32 %v1871, %v1872
        %v1874 = vsel %vm1606, %v1867, 0.0
        %v1875 = vadd.f32 %v1873, %v1874
        %v1876 = vsel %vm1606, %v1860, 0.0
        %v1877 = vsel %vm1606, %v1864, 0.0
        %v1878 = vadd.f32 %v1876, %v1877
        %v1879 = vsel %vm1606, %v1868, 0.0
        %v1880 = vadd.f32 %v1878, %v1879
        %v1881 = vsel %vm1606, %v1861, 0.0
        %v1882 = vsel %vm1606, %v1865, 0.0
        %v1883 = vadd.f32 %v1881, %v1882
        %v1884 = vsel %vm1606, %v1869, 0.0
        %v1885 = vadd.f32 %v1883, %v1884
        %v1886 = vsel %vm1606, %v1862, 0.0
        %v1887 = vsel %vm1606, %v1866, 0.0
        %v1888 = vadd.f32 %v1886, %v1887
        %v1889 = vsel %vm1606, %v1870, 0.0
        %v1890 = vadd.f32 %v1888, %v1889
        %1892 = vset.pattern.permute.xlu0 0
        %1893 = vperm.xlu0 %1892, %v1795
        %v1894 = vpop.permute.xlu0 %1893
        %1897 = vset.pattern.permute.xlu0 0
        %1898 = vperm.xlu0 %1897, %v1796
        %v1899 = vpop.permute.xlu0 %1898
        %1902 = vset.pattern.permute.xlu0 0
        %1903 = vperm.xlu0 %1902, %v1797
        %v1904 = vpop.permute.xlu0 %1903
        %1907 = vset.pattern.permute.xlu0 0
        %1908 = vperm.xlu0 %1907, %v1798
        %v1909 = vpop.permute.xlu0 %1908
        %v1911 = vmul.f32 %v1875, %v1894
        %v1912 = vmul.f32 %v1880, %v1899
        %v1913 = vmul.f32 %v1885, %v1904
        %v1914 = vmul.f32 %v1890, %v1909
        %v1915 = vpack.c.bf16 %v1912, %v1911
        %v1916 = vpack.c.bf16 %v1914, %v1913
        %v1917 = vld [vmem:[%s10] sm:$0xf]
        %v1918 = vld [vmem:[%s10 + $0x4] sm:$0xf]
        %v1919 = vld [vmem:[%s10 + $0x8] sm:$0xf]
        %v1920 = vld [vmem:[%s10 + $0xc] sm:$0xf]
        %v1921 = vld [vmem:[%s11] sm:$0x1]
        %v1923 = vlaneseq
        %v1924 = vshrl.u32 %v1923, 7
        %v1925 = vsub.s32 0, %v1924
        %v1926 = vrot.slane %v1921, %v1925
        %v1932 = vunpack.c.l.b16 %v1917
        %v1933 = vunpack.c.l.b16 %v1918
        %v1934 = vunpack.c.l.b16 %v1919
        %v1935 = vunpack.c.l.b16 %v1920
        %v1936 = vpack.c.b16 %v1933, %v1932
        %v1937 = vpack.c.b16 %v1935, %v1934
        %v1941 = vsel %vm1606, %v1915, 0
        %v1944 = vsel %vm1606, %v1916, 0
        %1946 = vmatprep.subr.bf16.mxu0 0
        %1947 = vmatpush1.bf16.msra.mxu0 %v1936
        %1948 = vmatprep.subr.bf16.mxu0 0
        %1949 = vmatpush1.bf16.msra.mxu0 %v1937
        %1950 = vmatprep.subr.bf16.mxu0 0
        %1951 = vmatpush1.bf16.msra.mxu0 0
        %1952 = vmatprep.subr.bf16.mxu0 0
        %1953 = vmatpush1.bf16.msra.mxu0 0
        %1954 = vmatprep.subr.bf16.mxu0 0
        %1955 = vmatpush1.bf16.msra.mxu0 0
        %1956 = vmatprep.subr.bf16.mxu0 0
        %1957 = vmatpush1.bf16.msra.mxu0 0
        %1958 = vmatprep.subr.bf16.mxu0 0
        %1959 = vmatpush1.bf16.msra.mxu0 0
        %1960 = vmatprep.subr.bf16.mxu0 0
        %1961 = vmatpush1.bf16.msra.mxu0 0
        %1962 = vmatprep.subr.bf16.mxu0 0
        %1963 = vmatpush1.bf16.msra.mxu0 0
        %1964 = vmatprep.subr.bf16.mxu0 0
        %1965 = vmatpush1.bf16.msra.mxu0 0
        %1966 = vmatprep.subr.bf16.mxu0 0
        %1967 = vmatpush1.bf16.msra.mxu0 0
        %1968 = vmatprep.subr.bf16.mxu0 0
        %1969 = vmatpush1.bf16.msra.mxu0 0
        %1970 = vmatprep.subr.bf16.mxu0 0
        %1971 = vmatpush1.bf16.msra.mxu0 0
        %1972 = vmatprep.subr.bf16.mxu0 0
        %1973 = vmatpush1.bf16.msra.mxu0 0
        %1974 = vmatprep.subr.bf16.mxu0 0
        %1975 = vmatpush1.bf16.msra.mxu0 0
        %1976 = vmatprep.subr.bf16.mxu0 0
        %1977 = vmatpush1.bf16.msra.mxu0 0
        %1978 = vmatprep.mubr.bf16.mxu0 0
        %1979 = vmatmul.mubr.bf16.gmra.mrb[0].mxu0 %v1941
        %v1980 = vpop.f32.mrb[0].mxu0
        %v1981 = vadd.f32 %v1926, %v1980
        %v1982 = vpop.f32.mrb[0].mxu0
        %v1983 = vpop.f32.mrb[0].mxu0
        %v1984 = vadd.f32 %v1926, %v1983
        %v1985 = vpop.f32.mrb[0].mxu0
        %1986 = vmatprep.mubr.bf16.mxu0 0
        %1987 = vmatmul.mubr.bf16.gmra.mrb[0].mxu0 %v1944
        %v1988 = vpop.f32.mrb[0].mxu0
        %v1989 = vadd.f32 %v1926, %v1988
        %v1990 = vpop.f32.mrb[0].mxu0
        %v1991 = vpop.f32.mrb[0].mxu0
        %v1992 = vadd.f32 %v1926, %v1991
        %v1993 = vpop.f32.mrb[0].mxu0
        %1994 = vdwg.mxu0
        %v1995 = vmax.f32 %v1981, 0.0
        %v1996 = vmax.f32 %v1984, 0.0
        %v1997 = vmax.f32 %v1989, 0.0
        %v1998 = vmax.f32 %v1992, 0.0
        %v1999 = vld [vmem:[%s958] sm:$0xff]
        %v2000 = vld [vmem:[%s958 + $0x8] sm:$0xff]
        %v2001 = vld [vmem:[%s958 + $0x10] sm:$0xff]
        %v2002 = vld [vmem:[%s958 + $0x18] sm:$0xff]
        %v2003 = vpack.c.bf16 %v2000, %v1999
        %v2004 = vpack.c.bf16 %v2002, %v2001
        %v2005 = vld [vmem:[%s12] sm:$0xf]
        %v2006 = vpack.c.bf16 %v1996, %v1995
        %v2007 = vpack.c.bf16 %v1998, %v1997
        %v2008 = vld [vmem:[%s13] sm:$0xf]
        %v2009 = vld [vmem:[%s13 + $0x4] sm:$0xf]
        %v2012 = vunpack.c.l.b16 %v2008
        %v2013 = vunpack.c.l.b16 %v2009
        %v2014 = vpack.c.b16 %v2013, %v2012
        %vm2016 = vcmask 130048
        %v2018 = vsel %vm2016, %v2006, 0
        %v2021 = vsel %vm2016, %v2007, 0
        %2023 = vmatprep.subr.bf16.mxu0 0
        %2024 = vmatpush1.bf16.msra.mxu0 %v2014
        %2025 = vmatprep.subr.bf16.mxu0 0
        %2026 = vmatpush1.bf16.msra.mxu0 0
        %2027 = vmatprep.subr.bf16.mxu0 0
        %2028 = vmatpush1.bf16.msra.mxu0 0
        %2029 = vmatprep.subr.bf16.mxu0 0
        %2030 = vmatpush1.bf16.msra.mxu0 0
        %2031 = vmatprep.subr.bf16.mxu0 0
        %2032 = vmatpush1.bf16.msra.mxu0 0
        %2033 = vmatprep.subr.bf16.mxu0 0
        %2034 = vmatpush1.bf16.msra.mxu0 0
        %2035 = vmatprep.subr.bf16.mxu0 0
        %2036 = vmatpush1.bf16.msra.mxu0 0
        %2037 = vmatprep.subr.bf16.mxu0 0
        %2038 = vmatpush1.bf16.msra.mxu0 0
        %2039 = vmatprep.subr.bf16.mxu0 0
        %2040 = vmatpush1.bf16.msra.mxu0 0
        %2041 = vmatprep.subr.bf16.mxu0 0
        %2042 = vmatpush1.bf16.msra.mxu0 0
        %2043 = vmatprep.subr.bf16.mxu0 0
        %2044 = vmatpush1.bf16.msra.mxu0 0
        %2045 = vmatprep.subr.bf16.mxu0 0
        %2046 = vmatpush1.bf16.msra.mxu0 0
        %2047 = vmatprep.subr.bf16.mxu0 0
        %2048 = vmatpush1.bf16.msra.mxu0 0
        %2049 = vmatprep.subr.bf16.mxu0 0
        %2050 = vmatpush1.bf16.msra.mxu0 0
        %2051 = vmatprep.subr.bf16.mxu0 0
        %2052 = vmatpush1.bf16.msra.mxu0 0
        %2053 = vmatprep.subr.bf16.mxu0 0
        %2054 = vmatpush1.bf16.msra.mxu0 0
        %2055 = vmatprep.mubr.bf16.mxu0 0
        %2056 = vmatmul.mubr.bf16.gmra.mrb[0].mxu0 %v2018
        %v2057 = vpop.f32.mrb[0].mxu0
        %v2058 = vadd.f32 0.0, %v2057
        %v2059 = vpop.f32.mrb[0].mxu0
        %v2060 = vpop.f32.mrb[0].mxu0
        %v2061 = vadd.f32 0.0, %v2060
        %v2062 = vpop.f32.mrb[0].mxu0
        %2063 = vmatprep.mubr.bf16.mxu0 0
        %2064 = vmatmul.mubr.bf16.gmra.mrb[0].mxu0 %v2021
        %v2065 = vpop.f32.mrb[0].mxu0
        %v2066 = vadd.f32 0.0, %v2065
        %v2067 = vpop.f32.mrb[0].mxu0
        %v2068 = vpop.f32.mrb[0].mxu0
        %v2069 = vadd.f32 0.0, %v2068
        %v2070 = vpop.f32.mrb[0].mxu0
        %2071 = vdwg.mxu0
        %vm2072 = vcmask 64512
        %v2074 = vsel %vm2072, %v2003, 0
        %v2077 = vsel %vm2072, %v2004, 0
        %v2080 = vsel %vm1077, %v2005, 0
        %2082 = vmatprep.subr.bf16.mxu0 0
        %2083 = vmatpush1.bf16.msra.mxu0 %v2080
        %2084 = vmatprep.subr.bf16.mxu0 0
        %2085 = vmatpush1.bf16.msra.mxu0 0
        %2086 = vmatprep.subr.bf16.mxu0 0
        %2087 = vmatpush1.bf16.msra.mxu0 0
        %2088 = vmatprep.subr.bf16.mxu0 0
        %2089 = vmatpush1.bf16.msra.mxu0 0
        %2090 = vmatprep.subr.bf16.mxu0 0
        %2091 = vmatpush1.bf16.msra.mxu0 0
        %2092 = vmatprep.subr.bf16.mxu0 0
        %2093 = vmatpush1.bf16.msra.mxu0 0
        %2094 = vmatprep.subr.bf16.mxu0 0
        %2095 = vmatpush1.bf16.msra.mxu0 0
        %2096 = vmatprep.subr.bf16.mxu0 0
        %2097 = vmatpush1.bf16.msra.mxu0 0
        %2098 = vmatprep.subr.bf16.mxu0 0
        %2099 = vmatpush1.bf16.msra.mxu0 0
        %2100 = vmatprep.subr.bf16.mxu0 0
        %2101 = vmatpush1.bf16.msra.mxu0 0
        %2102 = vmatprep.subr.bf16.mxu0 0
        %2103 = vmatpush1.bf16.msra.mxu0 0
        %2104 = vmatprep.subr.bf16.mxu0 0
        %2105 = vmatpush1.bf16.msra.mxu0 0
        %2106 = vmatprep.subr.bf16.mxu0 0
        %2107 = vmatpush1.bf16.msra.mxu0 0
        %2108 = vmatprep.subr.bf16.mxu0 0
        %2109 = vmatpush1.bf16.msra.mxu0 0
        %2110 = vmatprep.subr.bf16.mxu0 0
        %2111 = vmatpush1.bf16.msra.mxu0 0
        %2112 = vmatprep.subr.bf16.mxu0 0
        %2113 = vmatpush1.bf16.msra.mxu0 0
        %2114 = vmatprep.mubr.bf16.mxu0 0
        %2115 = vmatmul.mubr.bf16.gmra.mrb[0].mxu0 %v2074
        %v2116 = vpop.f32.mrb[0].mxu0
        %v2117 = vadd.f32 %v2058, %v2116
        %v2118 = vpop.f32.mrb[0].mxu0
        %v2119 = vpop.f32.mrb[0].mxu0
        %v2120 = vadd.f32 %v2061, %v2119
        %v2121 = vpop.f32.mrb[0].mxu0
        %2122 = vmatprep.mubr.bf16.mxu0 0
        %2123 = vmatmul.mubr.bf16.gmra.mrb[0].mxu0 %v2077
        %v2124 = vpop.f32.mrb[0].mxu0
        %v2125 = vadd.f32 %v2066, %v2124
        %v2126 = vpop.f32.mrb[0].mxu0
        %v2127 = vpop.f32.mrb[0].mxu0
        %v2128 = vadd.f32 %v2069, %v2127
        %v2129 = vpop.f32.mrb[0].mxu0
        %2130 = vdwg.mxu0
        %v2131 = vld [vmem:[%s14] sm:$0x1]
        %v2133 = vlaneseq
        %v2134 = vshrl.u32 %v2133, 7
        %v2135 = vsub.s32 0, %v2134
        %v2136 = vrot.slane %v2131, %v2135
        %v2138 = vadd.f32 %v2117, %v2136
        %v2139 = vadd.f32 %v2120, %v2136
        %v2140 = vadd.f32 %v2125, %v2136
        %v2141 = vadd.f32 %v2128, %v2136
        %v2142 = vmax.f32 %v2138, 0.0
        %v2143 = vmax.f32 %v2139, 0.0
        %v2144 = vmax.f32 %v2140, 0.0
        %v2145 = vmax.f32 %v2141, 0.0
        %v2146 = vand.u32 2147483647, %v2138
        %v2147 = vand.u32 2147483647, %v2139
        %v2148 = vand.u32 2147483647, %v2140
        %v2149 = vand.u32 2147483647, %v2141
        %v2150 = vsub.f32 0.0, %v2146
        %v2151 = vsub.f32 0.0, %v2147
        %v2152 = vsub.f32 0.0, %v2148
        %v2153 = vsub.f32 0.0, %v2149
        %v2154 = vmul.f32 %v2150, 1.442695
        %v2155 = vpow.pop %v2154
        %v2156 = vmul.f32 %v2151, 1.442695
        %v2157 = vpow.pop %v2156
        %v2158 = vmul.f32 %v2152, 1.442695
        %v2159 = vpow.pop %v2158
        %v2160 = vmul.f32 %v2153, 1.442695
        %v2161 = vpow.pop %v2160
        %v2162 = vadd.f32 %v2155, 1.0
        %v2163 = vadd.f32 %v2157, 1.0
        %v2164 = vadd.f32 %v2159, 1.0
        %v2165 = vadd.f32 %v2161, 1.0
        %v2166 = vlog2.pop %v2162
        %v2167 = vmul.f32 %v2166, 0.6931472
        %v2168 = vlog2.pop %v2163
        %v2169 = vmul.f32 %v2168, 0.6931472
        %v2170 = vlog2.pop %v2164
        %v2171 = vmul.f32 %v2170, 0.6931472
        %v2172 = vlog2.pop %v2165
        %v2173 = vmul.f32 %v2172, 0.6931472
        %v2174 = vadd.f32 %v2142, %v2167
        %v2175 = vadd.f32 %v2143, %v2169
        %v2176 = vadd.f32 %v2144, %v2171
        %v2177 = vadd.f32 %v2145, %v2173
        %v2178 = vld [vmem:[%s15] sm:$0xf]
        %v2179 = vld [vmem:[%s15 + $0x4] sm:$0xf]
        %v2180 = vld [vmem:[%s15 + $0x8] sm:$0xf]
        %v2184 = vunpack.c.l.b16 %v2178
        %v2185 = vunpack.c.l.b16 %v2179
        %v2186 = vunpack.c.l.b16 %v2180
        %v2187 = vpack.c.b16 %v2185, %v2184
        %v2188 = vpack.c.b16 %v2186, %v2186
        %v2191 = vand.u32 %v2188, %v1079
        %2193 = vmatprep.subr.bf16.mxu0 0
        %2194 = vmatpush1.bf16.msra.mxu0 %v2187
        %2195 = vmatprep.subr.bf16.mxu0 0
        %2196 = vmatpush1.bf16.msra.mxu0 %v2191
        %2197 = vmatprep.subr.bf16.mxu0 0
        %2198 = vmatpush1.bf16.msra.mxu0 0
        %2199 = vmatprep.subr.bf16.mxu0 0
        %2200 = vmatpush1.bf16.msra.mxu0 0
        %2201 = vmatprep.subr.bf16.mxu0 0
        %2202 = vmatpush1.bf16.msra.mxu0 0
        %2203 = vmatprep.subr.bf16.mxu0 0
        %2204 = vmatpush1.bf16.msra.mxu0 0
        %2205 = vmatprep.subr.bf16.mxu0 0
        %2206 = vmatpush1.bf16.msra.mxu0 0
        %2207 = vmatprep.subr.bf16.mxu0 0
        %2208 = vmatpush1.bf16.msra.mxu0 0
        %2209 = vmatprep.subr.bf16.mxu0 0
        %2210 = vmatpush1.bf16.msra.mxu0 0
        %2211 = vmatprep.subr.bf16.mxu0 0
        %2212 = vmatpush1.bf16.msra.mxu0 0
        %2213 = vmatprep.subr.bf16.mxu0 0
        %2214 = vmatpush1.bf16.msra.mxu0 0
        %2215 = vmatprep.subr.bf16.mxu0 0
        %2216 = vmatpush1.bf16.msra.mxu0 0
        %2217 = vmatprep.subr.bf16.mxu0 0
        %2218 = vmatpush1.bf16.msra.mxu0 0
        %2219 = vmatprep.subr.bf16.mxu0 0
        %2220 = vmatpush1.bf16.msra.mxu0 0
        %2221 = vmatprep.subr.bf16.mxu0 0
        %2222 = vmatpush1.bf16.msra.mxu0 0
        %2223 = vmatprep.subr.bf16.mxu0 0
        %2224 = vmatpush1.bf16.msra.mxu0 0
        %2225 = vmatprep.mubr.bf16.mxu0 0
        %2226 = vmatmul.mubr.bf16.gmra.mrb[0].mxu0 %v1059
        %v2227 = vpop.f32.mrb[0].mxu0
        %v2228 = vadd.f32 0.0, %v2227
        %v2229 = vpop.f32.mrb[0].mxu0
        %v2230 = vpop.f32.mrb[0].mxu0
        %v2231 = vadd.f32 0.0, %v2230
        %v2232 = vpop.f32.mrb[0].mxu0
        %2233 = vmatprep.mubr.bf16.mxu0 0
        %2234 = vmatmul.mubr.bf16.gmra.mrb[0].mxu0 %v1062
        %v2235 = vpop.f32.mrb[0].mxu0
        %v2236 = vadd.f32 0.0, %v2235
        %v2237 = vpop.f32.mrb[0].mxu0
        %v2238 = vpop.f32.mrb[0].mxu0
        %v2239 = vadd.f32 0.0, %v2238
        %v2240 = vpop.f32.mrb[0].mxu0
        %2241 = vmatprep.mubr.bf16.mxu0 0
        %2242 = vmatmul.mubr.bf16.gmra.mrb[0].mxu0 %v1065
        %v2243 = vpop.f32.mrb[0].mxu0
        %v2244 = vadd.f32 0.0, %v2243
        %v2245 = vpop.f32.mrb[0].mxu0
        %v2246 = vpop.f32.mrb[0].mxu0
        %v2247 = vadd.f32 0.0, %v2246
        %v2248 = vpop.f32.mrb[0].mxu0
        %2249 = vmatprep.mubr.bf16.mxu0 0
        %2250 = vmatmul.mubr.bf16.gmra.mrb[0].mxu0 %v1068
        %v2251 = vpop.f32.mrb[0].mxu0
        %v2252 = vadd.f32 0.0, %v2251
        %v2253 = vpop.f32.mrb[0].mxu0
        %v2254 = vpop.f32.mrb[0].mxu0
        %v2255 = vadd.f32 0.0, %v2254
        %v2256 = vpop.f32.mrb[0].mxu0
        %2257 = vmatprep.mubr.bf16.mxu0 0
        %2258 = vmatmul.mubr.bf16.gmra.mrb[0].mxu0 %v1071
        %v2259 = vpop.f32.mrb[0].mxu0
        %v2260 = vadd.f32 0.0, %v2259
        %v2261 = vpop.f32.mrb[0].mxu0
        %v2262 = vpop.f32.mrb[0].mxu0
        %v2263 = vadd.f32 0.0, %v2262
        %v2264 = vpop.f32.mrb[0].mxu0
        %2265 = vmatprep.mubr.bf16.mxu0 0
        %2266 = vmatmul.mubr.bf16.gmra.mrb[0].mxu0 %v1074
        %v2267 = vpop.f32.mrb[0].mxu0
        %v2268 = vadd.f32 0.0, %v2267
        %v2269 = vpop.f32.mrb[0].mxu0
        %v2270 = vpop.f32.mrb[0].mxu0
        %v2271 = vadd.f32 0.0, %v2270
        %v2272 = vpop.f32.mrb[0].mxu0
        %2273 = vdwg.mxu0
        %v2274 = vadd.f32 %v2228, %v2138
        %v2275 = vadd.f32 %v2231, %v2139
        %v2276 = vadd.f32 %v2236, %v2140
        %v2277 = vadd.f32 %v2239, %v2141
        %v2278 = vadd.f32 %v2244, %v2138
        %v2279 = vadd.f32 %v2247, %v2139
        %v2280 = vadd.f32 %v2252, %v2140
        %v2281 = vadd.f32 %v2255, %v2141
        %v2282 = vadd.f32 %v2260, %v2138
        %v2283 = vadd.f32 %v2263, %v2139
        %v2284 = vadd.f32 %v2268, %v2140
        %v2285 = vadd.f32 %v2271, %v2141
        %v2286 = vmax.f32 %v2274, 0.0
        %v2287 = vmax.f32 %v2275, 0.0
        %v2288 = vmax.f32 %v2276, 0.0
        %v2289 = vmax.f32 %v2277, 0.0
        %v2290 = vmax.f32 %v2278, 0.0
        %v2291 = vmax.f32 %v2279, 0.0
        %v2292 = vmax.f32 %v2280, 0.0
        %v2293 = vmax.f32 %v2281, 0.0
        %v2294 = vmax.f32 %v2282, 0.0
        %v2295 = vmax.f32 %v2283, 0.0
        %v2296 = vmax.f32 %v2284, 0.0
        %v2297 = vmax.f32 %v2285, 0.0
        %v2298 = vpack.c.bf16 %v2287, %v2286
        %v2299 = vpack.c.bf16 %v2289, %v2288
        %v2300 = vpack.c.bf16 %v2291, %v2290
        %v2301 = vpack.c.bf16 %v2293, %v2292
        %v2302 = vpack.c.bf16 %v2295, %v2294
        %v2303 = vpack.c.bf16 %v2297, %v2296
        %v2304 = vld [vmem:[%s16] sm:$0xf]
        %v2305 = vld [vmem:[%s16 + $0x4] sm:$0xf]
        %v2306 = vld [vmem:[%s16 + $0x8] sm:$0xf]
        %v2307 = vld [vmem:[#allocation7] sm:$0x1]
        %v2309 = vlaneseq
        %v2310 = vshrl.u32 %v2309, 7
        %v2311 = vsub.s32 0, %v2310
        %v2312 = vrot.slane %v2307, %v2311
        %v2317 = vunpack.c.l.b16 %v2304
        %v2318 = vunpack.c.l.b16 %v2305
        %v2319 = vunpack.c.l.b16 %v2306
        %v2320 = vpack.c.b16 %v2318, %v2317
        %v2321 = vpack.c.b16 %v2319, %v2319
        %vm2323 = vcmask 195584
        %v2325 = vsel %vm2323, %v2298, 0
        %v2328 = vsel %vm2323, %v2299, 0
        %v2331 = vsel %vm2323, %v2300, 0
        %v2334 = vsel %vm2323, %v2301, 0
        %v2337 = vsel %vm2323, %v2302, 0
        %v2340 = vsel %vm2323, %v2303, 0
        %v2343 = vsel %vm1077, %v2321, 0
        %2345 = vmatprep.subr.bf16.mxu0 0
        %2346 = vmatpush1.bf16.msra.mxu0 %v2320
        %2347 = vmatprep.subr.bf16.mxu0 0
        %2348 = vmatpush1.bf16.msra.mxu0 %v2343
        %2349 = vmatprep.subr.bf16.mxu0 0
        %2350 = vmatpush1.bf16.msra.mxu0 0
        %2351 = vmatprep.subr.bf16.mxu0 0
        %2352 = vmatpush1.bf16.msra.mxu0 0
        %2353 = vmatprep.subr.bf16.mxu0 0
        %2354 = vmatpush1.bf16.msra.mxu0 0
        %2355 = vmatprep.subr.bf16.mxu0 0
        %2356 = vmatpush1.bf16.msra.mxu0 0
        %2357 = vmatprep.subr.bf16.mxu0 0
        %2358 = vmatpush1.bf16.msra.mxu0 0
        %2359 = vmatprep.subr.bf16.mxu0 0
        %2360 = vmatpush1.bf16.msra.mxu0 0
        %2361 = vmatprep.subr.bf16.mxu0 0
        %2362 = vmatpush1.bf16.msra.mxu0 0
        %2363 = vmatprep.subr.bf16.mxu0 0
        %2364 = vmatpush1.bf16.msra.mxu0 0
        %2365 = vmatprep.subr.bf16.mxu0 0
        %2366 = vmatpush1.bf16.msra.mxu0 0
        %2367 = vmatprep.subr.bf16.mxu0 0
        %2368 = vmatpush1.bf16.msra.mxu0 0
        %2369 = vmatprep.subr.bf16.mxu0 0
        %2370 = vmatpush1.bf16.msra.mxu0 0
        %2371 = vmatprep.subr.bf16.mxu0 0
        %2372 = vmatpush1.bf16.msra.mxu0 0
        %2373 = vmatprep.subr.bf16.mxu0 0
        %2374 = vmatpush1.bf16.msra.mxu0 0
        %2375 = vmatprep.subr.bf16.mxu0 0
        %2376 = vmatpush1.bf16.msra.mxu0 0
        %2377 = vmatprep.mubr.bf16.mxu0 0
        %2378 = vmatmul.mubr.bf16.gmra.mrb[0].mxu0 %v2325
        %v2379 = vpop.f32.mrb[0].mxu0
        %v2380 = vadd.f32 %v2312, %v2379
        %v2381 = vpop.f32.mrb[0].mxu0
        %v2382 = vpop.f32.mrb[0].mxu0
        %v2383 = vadd.f32 %v2312, %v2382
        %v2384 = vpop.f32.mrb[0].mxu0
        %2385 = vmatprep.mubr.bf16.mxu0 0
        %2386 = vmatmul.mubr.bf16.gmra.mrb[0].mxu0 %v2328
        %v2387 = vpop.f32.mrb[0].mxu0
        %v2388 = vadd.f32 %v2312, %v2387
        %v2389 = vpop.f32.mrb[0].mxu0
        %v2390 = vpop.f32.mrb[0].mxu0
        %v2391 = vadd.f32 %v2312, %v2390
        %v2392 = vpop.f32.mrb[0].mxu0
        %2393 = vmatprep.mubr.bf16.mxu0 0
        %2394 = vmatmul.mubr.bf16.gmra.mrb[0].mxu0 %v2331
        %v2395 = vpop.f32.mrb[0].mxu0
        %v2396 = vadd.f32 %v2312, %v2395
        %v2397 = vpop.f32.mrb[0].mxu0
        %v2398 = vpop.f32.mrb[0].mxu0
        %v2399 = vadd.f32 %v2312, %v2398
        %v2400 = vpop.f32.mrb[0].mxu0
        %2401 = vmatprep.mubr.bf16.mxu0 0
        %2402 = vmatmul.mubr.bf16.gmra.mrb[0].mxu0 %v2334
        %v2403 = vpop.f32.mrb[0].mxu0
        %v2404 = vadd.f32 %v2312, %v2403
        %v2405 = vpop.f32.mrb[0].mxu0
        %v2406 = vpop.f32.mrb[0].mxu0
        %v2407 = vadd.f32 %v2312, %v2406
        %v2408 = vpop.f32.mrb[0].mxu0
        %2409 = vmatprep.mubr.bf16.mxu0 0
        %2410 = vmatmul.mubr.bf16.gmra.mrb[0].mxu0 %v2337
        %v2411 = vpop.f32.mrb[0].mxu0
        %v2412 = vadd.f32 %v2312, %v2411
        %v2413 = vpop.f32.mrb[0].mxu0
        %v2414 = vpop.f32.mrb[0].mxu0
        %v2415 = vadd.f32 %v2312, %v2414
        %v2416 = vpop.f32.mrb[0].mxu0
        %2417 = vmatprep.mubr.bf16.mxu0 0
        %2418 = vmatmul.mubr.bf16.gmra.mrb[0].mxu0 %v2340
        %v2419 = vpop.f32.mrb[0].mxu0
        %v2420 = vadd.f32 %v2312, %v2419
        %v2421 = vpop.f32.mrb[0].mxu0
        %v2422 = vpop.f32.mrb[0].mxu0
        %v2423 = vadd.f32 %v2312, %v2422
        %v2424 = vpop.f32.mrb[0].mxu0
        %2425 = vdwg.mxu0
        %v2426 = vmax.f32 %v2380, 0.0
        %v2427 = vmax.f32 %v2383, 0.0
        %v2428 = vmax.f32 %v2388, 0.0
        %v2429 = vmax.f32 %v2391, 0.0
        %v2430 = vmax.f32 %v2396, 0.0
        %v2431 = vmax.f32 %v2399, 0.0
        %v2432 = vmax.f32 %v2404, 0.0
        %v2433 = vmax.f32 %v2407, 0.0
        %v2434 = vmax.f32 %v2412, 0.0
        %v2435 = vmax.f32 %v2415, 0.0
        %v2436 = vmax.f32 %v2420, 0.0
        %v2437 = vmax.f32 %v2423, 0.0
        %v2438 = vsel %vm1718, %v2426, -inf
        %v2439 = vsel %vm1718, %v2430, -inf
        %v2440 = vmax.f32 %v2438, %v2439
        %v2441 = vsel %vm1718, %v2434, -inf
        %v2442 = vmax.f32 %v2440, %v2441
        %v2443 = vsel %vm1718, %v2427, -inf
        %v2444 = vsel %vm1718, %v2431, -inf
        %v2445 = vmax.f32 %v2443, %v2444
        %v2446 = vsel %vm1718, %v2435, -inf
        %v2447 = vmax.f32 %v2445, %v2446
        %v2448 = vsel %vm1718, %v2428, -inf
        %v2449 = vsel %vm1718, %v2432, -inf
        %v2450 = vmax.f32 %v2448, %v2449
        %v2451 = vsel %vm1718, %v2436, -inf
        %v2452 = vmax.f32 %v2450, %v2451
        %v2453 = vsel %vm1718, %v2429, -inf
        %v2454 = vsel %vm1718, %v2433, -inf
        %v2455 = vmax.f32 %v2453, %v2454
        %v2456 = vsel %vm1718, %v2437, -inf
        %v2457 = vmax.f32 %v2455, %v2456
        %v2458 = vsub.f32 %v2426, %v2442
        %v2459 = vsub.f32 %v2427, %v2447
        %v2460 = vsub.f32 %v2428, %v2452
        %v2461 = vsub.f32 %v2429, %v2457
        %v2462 = vsub.f32 %v2430, %v2442
        %v2463 = vsub.f32 %v2431, %v2447
        %v2464 = vsub.f32 %v2432, %v2452
        %v2465 = vsub.f32 %v2433, %v2457
        %v2466 = vsub.f32 %v2434, %v2442
        %v2467 = vsub.f32 %v2435, %v2447
        %v2468 = vsub.f32 %v2436, %v2452
        %v2469 = vsub.f32 %v2437, %v2457
        %v2470 = vmul.f32 %v2458, 1.442695
        %v2471 = vpow.pop %v2470
        %v2472 = vmul.f32 %v2459, 1.442695
        %v2473 = vpow.pop %v2472
        %v2474 = vmul.f32 %v2460, 1.442695
        %v2475 = vpow.pop %v2474
        %v2476 = vmul.f32 %v2461, 1.442695
        %v2477 = vpow.pop %v2476
        %v2478 = vmul.f32 %v2462, 1.442695
        %v2479 = vpow.pop %v2478
        %v2480 = vmul.f32 %v2463, 1.442695
        %v2481 = vpow.pop %v2480
        %v2482 = vmul.f32 %v2464, 1.442695
        %v2483 = vpow.pop %v2482
        %v2484 = vmul.f32 %v2465, 1.442695
        %v2485 = vpow.pop %v2484
        %v2486 = vmul.f32 %v2466, 1.442695
        %v2487 = vpow.pop %v2486
        %v2488 = vmul.f32 %v2467, 1.442695
        %v2489 = vpow.pop %v2488
        %v2490 = vmul.f32 %v2468, 1.442695
        %v2491 = vpow.pop %v2490
        %v2492 = vmul.f32 %v2469, 1.442695
        %v2493 = vpow.pop %v2492
        %v2494 = vsel %vm1718, %v2471, 0.0
        %v2495 = vsel %vm1718, %v2479, 0.0
        %v2496 = vadd.f32 %v2494, %v2495
        %v2497 = vsel %vm1718, %v2487, 0.0
        %v2498 = vadd.f32 %v2496, %v2497
        %v2499 = vsel %vm1718, %v2473, 0.0
        %v2500 = vsel %vm1718, %v2481, 0.0
        %v2501 = vadd.f32 %v2499, %v2500
        %v2502 = vsel %vm1718, %v2489, 0.0
        %v2503 = vadd.f32 %v2501, %v2502
        %v2504 = vsel %vm1718, %v2475, 0.0
        %v2505 = vsel %vm1718, %v2483, 0.0
        %v2506 = vadd.f32 %v2504, %v2505
        %v2507 = vsel %vm1718, %v2491, 0.0
        %v2508 = vadd.f32 %v2506, %v2507
        %v2509 = vsel %vm1718, %v2477, 0.0
        %v2510 = vsel %vm1718, %v2485, 0.0
        %v2511 = vadd.f32 %v2509, %v2510
        %v2512 = vsel %vm1718, %v2493, 0.0
        %v2513 = vadd.f32 %v2511, %v2512
        %v2514 = vrcp.pop %v2498
        %v2515 = vrcp.pop %v2503
        %v2516 = vrcp.pop %v2508
        %v2517 = vrcp.pop %v2513
        %2519 = vset.pattern.permute.xlu0 0
        %2520 = vperm.xlu0 %2519, %v2471
        %v2521 = vpop.permute.xlu0 %2520
        %2524 = vset.pattern.permute.xlu0 0
        %2525 = vperm.xlu0 %2524, %v2473
        %v2526 = vpop.permute.xlu0 %2525
        %2529 = vset.pattern.permute.xlu0 0
        %2530 = vperm.xlu0 %2529, %v2475
        %v2531 = vpop.permute.xlu0 %2530
        %2534 = vset.pattern.permute.xlu0 0
        %2535 = vperm.xlu0 %2534, %v2477
        %v2536 = vpop.permute.xlu0 %2535
        %2539 = vset.pattern.permute.xlu0 0
        %2540 = vperm.xlu0 %2539, %v2479
        %v2541 = vpop.permute.xlu0 %2540
        %2544 = vset.pattern.permute.xlu0 0
        %2545 = vperm.xlu0 %2544, %v2481
        %v2546 = vpop.permute.xlu0 %2545
        %2549 = vset.pattern.permute.xlu0 0
        %2550 = vperm.xlu0 %2549, %v2483
        %v2551 = vpop.permute.xlu0 %2550
        %2554 = vset.pattern.permute.xlu0 0
        %2555 = vperm.xlu0 %2554, %v2485
        %v2556 = vpop.permute.xlu0 %2555
        %2559 = vset.pattern.permute.xlu0 0
        %2560 = vperm.xlu0 %2559, %v2487
        %v2561 = vpop.permute.xlu0 %2560
        %2564 = vset.pattern.permute.xlu0 0
        %2565 = vperm.xlu0 %2564, %v2489
        %v2566 = vpop.permute.xlu0 %2565
        %2569 = vset.pattern.permute.xlu0 0
        %2570 = vperm.xlu0 %2569, %v2491
        %v2571 = vpop.permute.xlu0 %2570
        %2574 = vset.pattern.permute.xlu0 0
        %2575 = vperm.xlu0 %2574, %v2493
        %v2576 = vpop.permute.xlu0 %2575
        %v2578 = vmul.f32 %v1176, %v2521
        %v2579 = vmul.f32 %v1177, %v2526
        %v2580 = vmul.f32 %v1178, %v2531
        %v2581 = vmul.f32 %v1179, %v2536
        %v2582 = vmul.f32 %v1180, %v2541
        %v2583 = vmul.f32 %v1181, %v2546
        %v2584 = vmul.f32 %v1182, %v2551
        %v2585 = vmul.f32 %v1183, %v2556
        %v2586 = vmul.f32 %v1184, %v2561
        %v2587 = vmul.f32 %v1185, %v2566
        %v2588 = vmul.f32 %v1186, %v2571
        %v2589 = vmul.f32 %v1187, %v2576
        %vm2590 = vcmask 154752
        %v2591 = vsel %vm2590, %v2578, 0.0
        %v2592 = vsel %vm2590, %v2582, 0.0
        %v2593 = vadd.f32 %v2591, %v2592
        %v2594 = vsel %vm2590, %v2586, 0.0
        %v2595 = vadd.f32 %v2593, %v2594
        %v2596 = vsel %vm2590, %v2579, 0.0
        %v2597 = vsel %vm2590, %v2583, 0.0
        %v2598 = vadd.f32 %v2596, %v2597
        %v2599 = vsel %vm2590, %v2587, 0.0
        %v2600 = vadd.f32 %v2598, %v2599
        %v2601 = vsel %vm2590, %v2580, 0.0
        %v2602 = vsel %vm2590, %v2584, 0.0
        %v2603 = vadd.f32 %v2601, %v2602
        %v2604 = vsel %vm2590, %v2588, 0.0
        %v2605 = vadd.f32 %v2603, %v2604
        %v2606 = vsel %vm2590, %v2581, 0.0
        %v2607 = vsel %vm2590, %v2585, 0.0
        %v2608 = vadd.f32 %v2606, %v2607
        %v2609 = vsel %vm2590, %v2589, 0.0
        %v2610 = vadd.f32 %v2608, %v2609
        %2612 = vset.pattern.permute.xlu0 0
        %2613 = vperm.xlu0 %2612, %v2514
        %v2614 = vpop.permute.xlu0 %2613
        %2617 = vset.pattern.permute.xlu0 0
        %2618 = vperm.xlu0 %2617, %v2515
        %v2619 = vpop.permute.xlu0 %2618
        %2622 = vset.pattern.permute.xlu0 0
        %2623 = vperm.xlu0 %2622, %v2516
        %v2624 = vpop.permute.xlu0 %2623
        %2627 = vset.pattern.permute.xlu0 0
        %2628 = vperm.xlu0 %2627, %v2517
        %v2629 = vpop.permute.xlu0 %2628
        %v2631 = vmul.f32 %v2595, %v2614
        %v2632 = vmul.f32 %v2600, %v2619
        %v2633 = vmul.f32 %v2605, %v2624
        %v2634 = vmul.f32 %v2610, %v2629
        %v2635 = vsub.f32 0.0, %v2174
        %v2636 = vsub.f32 0.0, %v2175
        %v2637 = vsub.f32 0.0, %v2176
        %v2638 = vsub.f32 0.0, %v2177
        %v2639 = vmul.f32 %v2635, 1.442695
        %v2640 = vpow.pop %v2639
        %v2641 = vmul.f32 %v2636, 1.442695
        %v2642 = vpow.pop %v2641
        %v2643 = vmul.f32 %v2637, 1.442695
        %v2644 = vpow.pop %v2643
        %v2645 = vmul.f32 %v2638, 1.442695
        %v2646 = vpow.pop %v2645
        %v2647 = vsub.f32 1.0, %v2640
        %v2648 = vsub.f32 1.0, %v2642
        %v2649 = vsub.f32 1.0, %v2644
        %v2650 = vsub.f32 1.0, %v2646
        %v2651 = vld [vmem:[#allocation2] sm:$0xff]
        %v2652 = vld [vmem:[#allocation2 + $0x8] sm:$0xff]
        %v2653 = vld [vmem:[#allocation2 + $0x10] sm:$0xff]
        %v2654 = vld [vmem:[#allocation2 + $0x18] sm:$0xff]
        %2659 = vrot.lane.b32.xlu0 %v2651, 24
        %v2660 = vpop.permute.xlu0 %2659
        %2661 = vrot.lane.b32.xlu0 %v2652, 24
        %v2662 = vpop.permute.xlu0 %2661
        %2663 = vrot.lane.b32.xlu0 %v2653, 24
        %v2664 = vpop.permute.xlu0 %2663
        %2665 = vrot.lane.b32.xlu0 %v2654, 24
        %v2666 = vpop.permute.xlu0 %2665
        %v2671 = vmul.f32 %v2647, %v2660
        %v2672 = vmul.f32 %v2648, %v2662
        %v2673 = vmul.f32 %v2649, %v2664
        %v2674 = vmul.f32 %v2650, %v2666
        %v2675 = vld [vmem:[#allocation3] sm:$0xff]
        %v2676 = vld [vmem:[#allocation3 + $0x8] sm:$0xff]
        %v2677 = vld [vmem:[#allocation3 + $0x10] sm:$0xff]
        %v2678 = vld [vmem:[#allocation3 + $0x18] sm:$0xff]
        %2680 = vset.pattern.permute.xlu0 24
        %2681 = vperm.xlu0 %2680, %v2671
        %v2682 = vpop.permute.xlu0 %2681
        %2685 = vset.pattern.permute.xlu0 24
        %2686 = vperm.xlu0 %2685, %v2672
        %v2687 = vpop.permute.xlu0 %2686
        %2690 = vset.pattern.permute.xlu0 24
        %2691 = vperm.xlu0 %2690, %v2673
        %v2692 = vpop.permute.xlu0 %2691
        %2695 = vset.pattern.permute.xlu0 24
        %2696 = vperm.xlu0 %2695, %v2674
        %v2697 = vpop.permute.xlu0 %2696
        %v2699 = vmul.f32 %v2682, %v2631
        %v2700 = vmul.f32 %v2687, %v2632
        %v2701 = vmul.f32 %v2692, %v2633
        %v2702 = vmul.f32 %v2697, %v2634
        %2707 = vrot.lane.b32.xlu0 %v2699, 112
        %v2708 = vpop.permute.xlu0 %2707
        %2709 = vrot.lane.b32.xlu0 %v2700, 112
        %v2710 = vpop.permute.xlu0 %2709
        %2711 = vrot.lane.b32.xlu0 %v2701, 112
        %v2712 = vpop.permute.xlu0 %2711
        %2713 = vrot.lane.b32.xlu0 %v2702, 112
        %v2714 = vpop.permute.xlu0 %2713
        %v2719 = vadd.f32 %v2675, %v2708
        %v2720 = vadd.f32 %v2676, %v2710
        %v2721 = vadd.f32 %v2677, %v2712
        %v2722 = vadd.f32 %v2678, %v2714
        %vm2723 = vcmask 23552
        %2724 = vst.msk [vmem:[#allocation3] sm:$0xff] %vm2723, %v2719
        %2725 = vst.msk [vmem:[#allocation3 + $0x8] sm:$0xff] %vm2723, %v2720
        %2726 = vst.msk [vmem:[#allocation3 + $0x10] sm:$0xff] %vm2723, %v2721
        %2727 = vst.msk [vmem:[#allocation3 + $0x18] sm:$0xff] %vm2723, %v2722
        %v2728 = vld [vmem:[#allocation4] sm:$0xff]
        %v2729 = vld [vmem:[#allocation4 + $0x8] sm:$0xff]
        %v2730 = vld [vmem:[#allocation4 + $0x10] sm:$0xff]
        %v2731 = vld [vmem:[#allocation4 + $0x18] sm:$0xff]
        %v2732 = vmul.f32 %v2682, %v1999
        %v2733 = vmul.f32 %v2687, %v2000
        %v2734 = vmul.f32 %v2692, %v2001
        %v2735 = vmul.f32 %v2697, %v2002
        %v2736 = vadd.f32 %v2728, %v2732
        %v2737 = vadd.f32 %v2729, %v2733
        %v2738 = vadd.f32 %v2730, %v2734
        %v2739 = vadd.f32 %v2731, %v2735
        %2740 = vst.msk [vmem:[#allocation4] sm:$0xff] %vm2072, %v2736
        %2741 = vst.msk [vmem:[#allocation4 + $0x8] sm:$0xff] %vm2072, %v2737
        %2742 = vst.msk [vmem:[#allocation4 + $0x10] sm:$0xff] %vm2072, %v2738
        %2743 = vst.msk [vmem:[#allocation4 + $0x18] sm:$0xff] %vm2072, %v2739
        %v2744 = vld [vmem:[#allocation5] sm:$0xff]
        %v2745 = vld [vmem:[#allocation5 + $0x8] sm:$0xff]
        %v2746 = vld [vmem:[#allocation5 + $0x10] sm:$0xff]
        %v2747 = vld [vmem:[#allocation5 + $0x18] sm:$0xff]
        %v2748 = vmul.f32 %v2682, %v1995
        %v2749 = vmul.f32 %v2687, %v1996
        %v2750 = vmul.f32 %v2692, %v1997
        %v2751 = vmul.f32 %v2697, %v1998
        %v2752 = vadd.f32 %v2744, %v2748
        %v2753 = vadd.f32 %v2745, %v2749
        %v2754 = vadd.f32 %v2746, %v2750
        %v2755 = vadd.f32 %v2747, %v2751
        %2756 = vst.msk [vmem:[#allocation5] sm:$0xff] %vm2016, %v2752
        %2757 = vst.msk [vmem:[#allocation5 + $0x8] sm:$0xff] %vm2016, %v2753
        %2758 = vst.msk [vmem:[#allocation5 + $0x10] sm:$0xff] %vm2016, %v2754
        %2759 = vst.msk [vmem:[#allocation5 + $0x18] sm:$0xff] %vm2016, %v2755
        %v2760 = vld [vmem:[#allocation2] sm:$0xff]
        %v2761 = vld [vmem:[#allocation2 + $0x8] sm:$0xff]
        %v2762 = vld [vmem:[#allocation2 + $0x10] sm:$0xff]
        %v2763 = vld [vmem:[#allocation2 + $0x18] sm:$0xff]
        %v2764 = vsub.f32 1.0, %v2647
        %v2765 = vsub.f32 1.0, %v2648
        %v2766 = vsub.f32 1.0, %v2649
        %v2767 = vsub.f32 1.0, %v2650
        %v2768 = vadd.f32 %v2764, 1e-10
        %v2769 = vadd.f32 %v2765, 1e-10
        %v2770 = vadd.f32 %v2766, 1e-10
        %v2771 = vadd.f32 %v2767, 1e-10
        %2776 = vrot.lane.b32.xlu0 %v2768, 104
        %v2777 = vpop.permute.xlu0 %2776
        %2778 = vrot.lane.b32.xlu0 %v2769, 104
        %v2779 = vpop.permute.xlu0 %2778
        %2780 = vrot.lane.b32.xlu0 %v2770, 104
        %v2781 = vpop.permute.xlu0 %2780
        %2782 = vrot.lane.b32.xlu0 %v2771, 104
        %v2783 = vpop.permute.xlu0 %2782
        %v2788 = vmul.f32 %v2760, %v2777
        %v2789 = vmul.f32 %v2761, %v2779
        %v2790 = vmul.f32 %v2762, %v2781
        %v2791 = vmul.f32 %v2763, %v2783
        %2792 = vst.msk [vmem:[#allocation2] sm:$0xff] %vm1718, %v2788
        %2793 = vst.msk [vmem:[#allocation2 + $0x8] sm:$0xff] %vm1718, %v2789
        %2794 = vst.msk [vmem:[#allocation2 + $0x10] sm:$0xff] %vm1718, %v2790
        %2795 = vst.msk [vmem:[#allocation2 + $0x18] sm:$0xff] %vm1718, %v2791
        %p2796 = scmp.eq.s32.totalorder %s48, 3
        // Predicated region
        $region170: #{tpu_custom_call.1} parent=160 // pred_check
          %p2797 = pneg %p2796
        $region171: #{tpu_custom_call.1} parent=160 // pred_check_branch
          %2799 = sbr.rel (%p2797) target = $region173
        $region172: #{tpu_custom_call.1} parent=160 // pred_region
          %v2800 = vld [vmem:[#allocation4] sm:$0xff]
          %v2801 = vld [vmem:[#allocation4 + $0x8] sm:$0xff]
          %v2802 = vld [vmem:[#allocation4 + $0x10] sm:$0xff]
          %v2803 = vld [vmem:[#allocation4 + $0x18] sm:$0xff]
          %v2804 = vpack.c.bf16 %v2801, %v2800
          %v2805 = vpack.c.bf16 %v2803, %v2802
          %v2806 = vld [vmem:[%s18] sm:$0xf]
          %v2807 = vld [vmem:[#allocation5] sm:$0xff]
          %v2808 = vld [vmem:[#allocation5 + $0x8] sm:$0xff]
          %v2809 = vld [vmem:[#allocation5 + $0x10] sm:$0xff]
          %v2810 = vld [vmem:[#allocation5 + $0x18] sm:$0xff]
          %v2811 = vpack.c.bf16 %v2808, %v2807
          %v2812 = vpack.c.bf16 %v2810, %v2809
          %v2813 = vld [vmem:[%s19] sm:$0xf]
          %v2814 = vld [vmem:[%s19 + $0x4] sm:$0xf]
          %v2817 = vunpack.c.l.b16 %v2813
          %v2818 = vunpack.c.l.b16 %v2814
          %v2819 = vpack.c.b16 %v2818, %v2817
          %v2822 = vsel %vm2016, %v2811, 0
          %v2825 = vsel %vm2016, %v2812, 0
          %2827 = vmatprep.subr.bf16.mxu0 0
          %2828 = vmatpush1.bf16.msra.mxu0 %v2819
          %2829 = vmatprep.subr.bf16.mxu0 0
          %2830 = vmatpush1.bf16.msra.mxu0 0
          %2831 = vmatprep.subr.bf16.mxu0 0
          %2832 = vmatpush1.bf16.msra.mxu0 0
          %2833 = vmatprep.subr.bf16.mxu0 0
          %2834 = vmatpush1.bf16.msra.mxu0 0
          %2835 = vmatprep.subr.bf16.mxu0 0
          %2836 = vmatpush1.bf16.msra.mxu0 0
          %2837 = vmatprep.subr.bf16.mxu0 0
          %2838 = vmatpush1.bf16.msra.mxu0 0
          %2839 = vmatprep.subr.bf16.mxu0 0
          %2840 = vmatpush1.bf16.msra.mxu0 0
          %2841 = vmatprep.subr.bf16.mxu0 0
          %2842 = vmatpush1.bf16.msra.mxu0 0
          %2843 = vmatprep.subr.bf16.mxu0 0
          %2844 = vmatpush1.bf16.msra.mxu0 0
          %2845 = vmatprep.subr.bf16.mxu0 0
          %2846 = vmatpush1.bf16.msra.mxu0 0
          %2847 = vmatprep.subr.bf16.mxu0 0
          %2848 = vmatpush1.bf16.msra.mxu0 0
          %2849 = vmatprep.subr.bf16.mxu0 0
          %2850 = vmatpush1.bf16.msra.mxu0 0
          %2851 = vmatprep.subr.bf16.mxu0 0
          %2852 = vmatpush1.bf16.msra.mxu0 0
          %2853 = vmatprep.subr.bf16.mxu0 0
          %2854 = vmatpush1.bf16.msra.mxu0 0
          %2855 = vmatprep.subr.bf16.mxu0 0
          %2856 = vmatpush1.bf16.msra.mxu0 0
          %2857 = vmatprep.subr.bf16.mxu0 0
          %2858 = vmatpush1.bf16.msra.mxu0 0
          %2859 = vmatprep.mubr.bf16.mxu0 0
          %2860 = vmatmul.mubr.bf16.gmra.mrb[0].mxu0 %v2822
          %v2861 = vpop.f32.mrb[0].mxu0
          %v2862 = vadd.f32 0.0, %v2861
          %v2863 = vpop.f32.mrb[0].mxu0
          %v2864 = vpop.f32.mrb[0].mxu0
          %v2865 = vadd.f32 0.0, %v2864
          %v2866 = vpop.f32.mrb[0].mxu0
          %2867 = vmatprep.mubr.bf16.mxu0 0
          %2868 = vmatmul.mubr.bf16.gmra.mrb[0].mxu0 %v2825
          %v2869 = vpop.f32.mrb[0].mxu0
          %v2870 = vadd.f32 0.0, %v2869
          %v2871 = vpop.f32.mrb[0].mxu0
          %v2872 = vpop.f32.mrb[0].mxu0
          %v2873 = vadd.f32 0.0, %v2872
          %v2874 = vpop.f32.mrb[0].mxu0
          %2875 = vdwg.mxu0
          %v2877 = vsel %vm2072, %v2804, 0
          %v2880 = vsel %vm2072, %v2805, 0
          %v2883 = vsel %vm1077, %v2806, 0
          %2885 = vmatprep.subr.bf16.mxu0 0
          %2886 = vmatpush1.bf16.msra.mxu0 %v2883
          %2887 = vmatprep.subr.bf16.mxu0 0
          %2888 = vmatpush1.bf16.msra.mxu0 0
          %2889 = vmatprep.subr.bf16.mxu0 0
          %2890 = vmatpush1.bf16.msra.mxu0 0
          %2891 = vmatprep.subr.bf16.mxu0 0
          %2892 = vmatpush1.bf16.msra.mxu0 0
          %2893 = vmatprep.subr.bf16.mxu0 0
          %2894 = vmatpush1.bf16.msra.mxu0 0
          %2895 = vmatprep.subr.bf16.mxu0 0
          %2896 = vmatpush1.bf16.msra.mxu0 0
          %2897 = vmatprep.subr.bf16.mxu0 0
          %2898 = vmatpush1.bf16.msra.mxu0 0
          %2899 = vmatprep.subr.bf16.mxu0 0
          %2900 = vmatpush1.bf16.msra.mxu0 0
          %2901 = vmatprep.subr.bf16.mxu0 0
          %2902 = vmatpush1.bf16.msra.mxu0 0
          %2903 = vmatprep.subr.bf16.mxu0 0
          %2904 = vmatpush1.bf16.msra.mxu0 0
          %2905 = vmatprep.subr.bf16.mxu0 0
          %2906 = vmatpush1.bf16.msra.mxu0 0
          %2907 = vmatprep.subr.bf16.mxu0 0
          %2908 = vmatpush1.bf16.msra.mxu0 0
          %2909 = vmatprep.subr.bf16.mxu0 0
          %2910 = vmatpush1.bf16.msra.mxu0 0
          %2911 = vmatprep.subr.bf16.mxu0 0
          %2912 = vmatpush1.bf16.msra.mxu0 0
          %2913 = vmatprep.subr.bf16.mxu0 0
          %2914 = vmatpush1.bf16.msra.mxu0 0
          %2915 = vmatprep.subr.bf16.mxu0 0
          %2916 = vmatpush1.bf16.msra.mxu0 0
          %2917 = vmatprep.mubr.bf16.mxu0 0
          %2918 = vmatmul.mubr.bf16.gmra.mrb[0].mxu0 %v2877
          %v2919 = vpop.f32.mrb[0].mxu0
          %v2920 = vadd.f32 %v2862, %v2919
          %v2921 = vpop.f32.mrb[0].mxu0
          %v2922 = vpop.f32.mrb[0].mxu0
          %v2923 = vadd.f32 %v2865, %v2922
          %v2924 = vpop.f32.mrb[0].mxu0
          %2925 = vmatprep.mubr.bf16.mxu0 0
          %2926 = vmatmul.mubr.bf16.gmra.mrb[0].mxu0 %v2880
          %v2927 = vpop.f32.mrb[0].mxu0
          %v2928 = vadd.f32 %v2870, %v2927
          %v2929 = vpop.f32.mrb[0].mxu0
          %v2930 = vpop.f32.mrb[0].mxu0
          %v2931 = vadd.f32 %v2873, %v2930
          %v2932 = vpop.f32.mrb[0].mxu0
          %2933 = vdwg.mxu0
          %v2934 = vld [vmem:[%s20] sm:$0x1]
          %v2936 = vlaneseq
          %v2937 = vshrl.u32 %v2936, 7
          %v2938 = vsub.s32 0, %v2937
          %v2939 = vrot.slane %v2934, %v2938
          %v2941 = vadd.f32 %v2920, %v2939
          %v2942 = vadd.f32 %v2923, %v2939
          %v2943 = vadd.f32 %v2928, %v2939
          %v2944 = vadd.f32 %v2931, %v2939
          %v2945 = vmax.f32 %v2941, 0.0
          %v2946 = vmax.f32 %v2942, 0.0
          %v2947 = vmax.f32 %v2943, 0.0
          %v2948 = vmax.f32 %v2944, 0.0
          %v2949 = vpack.c.bf16 %v2946, %v2945
          %v2950 = vpack.c.bf16 %v2948, %v2947
          %v2951 = vld [vmem:[%s21] sm:$0xf]
          %v2952 = vld [vmem:[%s21 + $0x4] sm:$0xf]
          %v2953 = vld [vmem:[%s21 + $0x8] sm:$0xf]
          %v2954 = vld [vmem:[#allocation3] sm:$0xff]
          %v2955 = vld [vmem:[#allocation3 + $0x8] sm:$0xff]
          %v2956 = vld [vmem:[#allocation3 + $0x10] sm:$0xff]
          %v2957 = vld [vmem:[#allocation3 + $0x18] sm:$0xff]
          %v2958 = vpack.c.bf16 %v2955, %v2954
          %v2959 = vpack.c.bf16 %v2957, %v2956
          %v2960 = vld [vmem:[%s22] sm:$0x3]
          %v2962 = vsel %vm2723, %v2958, 0
          %v2965 = vsel %vm2723, %v2959, 0
          %v2968 = vand.u32 %v2960, %v1302
          %2970 = vmatprep.subr.bf16.mxu0 0
          %2971 = vmatpush1.bf16.msra.mxu0 %v2968
          %2972 = vmatprep.subr.bf16.mxu0 0
          %2973 = vmatpush1.bf16.msra.mxu0 0
          %2974 = vmatprep.subr.bf16.mxu0 0
          %2975 = vmatpush1.bf16.msra.mxu0 0
          %2976 = vmatprep.subr.bf16.mxu0 0
          %2977 = vmatpush1.bf16.msra.mxu0 0
          %2978 = vmatprep.subr.bf16.mxu0 0
          %2979 = vmatpush1.bf16.msra.mxu0 0
          %2980 = vmatprep.subr.bf16.mxu0 0
          %2981 = vmatpush1.bf16.msra.mxu0 0
          %2982 = vmatprep.subr.bf16.mxu0 0
          %2983 = vmatpush1.bf16.msra.mxu0 0
          %2984 = vmatprep.subr.bf16.mxu0 0
          %2985 = vmatpush1.bf16.msra.mxu0 0
          %2986 = vmatprep.subr.bf16.mxu0 0
          %2987 = vmatpush1.bf16.msra.mxu0 0
          %2988 = vmatprep.subr.bf16.mxu0 0
          %2989 = vmatpush1.bf16.msra.mxu0 0
          %2990 = vmatprep.subr.bf16.mxu0 0
          %2991 = vmatpush1.bf16.msra.mxu0 0
          %2992 = vmatprep.subr.bf16.mxu0 0
          %2993 = vmatpush1.bf16.msra.mxu0 0
          %2994 = vmatprep.subr.bf16.mxu0 0
          %2995 = vmatpush1.bf16.msra.mxu0 0
          %2996 = vmatprep.subr.bf16.mxu0 0
          %2997 = vmatpush1.bf16.msra.mxu0 0
          %2998 = vmatprep.subr.bf16.mxu0 0
          %2999 = vmatpush1.bf16.msra.mxu0 0
          %3000 = vmatprep.subr.bf16.mxu0 0
          %3001 = vmatpush1.bf16.msra.mxu0 0
          %3002 = vmatprep.mubr.bf16.mxu0 0
          %3003 = vmatmul.mubr.bf16.gmra.mrb[0].mxu0 %v2962
          %v3004 = vpop.f32.mrb[0].mxu0
          %v3005 = vadd.f32 0.0, %v3004
          %v3006 = vpop.f32.mrb[0].mxu0
          %v3007 = vpop.f32.mrb[0].mxu0
          %v3008 = vadd.f32 0.0, %v3007
          %v3009 = vpop.f32.mrb[0].mxu0
          %3010 = vmatprep.mubr.bf16.mxu0 0
          %3011 = vmatmul.mubr.bf16.gmra.mrb[0].mxu0 %v2965
          %v3012 = vpop.f32.mrb[0].mxu0
          %v3013 = vadd.f32 0.0, %v3012
          %v3014 = vpop.f32.mrb[0].mxu0
          %v3015 = vpop.f32.mrb[0].mxu0
          %v3016 = vadd.f32 0.0, %v3015
          %v3017 = vpop.f32.mrb[0].mxu0
          %3018 = vdwg.mxu0
          %v3022 = vunpack.c.l.b16 %v2951
          %v3023 = vunpack.c.l.b16 %v2952
          %v3024 = vunpack.c.l.b16 %v2953
          %v3025 = vpack.c.b16 %v3023, %v3022
          %v3026 = vpack.c.b16 %v3024, %v3024
          %v3029 = vsel %vm2323, %v2949, 0
          %v3032 = vsel %vm2323, %v2950, 0
          %v3035 = vsel %vm1077, %v3026, 0
          %3037 = vmatprep.subr.bf16.mxu0 0
          %3038 = vmatpush1.bf16.msra.mxu0 %v3025
          %3039 = vmatprep.subr.bf16.mxu0 0
          %3040 = vmatpush1.bf16.msra.mxu0 %v3035
          %3041 = vmatprep.subr.bf16.mxu0 0
          %3042 = vmatpush1.bf16.msra.mxu0 0
          %3043 = vmatprep.subr.bf16.mxu0 0
          %3044 = vmatpush1.bf16.msra.mxu0 0
          %3045 = vmatprep.subr.bf16.mxu0 0
          %3046 = vmatpush1.bf16.msra.mxu0 0
          %3047 = vmatprep.subr.bf16.mxu0 0
          %3048 = vmatpush1.bf16.msra.mxu0 0
          %3049 = vmatprep.subr.bf16.mxu0 0
          %3050 = vmatpush1.bf16.msra.mxu0 0
          %3051 = vmatprep.subr.bf16.mxu0 0
          %3052 = vmatpush1.bf16.msra.mxu0 0
          %3053 = vmatprep.subr.bf16.mxu0 0
          %3054 = vmatpush1.bf16.msra.mxu0 0
          %3055 = vmatprep.subr.bf16.mxu0 0
          %3056 = vmatpush1.bf16.msra.mxu0 0
          %3057 = vmatprep.subr.bf16.mxu0 0
          %3058 = vmatpush1.bf16.msra.mxu0 0
          %3059 = vmatprep.subr.bf16.mxu0 0
          %3060 = vmatpush1.bf16.msra.mxu0 0
          %3061 = vmatprep.subr.bf16.mxu0 0
          %3062 = vmatpush1.bf16.msra.mxu0 0
          %3063 = vmatprep.subr.bf16.mxu0 0
          %3064 = vmatpush1.bf16.msra.mxu0 0
          %3065 = vmatprep.subr.bf16.mxu0 0
          %3066 = vmatpush1.bf16.msra.mxu0 0
          %3067 = vmatprep.subr.bf16.mxu0 0
          %3068 = vmatpush1.bf16.msra.mxu0 0
          %3069 = vmatprep.mubr.bf16.mxu0 0
          %3070 = vmatmul.mubr.bf16.gmra.mrb[0].mxu0 %v3029
          %v3071 = vpop.f32.mrb[0].mxu0
          %v3072 = vadd.f32 %v3005, %v3071
          %v3073 = vpop.f32.mrb[0].mxu0
          %v3074 = vpop.f32.mrb[0].mxu0
          %v3075 = vadd.f32 %v3008, %v3074
          %v3076 = vpop.f32.mrb[0].mxu0
          %3077 = vmatprep.mubr.bf16.mxu0 0
          %3078 = vmatmul.mubr.bf16.gmra.mrb[0].mxu0 %v3032
          %v3079 = vpop.f32.mrb[0].mxu0
          %v3080 = vadd.f32 %v3013, %v3079
          %v3081 = vpop.f32.mrb[0].mxu0
          %v3082 = vpop.f32.mrb[0].mxu0
          %v3083 = vadd.f32 %v3016, %v3082
          %v3084 = vpop.f32.mrb[0].mxu0
          %3085 = vdwg.mxu0
          %v3086 = vld [vmem:[%s23] sm:$0x1]
          %v3088 = vlaneseq
          %v3089 = vshrl.u32 %v3088, 7
          %v3090 = vsub.s32 0, %v3089
          %v3091 = vrot.slane %v3086, %v3090
          %v3093 = vadd.f32 %v3072, %v3091
          %v3094 = vadd.f32 %v3075, %v3091
          %v3095 = vadd.f32 %v3080, %v3091
          %v3096 = vadd.f32 %v3083, %v3091
          %v3097 = vmax.f32 %v3093, 0.0
          %v3098 = vmax.f32 %v3094, 0.0
          %v3099 = vmax.f32 %v3095, 0.0
          %v3100 = vmax.f32 %v3096, 0.0
          %v3101 = vpack.c.bf16 %v3098, %v3097
          %v3102 = vpack.c.bf16 %v3100, %v3099
          %v3103 = vld [vmem:[%s24] sm:$0xf]
          %v3104 = vld [vmem:[%s24 + $0x4] sm:$0xf]
          %v3105 = vld [vmem:[%s24 + $0x8] sm:$0xf]
          %v3106 = vld [vmem:[%s24 + $0xc] sm:$0xf]
          %v3107 = vld [vmem:[%s24 + $0x10] sm:$0xf]
          %v3108 = vld [vmem:[%s24 + $0x14] sm:$0xf]
          %v3109 = vld [vmem:[%s24 + $0x18] sm:$0xf]
          %v3110 = vld [vmem:[%s24 + $0x1c] sm:$0xf]
          %v3111 = vld [vmem:[%s24 + $0x20] sm:$0xf]
          %v3112 = vld [vmem:[%s25] sm:$0x1]
          %v3114 = vlaneseq
          %v3115 = vshrl.u32 %v3114, 7
          %v3116 = vsub.s32 0, %v3115
          %v3117 = vrot.slane %v3112, %v3116
          %v3128 = vunpack.c.l.b16 %v3103
          %v3129 = vunpack.c.l.b16 %v3104
          %v3130 = vunpack.c.l.b16 %v3105
          %v3131 = vunpack.c.l.b16 %v3106
          %v3132 = vunpack.c.l.b16 %v3107
          %v3133 = vunpack.c.l.b16 %v3108
          %v3134 = vunpack.c.l.b16 %v3109
          %v3135 = vunpack.c.l.b16 %v3110
          %v3136 = vunpack.c.l.b16 %v3111
          %v3137 = vpack.c.b16 %v3129, %v3128
          %v3138 = vpack.c.b16 %v3131, %v3130
          %v3139 = vpack.c.b16 %v3133, %v3132
          %v3140 = vpack.c.b16 %v3135, %v3134
          %v3141 = vpack.c.b16 %v3136, %v3136
          %vm3146 = vcmask 588800
          %v3148 = vsel %vm3146, %v3101, 0
          %v3151 = vsel %vm3146, %v3102, 0
          %v3154 = vsel %vm1077, %v3141, 0
          %3156 = vmatprep.subr.bf16.mxu0 0
          %3157 = vmatpush1.bf16.msra.mxu0 %v3137
          %3158 = vmatprep.subr.bf16.mxu0 0
          %3159 = vmatpush1.bf16.msra.mxu0 %v3138
          %3160 = vmatprep.subr.bf16.mxu0 0
          %3161 = vmatpush1.bf16.msra.mxu0 %v3139
          %3162 = vmatprep.subr.bf16.mxu0 0
          %3163 = vmatpush1.bf16.msra.mxu0 %v3140
          %3164 = vmatprep.subr.bf16.mxu0 0
          %3165 = vmatpush1.bf16.msra.mxu0 %v3154
          %3166 = vmatprep.subr.bf16.mxu0 0
          %3167 = vmatpush1.bf16.msra.mxu0 0
          %3168 = vmatprep.subr.bf16.mxu0 0
          %3169 = vmatpush1.bf16.msra.mxu0 0
          %3170 = vmatprep.subr.bf16.mxu0 0
          %3171 = vmatpush1.bf16.msra.mxu0 0
          %3172 = vmatprep.subr.bf16.mxu0 0
          %3173 = vmatpush1.bf16.msra.mxu0 0
          %3174 = vmatprep.subr.bf16.mxu0 0
          %3175 = vmatpush1.bf16.msra.mxu0 0
          %3176 = vmatprep.subr.bf16.mxu0 0
          %3177 = vmatpush1.bf16.msra.mxu0 0
          %3178 = vmatprep.subr.bf16.mxu0 0
          %3179 = vmatpush1.bf16.msra.mxu0 0
          %3180 = vmatprep.subr.bf16.mxu0 0
          %3181 = vmatpush1.bf16.msra.mxu0 0
          %3182 = vmatprep.subr.bf16.mxu0 0
          %3183 = vmatpush1.bf16.msra.mxu0 0
          %3184 = vmatprep.subr.bf16.mxu0 0
          %3185 = vmatpush1.bf16.msra.mxu0 0
          %3186 = vmatprep.subr.bf16.mxu0 0
          %3187 = vmatpush1.bf16.msra.mxu0 0
          %3188 = vmatprep.mubr.bf16.mxu0 0
          %3189 = vmatmul.mubr.bf16.gmra.mrb[0].mxu0 %v3148
          %v3190 = vpop.f32.mrb[0].mxu0
          %v3191 = vadd.f32 %v3117, %v3190
          %v3192 = vpop.f32.mrb[0].mxu0
          %v3193 = vpop.f32.mrb[0].mxu0
          %v3194 = vadd.f32 %v3117, %v3193
          %v3195 = vpop.f32.mrb[0].mxu0
          %3196 = vmatprep.mubr.bf16.mxu0 0
          %3197 = vmatmul.mubr.bf16.gmra.mrb[0].mxu0 %v3151
          %v3198 = vpop.f32.mrb[0].mxu0
          %v3199 = vadd.f32 %v3117, %v3198
          %v3200 = vpop.f32.mrb[0].mxu0
          %v3201 = vpop.f32.mrb[0].mxu0
          %v3202 = vadd.f32 %v3117, %v3201
          %v3203 = vpop.f32.mrb[0].mxu0
          %3204 = vdwg.mxu0
          %v3205 = vlaneseq
          %v3206 = vand.u32 %v3205, 127
          %vm3207 = vcmp.lt.s32.totalorder %v3206, 3
          %v3208 = vmax.f32 %v3191, 0.0
          %v3209 = vmax.f32 %v3194, 0.0
          %v3210 = vmax.f32 %v3199, 0.0
          %v3211 = vmax.f32 %v3202, 0.0
          %v3212 = vand.u32 2147483647, %v3191
          %v3213 = vand.u32 2147483647, %v3194
          %v3214 = vand.u32 2147483647, %v3199
          %v3215 = vand.u32 2147483647, %v3202
          %v3216 = vsub.f32 0.0, %v3212
          %v3217 = vsub.f32 0.0, %v3213
          %v3218 = vsub.f32 0.0, %v3214
          %v3219 = vsub.f32 0.0, %v3215
          %v3220 = vmul.f32 %v3216, 1.442695
          %v3221 = vpow.pop %v3220
          %v3222 = vmul.f32 %v3217, 1.442695
          %v3223 = vpow.pop %v3222
          %v3224 = vmul.f32 %v3218, 1.442695
          %v3225 = vpow.pop %v3224
          %v3226 = vmul.f32 %v3219, 1.442695
          %v3227 = vpow.pop %v3226
          %v3228 = vadd.f32 %v3221, 1.0
          %v3229 = vadd.f32 %v3223, 1.0
          %v3230 = vadd.f32 %v3225, 1.0
          %v3231 = vadd.f32 %v3227, 1.0
          %v3232 = vlog2.pop %v3228
          %v3233 = vmul.f32 %v3232, 0.6931472
          %v3234 = vlog2.pop %v3229
          %v3235 = vmul.f32 %v3234, 0.6931472
          %v3236 = vlog2.pop %v3230
          %v3237 = vmul.f32 %v3236, 0.6931472
          %v3238 = vlog2.pop %v3231
          %v3239 = vmul.f32 %v3238, 0.6931472
          %v3240 = vadd.f32 %v3208, %v3233
          %v3241 = vadd.f32 %v3209, %v3235
          %v3242 = vadd.f32 %v3210, %v3237
          %v3243 = vadd.f32 %v3211, %v3239
          %v3244 = vsub.f32 0.0, %v3191
          %v3245 = vsub.f32 0.0, %v3194
          %v3246 = vsub.f32 0.0, %v3199
          %v3247 = vsub.f32 0.0, %v3202
          %v3248 = vmul.f32 %v3244, 1.442695
          %v3249 = vpow.pop %v3248
          %v3250 = vmul.f32 %v3245, 1.442695
          %v3251 = vpow.pop %v3250
          %v3252 = vmul.f32 %v3246, 1.442695
          %v3253 = vpow.pop %v3252
          %v3254 = vmul.f32 %v3247, 1.442695
          %v3255 = vpow.pop %v3254
          %v3256 = vadd.f32 %v3249, 1.0
          %v3257 = vadd.f32 %v3251, 1.0
          %v3258 = vadd.f32 %v3253, 1.0
          %v3259 = vadd.f32 %v3255, 1.0
          %v3260 = vrcp.pop %v3256
          %v3261 = vrcp.pop %v3257
          %v3262 = vrcp.pop %v3258
          %v3263 = vrcp.pop %v3259
          %v3264 = vsel %vm3207, %v3240, %v3260
          %v3265 = vsel %vm3207, %v3241, %v3261
          %v3266 = vsel %vm3207, %v3242, %v3262
          %v3267 = vsel %vm3207, %v3243, %v3263
          %3272 = vrot.lane.b32.xlu0 %v3264, 3
          %v3273 = vpop.permute.xlu0 %3272
          %3274 = vrot.lane.b32.xlu0 %v3265, 3
          %v3275 = vpop.permute.xlu0 %3274
          %3276 = vrot.lane.b32.xlu0 %v3266, 3
          %v3277 = vpop.permute.xlu0 %3276
          %3278 = vrot.lane.b32.xlu0 %v3267, 3
          %v3279 = vpop.permute.xlu0 %3278
          %v3284 = vsel %vm2723, %v2954, %v3273
          %v3285 = vsel %vm2723, %v2955, %v3275
          %v3286 = vsel %vm2723, %v2956, %v3277
          %v3287 = vsel %vm2723, %v2957, %v3279
          %vm3288 = vcmask 80896
          %3289 = vst.msk [vmem:[%s969] sm:$0xff] %vm3288, %v3284
          %3290 = vst.msk [vmem:[%s969 + $0x8] sm:$0xff] %vm3288, %v3285
          %3291 = vst.msk [vmem:[%s969 + $0x10] sm:$0xff] %vm3288, %v3286
          %3292 = vst.msk [vmem:[%s969 + $0x18] sm:$0xff] %vm3288, %v3287
        $region173: #{tpu_custom_call.1} parent=160 // pred_fallthru
          _
        %s3293 = smul.u32 4, %s46
        %p3294 = scmp.lt.s32.totalorder %s47, 1
        %s3295 = scalar_select %p3294, %s47, 1
        %p3296 = scmp.lt.s32.totalorder %s3293, 7
        %s3297 = scalar_select %p3296, %s3293, 7
        %s3298 = smul.addr %s3295, 8
        %s3299 = sadd.s32 %s3297, %s3298
        %s3300 = smul.addr %s3299, 8
        %s3301 = scalar_lea.vmem %s26, %s3300
        // Predicated region
        $region174: #{tpu_custom_call.1} parent=160 // pred_check
          %p3302 = pneg %p644
        $region175: #{tpu_custom_call.1} parent=160 // pred_check_branch
          %3304 = sbr.rel (%p3302) target = $region177
        $region176: #{tpu_custom_call.1} parent=160 // pred_region
          %s3305 = smul.u32 4, %s46
        $region177: #{tpu_custom_call.1} parent=160 // pred_fallthru
          _
      $region161: #{tpu_custom_call.1} parent=5 // pred_fallthru
        _
      %p3306 = scmp.le.s32.totalorder 2, %s36
      // Predicated region
      $region178: #{tpu_custom_call.1} parent=5 // pred_check
        %p3307 = pneg %p3306
      $region179: #{tpu_custom_call.1} parent=5 // pred_check_branch
        %3309 = sbr.rel (%p3307) target = $region181
      $region180: #{tpu_custom_call.1} parent=5 // pred_region
        %s3310 = ssub.s32 %s36, 2
        // Predicated region
        $region182: #{tpu_custom_call.1} parent=180 // pred_check
          %p3311 = pneg %p650
        $region183: #{tpu_custom_call.1} parent=180 // pred_check_branch
          %3313 = sbr.rel (%p3311) target = $region185
        $region184: #{tpu_custom_call.1} parent=180 // pred_region
          %s3314 = smul.u32 4, %s49
          %p3315 = scmp.lt.s32.totalorder %s50, 1
          %s3316 = scalar_select %p3315, %s50, 1
          %p3317 = scmp.lt.s32.totalorder %s3314, 7
          %s3318 = scalar_select %p3317, %s3314, 7
          %s3319 = smul.addr %s3316, 8
          %s3320 = sadd.s32 %s3318, %s3319
          %s3321 = smul.addr %s3320, 8
          %s3322 = scalar_lea.vmem %s26, %s3321
        $region185: #{tpu_custom_call.1} parent=180 // pred_fallthru
          _
      $region181: #{tpu_custom_call.1} parent=5 // pred_fallthru
        _
    $region6: #{tpu_custom_call.1} parent=1 // loop_footer
      %s40 = sadd.s32 1, %s36
    $region7: #{tpu_custom_call.1} parent=1 // loop_footer_branch
      %35 = sbr.rel target = $region3
    $region8: #{tpu_custom_call.1} parent=1 // loop_exit
      _

</llo_original>
